<compile_context>
chip_gen: v5e
topology: v5e:2x2
jax: 0.10.0
libtpu: 0.0.40
codegen_flags: <defaults>
</compile_context>

<pallas_src>
import functools

import jax
import jax.numpy as jnp
from jax import lax
from jax.experimental import pallas as pl
from jax.experimental.pallas import tpu as pltpu


def _reuse_block2_kernel(H, W, Cin, Cout, OFF, NB,
                         x_ref, w1_ref, w2_ref, b_ref,
                         out_ref, pkx_ref, pkm_ref):
    """One grid step == NB batch elements.

    x_ref   : (NB, H*W, Cin) f32      flattened NHWC input
    w1_ref  : (3, 3*Cin, 2*Cout) bf16 conv1 weights, kh-packed along K, per kw tap, with
                                      bn1 scale folded in; columns [Cout:) of the centre
                                      tap hold the (scale-folded) 1x1 shortcut weight.
    w2_ref  : (3, 3*Cout, Cout) bf16  shared conv2 weights, kh-packed, bn2 scale folded in.
    b_ref   : (2, Cout) f32           row 0 = bn1 bias, row 1 = bn2 bias + shortcut-bn bias
    out_ref : (NB, H*W, Cout) f32
    pkx_ref : (LEN, 3*Cin)  f32 VMEM scratch: kh-packed image (interior at [OFF, OFF+HW))
    pkm_ref : (LEN, 3*Cout) f32 VMEM scratch: same layout for relu(bn1(conv1(x)))
    """
    HW = H * W
    f32 = jnp.float32
    bf16 = jnp.bfloat16

    # Column-edge validity masks for the W-direction (kw) taps, built once per step.
    col = lax.broadcasted_iota(jnp.int32, (HW, 1), 0) % W
    not_left = col != 0            # kw=0 reads column w-1 -> invalid at w == 0
    not_right = col != (W - 1)     # kw=2 reads column w+1 -> invalid at w == W-1

    b1 = b_ref[0:1, :]             # (1, Cout) bn1 bias
    bo = b_ref[1:2, :]             # (1, Cout) bn2 bias + shortcut-bn bias

    def pack(img, C, dst_ref):
        # Lane groups [g*C,(g+1)*C) hold the image shifted by (g-1) rows in H, with the
        # H-halo zeros baked into the value -> one aligned full-width interior store and
        # no halo zeroing.  The only scratch rows ever read outside the interior are
        # OFF-1 / OFF+HW, and those loads are always masked below (select, not multiply).
        zrow = jnp.zeros((W, C), f32)
        up = jnp.concatenate([zrow, img[:HW - W, :]], axis=0)   # x[h-1, w]
        dn = jnp.concatenate([img[W:, :], zrow], axis=0)        # x[h+1, w]
        dst_ref[pl.ds(OFF, HW), :] = jnp.concatenate([up, img, dn], axis=-1)

    def conv3x3(pk_ref, w_ref, acc):
        # 3 whole-image MXU matmuls (one per kw tap), K = 3*C (kh packed into lanes),
        # bf16 operands / f32 accumulation.
        for kw in range(3):                                     # static, fully unrolled
            slab = pk_ref[pl.ds(OFF + kw - 1, HW), :]           # (HW, 3*C) f32
            if kw == 0:
                slab = jnp.where(not_left, slab, 0.0)           # select kills row-wrap /
            elif kw == 2:                                       # uninitialized edge rows
                slab = jnp.where(not_right, slab, 0.0)
            acc = acc + jnp.dot(slab.astype(bf16), w_ref[kw],
                                preferred_element_type=f32)
        return acc

    for b in range(NB):                                         # static unroll over images
        x = x_ref[b]                                            # (HW, Cin) f32
        pack(x, Cin, pkx_ref)

        # conv1 (+ fused 1x1 shortcut in output columns [Cout:)), BN scales pre-folded.
        a1 = conv3x3(pkx_ref, w1_ref, jnp.zeros((HW, 2 * Cout), f32))
        mid = jnp.maximum(a1[:, :Cout] + b1, 0.0)               # relu(bn1(conv1(x)))
        pack(mid, Cout, pkm_ref)

        # shared conv2 accumulates on top of (shortcut + merged biases); final relu.
        acc2 = conv3x3(pkm_ref, w2_ref, a1[:, Cout:] + bo)
        out_ref[b] = jnp.maximum(acc2, 0.0).astype(out_ref.dtype)


def reuse_block2_pallas(x_nhwc, kp, *, images_per_step=1):
    """x_nhwc: (N, H, W, Cin) f32.  kp: packed params from pack_params().
    Returns (N, H, W, Cout) f32."""
    N, H, W, Cin = x_nhwc.shape
    Cout = kp["bias"].shape[-1]
    HW = H * W
    NB = images_per_step
    assert N % NB == 0, "images_per_step must divide the batch"
    assert kp["w1p"].shape == (3, 3 * Cin, 2 * Cout)
    assert kp["w2p"].shape == (3, 3 * Cout, Cout)

    # Packed-scratch layout: interior at [OFF, OFF+HW); only rows OFF-1 / OFF+HW outside
    # it are ever touched (and those loads are masked), so one sublane tile of slack on
    # each side is enough.
    OFF = 8
    LEN = OFF + HW + 8

    x_flat = x_nhwc.reshape(N, HW, Cin)          # free, contiguous reshape (no pad copy)

    kernel = functools.partial(_reuse_block2_kernel, H, W, Cin, Cout, OFF, NB)

    grid_spec = pltpu.PrefetchScalarGridSpec(
        num_scalar_prefetch=0,
        grid=(N // NB,),
        in_specs=[
            pl.BlockSpec((NB, HW, Cin), lambda n: (n, 0, 0)),
            pl.BlockSpec((3, 3 * Cin, 2 * Cout), lambda n: (0, 0, 0)),
            pl.BlockSpec((3, 3 * Cout, Cout), lambda n: (0, 0, 0)),
            pl.BlockSpec((2, Cout), lambda n: (0, 0)),
        ],
        out_specs=pl.BlockSpec((NB, HW, Cout), lambda n: (n, 0, 0)),
        scratch_shapes=[
            pltpu.VMEM((LEN, 3 * Cin), jnp.float32),
            pltpu.VMEM((LEN, 3 * Cout), jnp.float32),
        ],
    )

    out_flat = pl.pallas_call(
        kernel,
        out_shape=jax.ShapeDtypeStruct((N, HW, Cout), jnp.float32),
        grid_spec=grid_spec,
        compiler_params=pltpu.CompilerParams(
            # grid steps are independent -> shard across v7x's 2 TensorCores
            dimension_semantics=("parallel",),
            vmem_limit_bytes=32 * 1024 * 1024,
        ),
    )(x_flat, kp["w1p"], kp["w2p"], kp["bias"])

    return out_flat.reshape(N, H, W, Cout)


# ----------------------------- parameter setup (host-side glue) -----------------------------

def make_params(key, in_planes, planes):
    """Raw module parameters: conv weights (HWIO) + eval-mode BatchNorm statistics."""
    ks = jax.random.split(key, 8)
    f32 = jnp.float32

    def bn(k):
        kg, kb, km, kv = jax.random.split(k, 4)
        return dict(gamma=jax.random.uniform(kg, (planes,), f32, 0.5, 1.5),
                    beta=jax.random.normal(kb, (planes,), f32) * 0.1,
                    mean=jax.random.normal(km, (planes,), f32) * 0.1,
                    var=jax.random.uniform(kv, (planes,), f32, 0.5, 1.5))

    w1 = jax.random.normal(ks[0], (3, 3, in_planes, planes), f32) * 0.2   # conv1
    w2 = jax.random.normal(ks[1], (3, 3, planes, planes), f32) * 0.2      # shared conv2
    ws = jax.random.normal(ks[2], (in_planes, planes), f32) * 0.2         # 1x1 shortcut conv
    return dict(w1=w1, w2=w2, ws=ws, bn1=bn(ks[3]), bn2=bn(ks[4]), bns=bn(ks[5]))


def pack_params(p, eps=1e-5):
    """Fold eval-mode BN scales into the conv weights, merge the biases, pack the 3x3
    kernels kh-major along K (matching the kernel's lane-group layout), fuse the 1x1
    shortcut into conv1's centre tap, and cast matmul weights to bf16."""
    w1, w2, ws = p["w1"], p["w2"], p["ws"]
    Cin, Cout = ws.shape

    def fold(bn):
        scale = bn["gamma"] / jnp.sqrt(bn["var"] + eps)
        return scale, bn["beta"] - bn["mean"] * scale

    s1, b1 = fold(p["bn1"])
    s2, b2 = fold(p["bn2"])
    ss, bs = fold(p["bns"])

    w1s = (w1 * s1).astype(jnp.float32)           # bn1 scale folded (broadcast over Cout)
    w2s = (w2 * s2).astype(jnp.float32)           # bn2 scale folded
    wss = (ws * ss).astype(jnp.float32)           # shortcut-bn scale folded

    # (kh, kw, ci, co) -> (kw, K = kh*C + ci, co): K order matches the packed lane groups.
    w1p = jnp.transpose(w1s, (1, 0, 2, 3)).reshape(3, 3 * Cin, Cout)
    sc = jnp.zeros((3, 3 * Cin, Cout), jnp.float32).at[1, Cin:2 * Cin, :].set(wss)
    w1p = jnp.concatenate([w1p, sc], axis=-1)     # (3, 3*Cin, 2*Cout): fused shortcut cols
    w2p = jnp.transpose(w2s, (1, 0, 2, 3)).reshape(3, 3 * Cout, Cout)

    bias = jnp.stack([b1, b2 + bs], axis=0).astype(jnp.float32)   # (2, Cout)
    return dict(w1p=w1p.astype(jnp.bfloat16),
                w2p=w2p.astype(jnp.bfloat16),
                bias=bias)


def reference(x_nhwc, p, *, matmul_dtype=jnp.float32, eps=1e-5):
    """Pure-JAX reference (eval-mode BN).  With matmul_dtype=bf16 the conv operands are
    quantized at the same points as the kernel (f32 accumulation via HIGHEST precision)."""
    dn = ("NHWC", "HWIO", "NHWC")
    Cin, Cout = p["ws"].shape

    def fold(bn):
        scale = bn["gamma"] / jnp.sqrt(bn["var"] + eps)
        return scale, bn["beta"] - bn["mean"] * scale

    s1, b1 = fold(p["bn1"])
    s2, b2 = fold(p["bn2"])
    ss, bs = fold(p["bns"])

    def q(a):
        return a.astype(matmul_dtype).astype(jnp.float32)

    def conv(inp, w, pad):
        return lax.conv_general_dilated(q(inp), q(w), (1, 1), pad,
                                        dimension_numbers=dn,
                                        precision=lax.Precision.HIGHEST)

    out = conv(x_nhwc, p["w1"] * s1, ((1, 1), (1, 1))) + b1
    out = jnp.maximum(out, 0.0)
    out = conv(out, p["w2"] * s2, ((1, 1), (1, 1))) + b2
    sc = conv(x_nhwc, (p["ws"] * ss).reshape(1, 1, Cin, Cout), ((0, 0), (0, 0))) + bs
    return jnp.maximum(out + sc, 0.0)


if __name__ == "__main__":
    N, in_planes, planes, H, W = 2, 4, 8, 16, 16   # stride=1, in_planes != planes -> conv shortcut

    key = jax.random.PRNGKey(0)
    kx, kp = jax.random.split(key)

    # PyTorch-style NCHW input, converted to NHWC for the kernel.
    x_nchw = jax.random.normal(kx, (N, in_planes, H, W), jnp.float32)
    x_nhwc = jnp.transpose(x_nchw, (0, 2, 3, 1))

    params = make_params(kp, in_planes, planes)
    kparams = pack_params(params)

    # bf16-matmul-matched reference (same quantization points, f32 accumulation) and the
    # plain f32 reference (original module semantics, loose bf16-level tolerance).
    ref_bf16 = jax.block_until_ready(reference(x_nhwc, params, matmul_dtype=jnp.bfloat16))
    ref_f32 = jax.block_until_ready(reference(x_nhwc, params))

    for nb in (1, 2):   # 1: one image/step (megacore-parallel); 2: whole batch per step
        out = reuse_block2_pallas(x_nhwc, kparams, images_per_step=nb)
        out = jax.block_until_ready(out)
        assert out.shape == (N, H, W, planes)
        assert jnp.allclose(out, ref_bf16, rtol=5e-2, atol=5e-2), (
            f"images_per_step={nb}: max abs err vs bf16-matched ref = "
            f"{jnp.max(jnp.abs(out - ref_bf16))}")
        assert jnp.allclose(out, ref_f32, rtol=1e-1, atol=2.5e-1), (
            f"images_per_step={nb}: max abs err vs f32 ref = "
            f"{jnp.max(jnp.abs(out - ref_f32))}")

    print("KERNEL_OK")
</pallas_src>

<mosaic_0001>
module attributes {stable_mosaic.version = 11 : i64} {
  func.func @_reuse_block2_kernel(%arg0: i32, %arg1: memref<1x256x4xf32, #tpu.memory_space<vmem>>, %arg2: memref<3x12x16xbf16, #tpu.memory_space<vmem>>, %arg3: memref<3x24x8xbf16, #tpu.memory_space<vmem>>, %arg4: memref<2x8xf32, #tpu.memory_space<vmem>>, %arg5: memref<1x256x8xf32, #tpu.memory_space<vmem>>, %arg6: memref<272x12xf32, #tpu.memory_space<vmem>>, %arg7: memref<272x24xf32, #tpu.memory_space<vmem>>) attributes {dimension_semantics = [#tpu.dimension_semantics<parallel>], iteration_bounds = array<i64: 2>, scalar_prefetch = 0 : i64, scratch_operands = 2 : i64, tpu.core_type = #tpu.core_type<tc>, window_params = [{transform_indices = @transform_0, window_bounds = array<i64: 1, 256, 4>}, {pipeline_mode = #tpu.pipeline_mode<synchronous>, transform_indices = @transform_1, window_bounds = array<i64: 3, 12, 16>}, {pipeline_mode = #tpu.pipeline_mode<synchronous>, transform_indices = @transform_2, window_bounds = array<i64: 3, 24, 8>}, {pipeline_mode = #tpu.pipeline_mode<synchronous>, transform_indices = @transform_3, window_bounds = array<i64: 2, 8>}, {transform_indices = @transform_4, window_bounds = array<i64: 1, 256, 8>}]} {
    %0 = tpu.iota {dimensions = array<i32: 0>} : vector<256x1xi32>
    %c16_i32 = arith.constant 16 : i32
    %c0_i32 = arith.constant 0 : i32
    %1 = arith.cmpi eq, %c16_i32, %c0_i32 : i32
    %c1_i32 = arith.constant 1 : i32
    %2 = arith.select %1, %c1_i32, %c16_i32 : i32
    %3 = vector.broadcast %2 : i32 to vector<256x1xi32>
    %4 = arith.remsi %0, %3 : vector<256x1xi32>
    %c0_i32_0 = arith.constant 0 : i32
    %5 = vector.broadcast %c0_i32_0 : i32 to vector<256x1xi32>
    %6 = arith.cmpi ne, %4, %5 : vector<256x1xi32>
    %c0_i32_1 = arith.constant 0 : i32
    %7 = vector.broadcast %c0_i32_1 : i32 to vector<256x1xi32>
    %8 = arith.cmpi slt, %4, %7 : vector<256x1xi32>
    %c0_i32_2 = arith.constant 0 : i32
    %9 = arith.cmpi slt, %2, %c0_i32_2 : i32
    %10 = vector.broadcast %9 : i1 to vector<256x1xi1>
    %11 = vector.broadcast %10 : vector<256x1xi1> to vector<256x1xi1>
    %12 = arith.xori %8, %11 : vector<256x1xi1>
    %13 = arith.andi %12, %6 : vector<256x1xi1>
    %14 = vector.broadcast %2 : i32 to vector<256x1xi32>
    %15 = arith.addi %4, %14 : vector<256x1xi32>
    %16 = arith.select %13, %15, %4 : vector<256x1xi1>, vector<256x1xi32>
    %c0_i32_3 = arith.constant 0 : i32
    %17 = vector.broadcast %c0_i32_3 : i32 to vector<256x1xi32>
    %18 = arith.cmpi ne, %16, %17 : vector<256x1xi32>
    %c15_i32 = arith.constant 15 : i32
    %19 = vector.broadcast %c15_i32 : i32 to vector<256x1xi32>
    %20 = arith.cmpi ne, %16, %19 : vector<256x1xi32>
    %c0 = arith.constant 0 : index
    %c0_4 = arith.constant 0 : index
    %21 = vector.load %arg4[%c0, %c0_4] : memref<2x8xf32, #tpu.memory_space<vmem>>, vector<1x8xf32>
    %c1 = arith.constant 1 : index
    %c0_5 = arith.constant 0 : index
    %22 = vector.load %arg4[%c1, %c0_5] : memref<2x8xf32, #tpu.memory_space<vmem>>, vector<1x8xf32>
    %c0_6 = arith.constant 0 : index
    %c0_7 = arith.constant 0 : index
    %c0_8 = arith.constant 0 : index
    %23 = vector.load %arg1[%c0_6, %c0_7, %c0_8] : memref<1x256x4xf32, #tpu.memory_space<vmem>>, vector<1x256x4xf32>
    %24 = vector.shape_cast %23 : vector<1x256x4xf32> to vector<256x4xf32>
    %cst = arith.constant 0.000000e+00 : f32
    %25 = vector.broadcast %cst : f32 to vector<16x4xf32>
    %26 = vector.extract_strided_slice %24 {offsets = [0, 0], sizes = [240, 4], strides = [1, 1]} : vector<256x4xf32> to vector<240x4xf32>
    %27 = tpu.concatenate %25, %26 in 0 : vector<16x4xf32>, vector<240x4xf32> -> vector<256x4xf32>
    %28 = vector.extract_strided_slice %24 {offsets = [16, 0], sizes = [240, 4], strides = [1, 1]} : vector<256x4xf32> to vector<240x4xf32>
    %29 = tpu.concatenate %28, %25 in 0 : vector<240x4xf32>, vector<16x4xf32> -> vector<256x4xf32>
    %30 = tpu.concatenate %27, %24, %29 in 1 : vector<256x4xf32>, vector<256x4xf32>, vector<256x4xf32> -> vector<256x12xf32>
    %c8 = arith.constant 8 : index
    %c0_9 = arith.constant 0 : index
    %31 = vector.load %arg6[%c8, %c0_9] : memref<272x12xf32, #tpu.memory_space<vmem>>, vector<256x12xf32>
    tpu.vector_store %arg6[%c8, %c0_9], %30 {strides = array<i32>} : memref<272x12xf32, #tpu.memory_space<vmem>>, vector<256x12xf32>,
    %cst_10 = arith.constant 0.000000e+00 : f32
    %32 = vector.broadcast %cst_10 : f32 to vector<256x16xf32>
    %c7 = arith.constant 7 : index
    %c0_11 = arith.constant 0 : index
    %33 = vector.load %arg6[%c7, %c0_11] : memref<272x12xf32, #tpu.memory_space<vmem>>, vector<256x12xf32>
    %cst_12 = arith.constant 0.000000e+00 : f32
    %34 = vector.shape_cast %18 : vector<256x1xi1> to vector<256x1xi1>
    %35 = vector.broadcast %34 : vector<256x1xi1> to vector<256x12xi1>
    %36 = vector.broadcast %cst_12 : f32 to vector<256x12xf32>
    %37 = arith.select %35, %33, %36 : vector<256x12xi1>, vector<256x12xf32>
    %38 = arith.truncf %37 : vector<256x12xf32> to vector<256x12xbf16>
    %c0_13 = arith.constant 0 : index
    %c0_14 = arith.constant 0 : index
    %c0_15 = arith.constant 0 : index
    %39 = vector.load %arg2[%c0_13, %c0_14, %c0_15] : memref<3x12x16xbf16, #tpu.memory_space<vmem>>, vector<1x12x16xbf16>
    %40 = vector.shape_cast %39 : vector<1x12x16xbf16> to vector<12x16xbf16>
    %cst_16 = arith.constant dense<0.000000e+00> : vector<256x16xf32>
    %41 = tpu.matmul %38, %40, %cst_16 {dimension_numbers = #tpu.dot_dimension_numbers<[1], [0], [0], [1], [0, 0, 1, 1], [], []>} : vector<256x12xbf16>, vector<12x16xbf16>, vector<256x16xf32> -> vector<256x16xf32>
    %42 = arith.addf %32, %41 : vector<256x16xf32>
    %c8_17 = arith.constant 8 : index
    %c0_18 = arith.constant 0 : index
    %43 = vector.load %arg6[%c8_17, %c0_18] : memref<272x12xf32, #tpu.memory_space<vmem>>, vector<256x12xf32>
    %44 = arith.truncf %43 : vector<256x12xf32> to vector<256x12xbf16>
    %c1_19 = arith.constant 1 : index
    %c0_20 = arith.constant 0 : index
    %c0_21 = arith.constant 0 : index
    %45 = vector.load %arg2[%c1_19, %c0_20, %c0_21] : memref<3x12x16xbf16, #tpu.memory_space<vmem>>, vector<1x12x16xbf16>
    %46 = vector.shape_cast %45 : vector<1x12x16xbf16> to vector<12x16xbf16>
    %cst_22 = arith.constant dense<0.000000e+00> : vector<256x16xf32>
    %47 = tpu.matmul %44, %46, %cst_22 {dimension_numbers = #tpu.dot_dimension_numbers<[1], [0], [0], [1], [0, 0, 1, 1], [], []>} : vector<256x12xbf16>, vector<12x16xbf16>, vector<256x16xf32> -> vector<256x16xf32>
    %48 = arith.addf %42, %47 : vector<256x16xf32>
    %c9 = arith.constant 9 : index
    %c0_23 = arith.constant 0 : index
    %49 = vector.load %arg6[%c9, %c0_23] : memref<272x12xf32, #tpu.memory_space<vmem>>, vector<256x12xf32>
    %cst_24 = arith.constant 0.000000e+00 : f32
    %50 = vector.shape_cast %20 : vector<256x1xi1> to vector<256x1xi1>
    %51 = vector.broadcast %50 : vector<256x1xi1> to vector<256x12xi1>
    %52 = vector.broadcast %cst_24 : f32 to vector<256x12xf32>
    %53 = arith.select %51, %49, %52 : vector<256x12xi1>, vector<256x12xf32>
    %54 = arith.truncf %53 : vector<256x12xf32> to vector<256x12xbf16>
    %c2 = arith.constant 2 : index
    %c0_25 = arith.constant 0 : index
    %c0_26 = arith.constant 0 : index
    %55 = vector.load %arg2[%c2, %c0_25, %c0_26] : memref<3x12x16xbf16, #tpu.memory_space<vmem>>, vector<1x12x16xbf16>
    %56 = vector.shape_cast %55 : vector<1x12x16xbf16> to vector<12x16xbf16>
    %cst_27 = arith.constant dense<0.000000e+00> : vector<256x16xf32>
    %57 = tpu.matmul %54, %56, %cst_27 {dimension_numbers = #tpu.dot_dimension_numbers<[1], [0], [0], [1], [0, 0, 1, 1], [], []>} : vector<256x12xbf16>, vector<12x16xbf16>, vector<256x16xf32> -> vector<256x16xf32>
    %58 = arith.addf %48, %57 : vector<256x16xf32>
    %59 = vector.extract_strided_slice %58 {offsets = [0, 0], sizes = [256, 8], strides = [1, 1]} : vector<256x16xf32> to vector<256x8xf32>
    %60 = vector.broadcast %21 : vector<1x8xf32> to vector<256x8xf32>
    %61 = arith.addf %59, %60 : vector<256x8xf32>
    %cst_28 = arith.constant 0.000000e+00 : f32
    %62 = vector.broadcast %cst_28 : f32 to vector<256x8xf32>
    %63 = arith.maximumf %61, %62 : vector<256x8xf32>
    %cst_29 = arith.constant 0.000000e+00 : f32
    %64 = vector.broadcast %cst_29 : f32 to vector<16x8xf32>
    %65 = vector.extract_strided_slice %63 {offsets = [0, 0], sizes = [240, 8], strides = [1, 1]} : vector<256x8xf32> to vector<240x8xf32>
    %66 = tpu.concatenate %64, %65 in 0 : vector<16x8xf32>, vector<240x8xf32> -> vector<256x8xf32>
    %67 = vector.extract_strided_slice %63 {offsets = [16, 0], sizes = [240, 8], strides = [1, 1]} : vector<256x8xf32> to vector<240x8xf32>
    %68 = tpu.concatenate %67, %64 in 0 : vector<240x8xf32>, vector<16x8xf32> -> vector<256x8xf32>
    %69 = tpu.concatenate %66, %63, %68 in 1 : vector<256x8xf32>, vector<256x8xf32>, vector<256x8xf32> -> vector<256x24xf32>
    %c8_30 = arith.constant 8 : index
    %c0_31 = arith.constant 0 : index
    %70 = vector.load %arg7[%c8_30, %c0_31] : memref<272x24xf32, #tpu.memory_space<vmem>>, vector<256x24xf32>
    tpu.vector_store %arg7[%c8_30, %c0_31], %69 {strides = array<i32>} : memref<272x24xf32, #tpu.memory_space<vmem>>, vector<256x24xf32>,
    %71 = vector.extract_strided_slice %58 {offsets = [0, 8], sizes = [256, 8], strides = [1, 1]} : vector<256x16xf32> to vector<256x8xf32>
    %72 = vector.broadcast %22 : vector<1x8xf32> to vector<256x8xf32>
    %73 = arith.addf %71, %72 : vector<256x8xf32>
    %c7_32 = arith.constant 7 : index
    %c0_33 = arith.constant 0 : index
    %74 = vector.load %arg7[%c7_32, %c0_33] : memref<272x24xf32, #tpu.memory_space<vmem>>, vector<256x24xf32>
    %cst_34 = arith.constant 0.000000e+00 : f32
    %75 = vector.shape_cast %18 : vector<256x1xi1> to vector<256x1xi1>
    %76 = vector.broadcast %75 : vector<256x1xi1> to vector<256x24xi1>
    %77 = vector.broadcast %cst_34 : f32 to vector<256x24xf32>
    %78 = arith.select %76, %74, %77 : vector<256x24xi1>, vector<256x24xf32>
    %79 = arith.truncf %78 : vector<256x24xf32> to vector<256x24xbf16>
    %c0_35 = arith.constant 0 : index
    %c0_36 = arith.constant 0 : index
    %c0_37 = arith.constant 0 : index
    %80 = vector.load %arg3[%c0_35, %c0_36, %c0_37] : memref<3x24x8xbf16, #tpu.memory_space<vmem>>, vector<1x24x8xbf16>
    %81 = vector.shape_cast %80 : vector<1x24x8xbf16> to vector<24x8xbf16>
    %cst_38 = arith.constant dense<0.000000e+00> : vector<256x8xf32>
    %82 = tpu.matmul %79, %81, %cst_38 {dimension_numbers = #tpu.dot_dimension_numbers<[1], [0], [0], [1], [0, 0, 1, 1], [], []>} : vector<256x24xbf16>, vector<24x8xbf16>, vector<256x8xf32> -> vector<256x8xf32>
    %83 = arith.addf %73, %82 : vector<256x8xf32>
    %c8_39 = arith.constant 8 : index
    %c0_40 = arith.constant 0 : index
    %84 = vector.load %arg7[%c8_39, %c0_40] : memref<272x24xf32, #tpu.memory_space<vmem>>, vector<256x24xf32>
    %85 = arith.truncf %84 : vector<256x24xf32> to vector<256x24xbf16>
    %c1_41 = arith.constant 1 : index
    %c0_42 = arith.constant 0 : index
    %c0_43 = arith.constant 0 : index
    %86 = vector.load %arg3[%c1_41, %c0_42, %c0_43] : memref<3x24x8xbf16, #tpu.memory_space<vmem>>, vector<1x24x8xbf16>
    %87 = vector.shape_cast %86 : vector<1x24x8xbf16> to vector<24x8xbf16>
    %cst_44 = arith.constant dense<0.000000e+00> : vector<256x8xf32>
    %88 = tpu.matmul %85, %87, %cst_44 {dimension_numbers = #tpu.dot_dimension_numbers<[1], [0], [0], [1], [0, 0, 1, 1], [], []>} : vector<256x24xbf16>, vector<24x8xbf16>, vector<256x8xf32> -> vector<256x8xf32>
    %89 = arith.addf %83, %88 : vector<256x8xf32>
    %c9_45 = arith.constant 9 : index
    %c0_46 = arith.constant 0 : index
    %90 = vector.load %arg7[%c9_45, %c0_46] : memref<272x24xf32, #tpu.memory_space<vmem>>, vector<256x24xf32>
    %cst_47 = arith.constant 0.000000e+00 : f32
    %91 = vector.shape_cast %20 : vector<256x1xi1> to vector<256x1xi1>
    %92 = vector.broadcast %91 : vector<256x1xi1> to vector<256x24xi1>
    %93 = vector.broadcast %cst_47 : f32 to vector<256x24xf32>
    %94 = arith.select %92, %90, %93 : vector<256x24xi1>, vector<256x24xf32>
    %95 = arith.truncf %94 : vector<256x24xf32> to vector<256x24xbf16>
    %c2_48 = arith.constant 2 : index
    %c0_49 = arith.constant 0 : index
    %c0_50 = arith.constant 0 : index
    %96 = vector.load %arg3[%c2_48, %c0_49, %c0_50] : memref<3x24x8xbf16, #tpu.memory_space<vmem>>, vector<1x24x8xbf16>
    %97 = vector.shape_cast %96 : vector<1x24x8xbf16> to vector<24x8xbf16>
    %cst_51 = arith.constant dense<0.000000e+00> : vector<256x8xf32>
    %98 = tpu.matmul %95, %97, %cst_51 {dimension_numbers = #tpu.dot_dimension_numbers<[1], [0], [0], [1], [0, 0, 1, 1], [], []>} : vector<256x24xbf16>, vector<24x8xbf16>, vector<256x8xf32> -> vector<256x8xf32>
    %99 = arith.addf %89, %98 : vector<256x8xf32>
    %cst_52 = arith.constant 0.000000e+00 : f32
    %100 = vector.broadcast %cst_52 : f32 to vector<256x8xf32>
    %101 = arith.maximumf %99, %100 : vector<256x8xf32>
    %c0_53 = arith.constant 0 : index
    %c0_54 = arith.constant 0 : index
    %c0_55 = arith.constant 0 : index
    %102 = vector.load %arg5[%c0_53, %c0_54, %c0_55] : memref<1x256x8xf32, #tpu.memory_space<vmem>>, vector<1x256x8xf32>
    %103 = vector.shape_cast %102 : vector<1x256x8xf32> to vector<256x8xf32>
    %104 = vector.shape_cast %101 : vector<256x8xf32> to vector<1x256x8xf32>
    tpu.vector_store %arg5[%c0_53, %c0_54, %c0_55], %104 {strides = array<i32>} : memref<1x256x8xf32, #tpu.memory_space<vmem>>, vector<1x256x8xf32>,
    return
  }
  func.func @transform_0(%arg0: i32) -> (i32, i32, i32) {
    %c0_i32 = arith.constant 0 : i32
    %c0_i32_0 = arith.constant 0 : i32
    %c0_i32_1 = arith.constant 0 : i32
    return %arg0, %c0_i32, %c0_i32_0 : i32, i32, i32
  }
  func.func @transform_1(%arg0: i32) -> (i32, i32, i32) {
    %c0_i32 = arith.constant 0 : i32
    %c0_i32_0 = arith.constant 0 : i32
    %c0_i32_1 = arith.constant 0 : i32
    %c0_i32_2 = arith.constant 0 : i32
    return %c0_i32, %c0_i32_0, %c0_i32_1 : i32, i32, i32
  }
  func.func @transform_2(%arg0: i32) -> (i32, i32, i32) {
    %c0_i32 = arith.constant 0 : i32
    %c0_i32_0 = arith.constant 0 : i32
    %c0_i32_1 = arith.constant 0 : i32
    %c0_i32_2 = arith.constant 0 : i32
    return %c0_i32, %c0_i32_0, %c0_i32_1 : i32, i32, i32
  }
  func.func @transform_3(%arg0: i32) -> (i32, i32) {
    %c0_i32 = arith.constant 0 : i32
    %c0_i32_0 = arith.constant 0 : i32
    %c0_i32_1 = arith.constant 0 : i32
    return %c0_i32, %c0_i32_0 : i32, i32
  }
  func.func @transform_4(%arg0: i32) -> (i32, i32, i32) {
    %c0_i32 = arith.constant 0 : i32
    %c0_i32_0 = arith.constant 0 : i32
    %c0_i32_1 = arith.constant 0 : i32
    return %arg0, %c0_i32, %c0_i32_0 : i32, i32, i32
  }
}

</mosaic_0001>

<llo_original>
// kernel: tpu_custom_call.1
$region0: #{tpu_custom_call.1}
  #allocation0 [shape = 'u32[]', space=smem, size = 0x4, offset = 0x4, fixed_abs, tag = 'smem constant byte address 0x4 - core index']
  #allocation1 [shape = 'u32[72,128]{1,0:T(1,128)}', space=vmem, size = 0x9000, scoped, tag = 'internal scratch']
  #allocation2 [shape = 'f32[272,12]{1,0:T(8,128)}', space=vmem, size = 0x22000, scoped, tag = 'scratch operand']
  #allocation3 [shape = 'f32[272,24]{1,0:T(8,128)}', space=vmem, size = 0x22000, scoped, tag = 'scratch operand']
  %s0 = inlined_call_operand.vmem [shape: f32[2,256,4], index: 0, kind: input, shape index: {}]
  %s1 = inlined_call_operand.vmem [shape: bf16[3,12,16], index: 1, kind: input, shape index: {}]
  %s2 = inlined_call_operand.vmem [shape: bf16[3,24,8], index: 2, kind: input, shape index: {}]
  %s3 = inlined_call_operand.vmem [shape: f32[2,8], index: 3, kind: input, shape index: {}]
  %s4 = inlined_call_operand.vmem [shape: f32[2,256,8], index: 4, kind: output, shape index: {}]
  %s5 = sld [smem:[#allocation0]]
  $region49: #{tpu_custom_call.1} parent=0
    _
  %s7 = ssub.s32 1, %s5
  %s8 = scalar_select 0, %s7, %s5
  loop: start=0, step=1, limit=4
  $region2: #{tpu_custom_call.1} parent=0 // loop_pre_header
    _
  $region3: #{tpu_custom_call.1} parent=0 // loop_header
    %s10 = sphi 0, %s14
    %p11 = scmp.ge.s32.totalorder %s10, 4
    %s20 = sphi 0, %s22
    %s23 = sphi 0, %s20
    %s24 = sphi 0, %s23
    %s40 = sphi 0, %s24
    %s44 = sphi 0, %s44
    %s46 = sphi 0, %s44
    %s47 = sphi 0, %s46
    %s61 = sphi 0, %s47
    %s65 = sphi 0, %s65
    %s67 = sphi 0, %s65
    %s68 = sphi 0, %s67
    %s82 = sphi 0, %s68
    %s86 = sphi 0, %s86
    %s88 = sphi 0, %s86
    %s89 = sphi 0, %s88
    %s103 = sphi 0, %s89
    %s109 = sphi 0, %s111
    %s112 = sphi 0, %s109
    %s113 = sphi 0, %s112
    %s129 = sphi 0, %s113
  $region4: #{tpu_custom_call.1} parent=0 // loop_header_branch
    %13 = sbr.rel (%p11) target = $region8
  $region5: #{tpu_custom_call.1} parent=0 // loop_body
    %s15 = ssub.s32 %s10, 1
    %s16 = ssub.s32 %s10, 2
    %s17 = sadd.s32 %s10, 1
    %s18 = ssub.s32 %s10, %s17
    %p19 = scmp.eq.s32.totalorder %s18, 0
    %s21 = sadd.s32 %s20, 1
    %s22 = scalar_select %p19, %s20, %s21
    %p25 = pneg %p19
    %p26 = scmp.eq.s32.totalorder %s10, 1
    %p27 = por %p25, %p26
    %p28 = scmp.ne.s32.totalorder %s20, %s23
    %p29 = scmp.eq.s32.totalorder %s10, 0
    %p30 = por %p28, %p29
    %p31 = scmp.ne.s32.totalorder %s20, %s23
    %p32 = scmp.eq.s32.totalorder %s15, 1
    %p33 = por %p31, %p32
    %p34 = scmp.ne.s32.totalorder %s23, %s24
    %p35 = scmp.eq.s32.totalorder %s15, 0
    %p36 = por %p34, %p35
    %p37 = scmp.ne.s32.totalorder %s23, %s24
    %p38 = scmp.eq.s32.totalorder %s16, 1
    %p39 = por %p37, %p38
    %p41 = scmp.ne.s32.totalorder %s24, %s40
    %p42 = scmp.eq.s32.totalorder %s16, 0
    %p43 = por %p41, %p42
    %s45 = sadd.s32 %s44, 1
    %p48 = scmp.eq.s32.totalorder %s10, 1
    %p49 = scmp.ne.s32.totalorder %s44, %s46
    %p50 = scmp.eq.s32.totalorder %s10, 0
    %p51 = por %p49, %p50
    %p52 = scmp.ne.s32.totalorder %s44, %s46
    %p53 = scmp.eq.s32.totalorder %s15, 1
    %p54 = por %p52, %p53
    %p55 = scmp.ne.s32.totalorder %s46, %s47
    %p56 = scmp.eq.s32.totalorder %s15, 0
    %p57 = por %p55, %p56
    %p58 = scmp.ne.s32.totalorder %s46, %s47
    %p59 = scmp.eq.s32.totalorder %s16, 1
    %p60 = por %p58, %p59
    %p62 = scmp.ne.s32.totalorder %s47, %s61
    %p63 = scmp.eq.s32.totalorder %s16, 0
    %p64 = por %p62, %p63
    %s66 = sadd.s32 %s65, 1
    %p69 = scmp.eq.s32.totalorder %s10, 1
    %p70 = scmp.ne.s32.totalorder %s65, %s67
    %p71 = scmp.eq.s32.totalorder %s10, 0
    %p72 = por %p70, %p71
    %p73 = scmp.ne.s32.totalorder %s65, %s67
    %p74 = scmp.eq.s32.totalorder %s15, 1
    %p75 = por %p73, %p74
    %p76 = scmp.ne.s32.totalorder %s67, %s68
    %p77 = scmp.eq.s32.totalorder %s15, 0
    %p78 = por %p76, %p77
    %p79 = scmp.ne.s32.totalorder %s67, %s68
    %p80 = scmp.eq.s32.totalorder %s16, 1
    %p81 = por %p79, %p80
    %p83 = scmp.ne.s32.totalorder %s68, %s82
    %p84 = scmp.eq.s32.totalorder %s16, 0
    %p85 = por %p83, %p84
    %s87 = sadd.s32 %s86, 1
    %p90 = scmp.eq.s32.totalorder %s10, 1
    %p91 = scmp.ne.s32.totalorder %s86, %s88
    %p92 = scmp.eq.s32.totalorder %s10, 0
    %p93 = por %p91, %p92
    %p94 = scmp.ne.s32.totalorder %s86, %s88
    %p95 = scmp.eq.s32.totalorder %s15, 1
    %p96 = por %p94, %p95
    %p97 = scmp.ne.s32.totalorder %s88, %s89
    %p98 = scmp.eq.s32.totalorder %s15, 0
    %p99 = por %p97, %p98
    %p100 = scmp.ne.s32.totalorder %s88, %s89
    %p101 = scmp.eq.s32.totalorder %s16, 1
    %p102 = por %p100, %p101
    %p104 = scmp.ne.s32.totalorder %s89, %s103
    %p105 = scmp.eq.s32.totalorder %s16, 0
    %p106 = por %p104, %p105
    %s107 = ssub.s32 %s10, %s17
    %p108 = scmp.eq.s32.totalorder %s107, 0
    %s110 = sadd.s32 %s109, 1
    %s111 = scalar_select %p108, %s109, %s110
    %p114 = pneg %p108
    %p115 = scmp.eq.s32.totalorder %s10, 1
    %p116 = por %p114, %p115
    %p117 = scmp.ne.s32.totalorder %s109, %s112
    %p118 = scmp.eq.s32.totalorder %s10, 0
    %p119 = por %p117, %p118
    %p120 = scmp.ne.s32.totalorder %s109, %s112
    %p121 = scmp.eq.s32.totalorder %s15, 1
    %p122 = por %p120, %p121
    %p123 = scmp.ne.s32.totalorder %s112, %s113
    %p124 = scmp.eq.s32.totalorder %s15, 0
    %p125 = por %p123, %p124
    %p126 = scmp.ne.s32.totalorder %s112, %s113
    %p127 = scmp.eq.s32.totalorder %s16, 1
    %p128 = por %p126, %p127
    %p130 = scmp.ne.s32.totalorder %s113, %s129
    %p131 = scmp.eq.s32.totalorder %s16, 0
    %p132 = por %p130, %p131
    %p133 = scmp.le.s32.totalorder 1, %s10
    %p134 = scmp.lt.s32.totalorder %s10, 3
    %p135 = pnand %p133, %p134
    %p136 = pneg %p135
    // Predicated region
    $region9: #{tpu_custom_call.1} parent=5 // pred_check
      _
    $region10: #{tpu_custom_call.1} parent=5 // pred_check_branch
      %138 = sbr.rel (%p135) target = $region12
    $region11: #{tpu_custom_call.1} parent=5 // pred_region
      %s139 = ssub.s32 %s10, 1
      // Predicated region
      $region13: #{tpu_custom_call.1} parent=11 // pred_check
        %p140 = pneg %p57
      $region14: #{tpu_custom_call.1} parent=11 // pred_check_branch
        %142 = sbr.rel (%p140) target = $region16
      $region15: #{tpu_custom_call.1} parent=11 // pred_region
        _
      $region16: #{tpu_custom_call.1} parent=11 // pred_fallthru
        _
      // Predicated region
      $region17: #{tpu_custom_call.1} parent=11 // pred_check
        %p143 = pneg %p78
      $region18: #{tpu_custom_call.1} parent=11 // pred_check_branch
        %145 = sbr.rel (%p143) target = $region20
      $region19: #{tpu_custom_call.1} parent=11 // pred_region
        _
      $region20: #{tpu_custom_call.1} parent=11 // pred_fallthru
        _
      // Predicated region
      $region21: #{tpu_custom_call.1} parent=11 // pred_check
        %p146 = pneg %p99
      $region22: #{tpu_custom_call.1} parent=11 // pred_check_branch
        %148 = sbr.rel (%p146) target = $region24
      $region23: #{tpu_custom_call.1} parent=11 // pred_region
        _
      $region24: #{tpu_custom_call.1} parent=11 // pred_fallthru
        _
    $region12: #{tpu_custom_call.1} parent=5 // pred_fallthru
      _
    %p149 = scmp.lt.s32.totalorder %s10, 2
    // Predicated region
    $region25: #{tpu_custom_call.1} parent=5 // pred_check
      %p150 = pneg %p149
    $region26: #{tpu_custom_call.1} parent=5 // pred_check_branch
      %152 = sbr.rel (%p150) target = $region28
    $region27: #{tpu_custom_call.1} parent=5 // pred_region
      // Predicated region
      $region29: #{tpu_custom_call.1} parent=27 // pred_check
        %p153 = pneg %p30
      $region30: #{tpu_custom_call.1} parent=27 // pred_check_branch
        %155 = sbr.rel (%p153) target = $region32
      $region31: #{tpu_custom_call.1} parent=27 // pred_region
        %p156 = scmp.lt.s32.totalorder %s10, 1
        %s157 = scalar_select %p156, %s10, 1
        %s158 = smul.addr %s157, 32
        %s159 = smul.addr %s158, 8
        %s160 = scalar_lea.vmem %s0, %s159
      $region32: #{tpu_custom_call.1} parent=27 // pred_fallthru
        _
    $region28: #{tpu_custom_call.1} parent=5 // pred_fallthru
      _
    %p161 = scmp.le.s32.totalorder 1, %s10
    %p162 = scmp.lt.s32.totalorder %s10, 3
    %p163 = pnand %p161, %p162
    %p164 = pneg %p163
    // Predicated region
    $region33: #{tpu_custom_call.1} parent=5 // pred_check
      _
    $region34: #{tpu_custom_call.1} parent=5 // pred_check_branch
      %166 = sbr.rel (%p163) target = $region36
    $region35: #{tpu_custom_call.1} parent=5 // pred_region
      %s167 = ssub.s32 %s10, 1
      %p168 = scmp.lt.s32.totalorder %s15, 1
      %s169 = scalar_select %p168, %s15, 1
      %s170 = smul.addr %s169, 32
      %s171 = smul.addr %s170, 8
      %s172 = scalar_lea.vmem %s0, %s171
      %p173 = pneg %p36
      %p174 = pneg %p33
      %p175 = pneg %p57
      %p176 = pneg %p54
      %p177 = pneg %p78
      %p178 = pneg %p75
      %p179 = pneg %p99
      %p180 = pneg %p96
      %p181 = pneg %p125
      %p182 = pneg %p122
      %p183 = scmp.lt.s32.totalorder %s15, 1
      %s184 = scalar_select %p183, %s15, 1
      %s185 = smul.addr %s184, 32
      %s186 = smul.addr %s185, 8
      %s187 = scalar_lea.vmem %s4, %s186
      %p188 = scmp.lt.s32.totalorder %s15, 1
      %s189 = scalar_select %p188, %s15, 1
      %s190 = smul.addr %s189, 32
      %s191 = smul.addr %s190, 8
      %s192 = scalar_lea.vmem %s0, %s191
      %p193 = scmp.lt.s32.totalorder %s15, 1
      %s194 = scalar_select %p193, %s15, 1
      %s195 = smul.addr %s194, 32
      %s196 = smul.addr %s195, 8
      %s197 = scalar_lea.vmem %s4, %s196
      %v199 = vlaneseq
      %v200 = vshrl.u32 %v199, 7
      %v201 = vadd.s32 %v200, 8
      %v202 = vadd.s32 %v200, 16
      %v203 = vadd.s32 %v200, 24
      %v204 = vadd.s32 %v200, 32
      %v205 = vadd.s32 %v200, 40
      %v206 = vadd.s32 %v200, 48
      %v207 = vadd.s32 %v200, 56
      %v208 = vadd.s32 %v200, 64
      %v209 = vadd.s32 %v200, 72
      %v210 = vadd.s32 %v200, 80
      %v211 = vadd.s32 %v200, 88
      %v212 = vadd.s32 %v200, 96
      %v213 = vadd.s32 %v200, 104
      %v214 = vadd.s32 %v200, 112
      %v215 = vadd.s32 %v200, 120
      %v216 = vadd.s32 %v200, 128
      %v217 = vadd.s32 %v200, 136
      %v218 = vadd.s32 %v200, 144
      %v219 = vadd.s32 %v200, 152
      %v220 = vadd.s32 %v200, 160
      %v221 = vadd.s32 %v200, 168
      %v222 = vadd.s32 %v200, 176
      %v223 = vadd.s32 %v200, 184
      %v224 = vadd.s32 %v200, 192
      %v225 = vadd.s32 %v200, 200
      %v226 = vadd.s32 %v200, 208
      %v227 = vadd.s32 %v200, 216
      %v228 = vadd.s32 %v200, 224
      %v229 = vadd.s32 %v200, 232
      %v230 = vadd.s32 %v200, 240
      %v231 = vadd.s32 %v200, 248
      %vm232 = vcmp.lt.s32.totalorder %v200, 0
      %v233 = vsub.s32 0, %v200
      %v234 = vsel %vm232, %v233, %v200
      %v235 = vshrl.u32 %v234, 4
      %v236 = vand.u32 %v234, 15
      %v237 = vsub.s32 0, %v236
      %v238 = vsel %vm232, %v237, %v236
      %vm239 = vcmp.lt.s32.totalorder %v201, 0
      %v240 = vsub.s32 0, %v201
      %v241 = vsel %vm239, %v240, %v201
      %v242 = vshrl.u32 %v241, 4
      %v243 = vand.u32 %v241, 15
      %v244 = vsub.s32 0, %v243
      %v245 = vsel %vm239, %v244, %v243
      %vm246 = vcmp.lt.s32.totalorder %v202, 0
      %v247 = vsub.s32 0, %v202
      %v248 = vsel %vm246, %v247, %v202
      %v249 = vshrl.u32 %v248, 4
      %v250 = vand.u32 %v248, 15
      %v251 = vsub.s32 0, %v250
      %v252 = vsel %vm246, %v251, %v250
      %vm253 = vcmp.lt.s32.totalorder %v203, 0
      %v254 = vsub.s32 0, %v203
      %v255 = vsel %vm253, %v254, %v203
      %v256 = vshrl.u32 %v255, 4
      %v257 = vand.u32 %v255, 15
      %v258 = vsub.s32 0, %v257
      %v259 = vsel %vm253, %v258, %v257
      %vm260 = vcmp.lt.s32.totalorder %v204, 0
      %v261 = vsub.s32 0, %v204
      %v262 = vsel %vm260, %v261, %v204
      %v263 = vshrl.u32 %v262, 4
      %v264 = vand.u32 %v262, 15
      %v265 = vsub.s32 0, %v264
      %v266 = vsel %vm260, %v265, %v264
      %vm267 = vcmp.lt.s32.totalorder %v205, 0
      %v268 = vsub.s32 0, %v205
      %v269 = vsel %vm267, %v268, %v205
      %v270 = vshrl.u32 %v269, 4
      %v271 = vand.u32 %v269, 15
      %v272 = vsub.s32 0, %v271
      %v273 = vsel %vm267, %v272, %v271
      %vm274 = vcmp.lt.s32.totalorder %v206, 0
      %v275 = vsub.s32 0, %v206
      %v276 = vsel %vm274, %v275, %v206
      %v277 = vshrl.u32 %v276, 4
      %v278 = vand.u32 %v276, 15
      %v279 = vsub.s32 0, %v278
      %v280 = vsel %vm274, %v279, %v278
      %vm281 = vcmp.lt.s32.totalorder %v207, 0
      %v282 = vsub.s32 0, %v207
      %v283 = vsel %vm281, %v282, %v207
      %v284 = vshrl.u32 %v283, 4
      %v285 = vand.u32 %v283, 15
      %v286 = vsub.s32 0, %v285
      %v287 = vsel %vm281, %v286, %v285
      %vm288 = vcmp.lt.s32.totalorder %v208, 0
      %v289 = vsub.s32 0, %v208
      %v290 = vsel %vm288, %v289, %v208
      %v291 = vshrl.u32 %v290, 4
      %v292 = vand.u32 %v290, 15
      %v293 = vsub.s32 0, %v292
      %v294 = vsel %vm288, %v293, %v292
      %vm295 = vcmp.lt.s32.totalorder %v209, 0
      %v296 = vsub.s32 0, %v209
      %v297 = vsel %vm295, %v296, %v209
      %v298 = vshrl.u32 %v297, 4
      %v299 = vand.u32 %v297, 15
      %v300 = vsub.s32 0, %v299
      %v301 = vsel %vm295, %v300, %v299
      %vm302 = vcmp.lt.s32.totalorder %v210, 0
      %v303 = vsub.s32 0, %v210
      %v304 = vsel %vm302, %v303, %v210
      %v305 = vshrl.u32 %v304, 4
      %v306 = vand.u32 %v304, 15
      %v307 = vsub.s32 0, %v306
      %v308 = vsel %vm302, %v307, %v306
      %vm309 = vcmp.lt.s32.totalorder %v211, 0
      %v310 = vsub.s32 0, %v211
      %v311 = vsel %vm309, %v310, %v211
      %v312 = vshrl.u32 %v311, 4
      %v313 = vand.u32 %v311, 15
      %v314 = vsub.s32 0, %v313
      %v315 = vsel %vm309, %v314, %v313
      %vm316 = vcmp.lt.s32.totalorder %v212, 0
      %v317 = vsub.s32 0, %v212
      %v318 = vsel %vm316, %v317, %v212
      %v319 = vshrl.u32 %v318, 4
      %v320 = vand.u32 %v318, 15
      %v321 = vsub.s32 0, %v320
      %v322 = vsel %vm316, %v321, %v320
      %vm323 = vcmp.lt.s32.totalorder %v213, 0
      %v324 = vsub.s32 0, %v213
      %v325 = vsel %vm323, %v324, %v213
      %v326 = vshrl.u32 %v325, 4
      %v327 = vand.u32 %v325, 15
      %v328 = vsub.s32 0, %v327
      %v329 = vsel %vm323, %v328, %v327
      %vm330 = vcmp.lt.s32.totalorder %v214, 0
      %v331 = vsub.s32 0, %v214
      %v332 = vsel %vm330, %v331, %v214
      %v333 = vshrl.u32 %v332, 4
      %v334 = vand.u32 %v332, 15
      %v335 = vsub.s32 0, %v334
      %v336 = vsel %vm330, %v335, %v334
      %vm337 = vcmp.lt.s32.totalorder %v215, 0
      %v338 = vsub.s32 0, %v215
      %v339 = vsel %vm337, %v338, %v215
      %v340 = vshrl.u32 %v339, 4
      %v341 = vand.u32 %v339, 15
      %v342 = vsub.s32 0, %v341
      %v343 = vsel %vm337, %v342, %v341
      %vm344 = vcmp.lt.s32.totalorder %v216, 0
      %v345 = vsub.s32 0, %v216
      %v346 = vsel %vm344, %v345, %v216
      %v347 = vshrl.u32 %v346, 4
      %v348 = vand.u32 %v346, 15
      %v349 = vsub.s32 0, %v348
      %v350 = vsel %vm344, %v349, %v348
      %vm351 = vcmp.lt.s32.totalorder %v217, 0
      %v352 = vsub.s32 0, %v217
      %v353 = vsel %vm351, %v352, %v217
      %v354 = vshrl.u32 %v353, 4
      %v355 = vand.u32 %v353, 15
      %v356 = vsub.s32 0, %v355
      %v357 = vsel %vm351, %v356, %v355
      %vm358 = vcmp.lt.s32.totalorder %v218, 0
      %v359 = vsub.s32 0, %v218
      %v360 = vsel %vm358, %v359, %v218
      %v361 = vshrl.u32 %v360, 4
      %v362 = vand.u32 %v360, 15
      %v363 = vsub.s32 0, %v362
      %v364 = vsel %vm358, %v363, %v362
      %vm365 = vcmp.lt.s32.totalorder %v219, 0
      %v366 = vsub.s32 0, %v219
      %v367 = vsel %vm365, %v366, %v219
      %v368 = vshrl.u32 %v367, 4
      %v369 = vand.u32 %v367, 15
      %v370 = vsub.s32 0, %v369
      %v371 = vsel %vm365, %v370, %v369
      %vm372 = vcmp.lt.s32.totalorder %v220, 0
      %v373 = vsub.s32 0, %v220
      %v374 = vsel %vm372, %v373, %v220
      %v375 = vshrl.u32 %v374, 4
      %v376 = vand.u32 %v374, 15
      %v377 = vsub.s32 0, %v376
      %v378 = vsel %vm372, %v377, %v376
      %vm379 = vcmp.lt.s32.totalorder %v221, 0
      %v380 = vsub.s32 0, %v221
      %v381 = vsel %vm379, %v380, %v221
      %v382 = vshrl.u32 %v381, 4
      %v383 = vand.u32 %v381, 15
      %v384 = vsub.s32 0, %v383
      %v385 = vsel %vm379, %v384, %v383
      %vm386 = vcmp.lt.s32.totalorder %v222, 0
      %v387 = vsub.s32 0, %v222
      %v388 = vsel %vm386, %v387, %v222
      %v389 = vshrl.u32 %v388, 4
      %v390 = vand.u32 %v388, 15
      %v391 = vsub.s32 0, %v390
      %v392 = vsel %vm386, %v391, %v390
      %vm393 = vcmp.lt.s32.totalorder %v223, 0
      %v394 = vsub.s32 0, %v223
      %v395 = vsel %vm393, %v394, %v223
      %v396 = vshrl.u32 %v395, 4
      %v397 = vand.u32 %v395, 15
      %v398 = vsub.s32 0, %v397
      %v399 = vsel %vm393, %v398, %v397
      %vm400 = vcmp.lt.s32.totalorder %v224, 0
      %v401 = vsub.s32 0, %v224
      %v402 = vsel %vm400, %v401, %v224
      %v403 = vshrl.u32 %v402, 4
      %v404 = vand.u32 %v402, 15
      %v405 = vsub.s32 0, %v404
      %v406 = vsel %vm400, %v405, %v404
      %vm407 = vcmp.lt.s32.totalorder %v225, 0
      %v408 = vsub.s32 0, %v225
      %v409 = vsel %vm407, %v408, %v225
      %v410 = vshrl.u32 %v409, 4
      %v411 = vand.u32 %v409, 15
      %v412 = vsub.s32 0, %v411
      %v413 = vsel %vm407, %v412, %v411
      %vm414 = vcmp.lt.s32.totalorder %v226, 0
      %v415 = vsub.s32 0, %v226
      %v416 = vsel %vm414, %v415, %v226
      %v417 = vshrl.u32 %v416, 4
      %v418 = vand.u32 %v416, 15
      %v419 = vsub.s32 0, %v418
      %v420 = vsel %vm414, %v419, %v418
      %vm421 = vcmp.lt.s32.totalorder %v227, 0
      %v422 = vsub.s32 0, %v227
      %v423 = vsel %vm421, %v422, %v227
      %v424 = vshrl.u32 %v423, 4
      %v425 = vand.u32 %v423, 15
      %v426 = vsub.s32 0, %v425
      %v427 = vsel %vm421, %v426, %v425
      %vm428 = vcmp.lt.s32.totalorder %v228, 0
      %v429 = vsub.s32 0, %v228
      %v430 = vsel %vm428, %v429, %v228
      %v431 = vshrl.u32 %v430, 4
      %v432 = vand.u32 %v430, 15
      %v433 = vsub.s32 0, %v432
      %v434 = vsel %vm428, %v433, %v432
      %vm435 = vcmp.lt.s32.totalorder %v229, 0
      %v436 = vsub.s32 0, %v229
      %v437 = vsel %vm435, %v436, %v229
      %v438 = vshrl.u32 %v437, 4
      %v439 = vand.u32 %v437, 15
      %v440 = vsub.s32 0, %v439
      %v441 = vsel %vm435, %v440, %v439
      %vm442 = vcmp.lt.s32.totalorder %v230, 0
      %v443 = vsub.s32 0, %v230
      %v444 = vsel %vm442, %v443, %v230
      %v445 = vshrl.u32 %v444, 4
      %v446 = vand.u32 %v444, 15
      %v447 = vsub.s32 0, %v446
      %v448 = vsel %vm442, %v447, %v446
      %vm449 = vcmp.lt.s32.totalorder %v231, 0
      %v450 = vsub.s32 0, %v231
      %v451 = vsel %vm449, %v450, %v231
      %v452 = vshrl.u32 %v451, 4
      %v453 = vand.u32 %v451, 15
      %v454 = vsub.s32 0, %v453
      %v455 = vsel %vm449, %v454, %v453
      %vm456 = vcmp.ne.s32.totalorder %v238, 0
      %vm457 = vcmp.ne.s32.totalorder %v245, 0
      %vm458 = vcmp.ne.s32.totalorder %v252, 0
      %vm459 = vcmp.ne.s32.totalorder %v259, 0
      %vm460 = vcmp.ne.s32.totalorder %v266, 0
      %vm461 = vcmp.ne.s32.totalorder %v273, 0
      %vm462 = vcmp.ne.s32.totalorder %v280, 0
      %vm463 = vcmp.ne.s32.totalorder %v287, 0
      %vm464 = vcmp.ne.s32.totalorder %v294, 0
      %vm465 = vcmp.ne.s32.totalorder %v301, 0
      %vm466 = vcmp.ne.s32.totalorder %v308, 0
      %vm467 = vcmp.ne.s32.totalorder %v315, 0
      %vm468 = vcmp.ne.s32.totalorder %v322, 0
      %vm469 = vcmp.ne.s32.totalorder %v329, 0
      %vm470 = vcmp.ne.s32.totalorder %v336, 0
      %vm471 = vcmp.ne.s32.totalorder %v343, 0
      %vm472 = vcmp.ne.s32.totalorder %v350, 0
      %vm473 = vcmp.ne.s32.totalorder %v357, 0
      %vm474 = vcmp.ne.s32.totalorder %v364, 0
      %vm475 = vcmp.ne.s32.totalorder %v371, 0
      %vm476 = vcmp.ne.s32.totalorder %v378, 0
      %vm477 = vcmp.ne.s32.totalorder %v385, 0
      %vm478 = vcmp.ne.s32.totalorder %v392, 0
      %vm479 = vcmp.ne.s32.totalorder %v399, 0
      %vm480 = vcmp.ne.s32.totalorder %v406, 0
      %vm481 = vcmp.ne.s32.totalorder %v413, 0
      %vm482 = vcmp.ne.s32.totalorder %v420, 0
      %vm483 = vcmp.ne.s32.totalorder %v427, 0
      %vm484 = vcmp.ne.s32.totalorder %v434, 0
      %vm485 = vcmp.ne.s32.totalorder %v441, 0
      %vm486 = vcmp.ne.s32.totalorder %v448, 0
      %vm487 = vcmp.ne.s32.totalorder %v455, 0
      %vm488 = vcmp.lt.s32.totalorder %v238, 0
      %vm489 = vcmp.lt.s32.totalorder %v245, 0
      %vm490 = vcmp.lt.s32.totalorder %v252, 0
      %vm491 = vcmp.lt.s32.totalorder %v259, 0
      %vm492 = vcmp.lt.s32.totalorder %v266, 0
      %vm493 = vcmp.lt.s32.totalorder %v273, 0
      %vm494 = vcmp.lt.s32.totalorder %v280, 0
      %vm495 = vcmp.lt.s32.totalorder %v287, 0
      %vm496 = vcmp.lt.s32.totalorder %v294, 0
      %vm497 = vcmp.lt.s32.totalorder %v301, 0
      %vm498 = vcmp.lt.s32.totalorder %v308, 0
      %vm499 = vcmp.lt.s32.totalorder %v315, 0
      %vm500 = vcmp.lt.s32.totalorder %v322, 0
      %vm501 = vcmp.lt.s32.totalorder %v329, 0
      %vm502 = vcmp.lt.s32.totalorder %v336, 0
      %vm503 = vcmp.lt.s32.totalorder %v343, 0
      %vm504 = vcmp.lt.s32.totalorder %v350, 0
      %vm505 = vcmp.lt.s32.totalorder %v357, 0
      %vm506 = vcmp.lt.s32.totalorder %v364, 0
      %vm507 = vcmp.lt.s32.totalorder %v371, 0
      %vm508 = vcmp.lt.s32.totalorder %v378, 0
      %vm509 = vcmp.lt.s32.totalorder %v385, 0
      %vm510 = vcmp.lt.s32.totalorder %v392, 0
      %vm511 = vcmp.lt.s32.totalorder %v399, 0
      %vm512 = vcmp.lt.s32.totalorder %v406, 0
      %vm513 = vcmp.lt.s32.totalorder %v413, 0
      %vm514 = vcmp.lt.s32.totalorder %v420, 0
      %vm515 = vcmp.lt.s32.totalorder %v427, 0
      %vm516 = vcmp.lt.s32.totalorder %v434, 0
      %vm517 = vcmp.lt.s32.totalorder %v441, 0
      %vm518 = vcmp.lt.s32.totalorder %v448, 0
      %vm519 = vcmp.lt.s32.totalorder %v455, 0
      %vm520 = vmand %vm488, %vm456
      %vm521 = vmand %vm489, %vm457
      %vm522 = vmand %vm490, %vm458
      %vm523 = vmand %vm491, %vm459
      %vm524 = vmand %vm492, %vm460
      %vm525 = vmand %vm493, %vm461
      %vm526 = vmand %vm494, %vm462
      %vm527 = vmand %vm495, %vm463
      %vm528 = vmand %vm496, %vm464
      %vm529 = vmand %vm497, %vm465
      %vm530 = vmand %vm498, %vm466
      %vm531 = vmand %vm499, %vm467
      %vm532 = vmand %vm500, %vm468
      %vm533 = vmand %vm501, %vm469
      %vm534 = vmand %vm502, %vm470
      %vm535 = vmand %vm503, %vm471
      %vm536 = vmand %vm504, %vm472
      %vm537 = vmand %vm505, %vm473
      %vm538 = vmand %vm506, %vm474
      %vm539 = vmand %vm507, %vm475
      %vm540 = vmand %vm508, %vm476
      %vm541 = vmand %vm509, %vm477
      %vm542 = vmand %vm510, %vm478
      %vm543 = vmand %vm511, %vm479
      %vm544 = vmand %vm512, %vm480
      %vm545 = vmand %vm513, %vm481
      %vm546 = vmand %vm514, %vm482
      %vm547 = vmand %vm515, %vm483
      %vm548 = vmand %vm516, %vm484
      %vm549 = vmand %vm517, %vm485
      %vm550 = vmand %vm518, %vm486
      %vm551 = vmand %vm519, %vm487
      %v552 = vadd.s32 %v238, 16
      %v553 = vadd.s32 %v245, 16
      %v554 = vadd.s32 %v252, 16
      %v555 = vadd.s32 %v259, 16
      %v556 = vadd.s32 %v266, 16
      %v557 = vadd.s32 %v273, 16
      %v558 = vadd.s32 %v280, 16
      %v559 = vadd.s32 %v287, 16
      %v560 = vadd.s32 %v294, 16
      %v561 = vadd.s32 %v301, 16
      %v562 = vadd.s32 %v308, 16
      %v563 = vadd.s32 %v315, 16
      %v564 = vadd.s32 %v322, 16
      %v565 = vadd.s32 %v329, 16
      %v566 = vadd.s32 %v336, 16
      %v567 = vadd.s32 %v343, 16
      %v568 = vadd.s32 %v350, 16
      %v569 = vadd.s32 %v357, 16
      %v570 = vadd.s32 %v364, 16
      %v571 = vadd.s32 %v371, 16
      %v572 = vadd.s32 %v378, 16
      %v573 = vadd.s32 %v385, 16
      %v574 = vadd.s32 %v392, 16
      %v575 = vadd.s32 %v399, 16
      %v576 = vadd.s32 %v406, 16
      %v577 = vadd.s32 %v413, 16
      %v578 = vadd.s32 %v420, 16
      %v579 = vadd.s32 %v427, 16
      %v580 = vadd.s32 %v434, 16
      %v581 = vadd.s32 %v441, 16
      %v582 = vadd.s32 %v448, 16
      %v583 = vadd.s32 %v455, 16
      %v584 = vsel %vm520, %v552, %v238
      %v585 = vsel %vm521, %v553, %v245
      %v586 = vsel %vm522, %v554, %v252
      %v587 = vsel %vm523, %v555, %v259
      %v588 = vsel %vm524, %v556, %v266
      %v589 = vsel %vm525, %v557, %v273
      %v590 = vsel %vm526, %v558, %v280
      %v591 = vsel %vm527, %v559, %v287
      %v592 = vsel %vm528, %v560, %v294
      %v593 = vsel %vm529, %v561, %v301
      %v594 = vsel %vm530, %v562, %v308
      %v595 = vsel %vm531, %v563, %v315
      %v596 = vsel %vm532, %v564, %v322
      %v597 = vsel %vm533, %v565, %v329
      %v598 = vsel %vm534, %v566, %v336
      %v599 = vsel %vm535, %v567, %v343
      %v600 = vsel %vm536, %v568, %v350
      %v601 = vsel %vm537, %v569, %v357
      %v602 = vsel %vm538, %v570, %v364
      %v603 = vsel %vm539, %v571, %v371
      %v604 = vsel %vm540, %v572, %v378
      %v605 = vsel %vm541, %v573, %v385
      %v606 = vsel %vm542, %v574, %v392
      %v607 = vsel %vm543, %v575, %v399
      %v608 = vsel %vm544, %v576, %v406
      %v609 = vsel %vm545, %v577, %v413
      %v610 = vsel %vm546, %v578, %v420
      %v611 = vsel %vm547, %v579, %v427
      %v612 = vsel %vm548, %v580, %v434
      %v613 = vsel %vm549, %v581, %v441
      %v614 = vsel %vm550, %v582, %v448
      %v615 = vsel %vm551, %v583, %v455
      %vm616 = vcmp.ne.s32.totalorder %v584, 0
      %vm617 = vcmp.ne.s32.totalorder %v585, 0
      %vm618 = vcmp.ne.s32.totalorder %v586, 0
      %vm619 = vcmp.ne.s32.totalorder %v587, 0
      %vm620 = vcmp.ne.s32.totalorder %v588, 0
      %vm621 = vcmp.ne.s32.totalorder %v589, 0
      %vm622 = vcmp.ne.s32.totalorder %v590, 0
      %vm623 = vcmp.ne.s32.totalorder %v591, 0
      %vm624 = vcmp.ne.s32.totalorder %v592, 0
      %vm625 = vcmp.ne.s32.totalorder %v593, 0
      %vm626 = vcmp.ne.s32.totalorder %v594, 0
      %vm627 = vcmp.ne.s32.totalorder %v595, 0
      %vm628 = vcmp.ne.s32.totalorder %v596, 0
      %vm629 = vcmp.ne.s32.totalorder %v597, 0
      %vm630 = vcmp.ne.s32.totalorder %v598, 0
      %vm631 = vcmp.ne.s32.totalorder %v599, 0
      %vm632 = vcmp.ne.s32.totalorder %v600, 0
      %vm633 = vcmp.ne.s32.totalorder %v601, 0
      %vm634 = vcmp.ne.s32.totalorder %v602, 0
      %vm635 = vcmp.ne.s32.totalorder %v603, 0
      %vm636 = vcmp.ne.s32.totalorder %v604, 0
      %vm637 = vcmp.ne.s32.totalorder %v605, 0
      %vm638 = vcmp.ne.s32.totalorder %v606, 0
      %vm639 = vcmp.ne.s32.totalorder %v607, 0
      %vm640 = vcmp.ne.s32.totalorder %v608, 0
      %vm641 = vcmp.ne.s32.totalorder %v609, 0
      %vm642 = vcmp.ne.s32.totalorder %v610, 0
      %vm643 = vcmp.ne.s32.totalorder %v611, 0
      %vm644 = vcmp.ne.s32.totalorder %v612, 0
      %vm645 = vcmp.ne.s32.totalorder %v613, 0
      %vm646 = vcmp.ne.s32.totalorder %v614, 0
      %vm647 = vcmp.ne.s32.totalorder %v615, 0
      %vm648 = vcmp.ne.s32.totalorder %v584, 15
      %vm649 = vcmp.ne.s32.totalorder %v585, 15
      %vm650 = vcmp.ne.s32.totalorder %v586, 15
      %vm651 = vcmp.ne.s32.totalorder %v587, 15
      %vm652 = vcmp.ne.s32.totalorder %v588, 15
      %vm653 = vcmp.ne.s32.totalorder %v589, 15
      %vm654 = vcmp.ne.s32.totalorder %v590, 15
      %vm655 = vcmp.ne.s32.totalorder %v591, 15
      %vm656 = vcmp.ne.s32.totalorder %v592, 15
      %vm657 = vcmp.ne.s32.totalorder %v593, 15
      %vm658 = vcmp.ne.s32.totalorder %v594, 15
      %vm659 = vcmp.ne.s32.totalorder %v595, 15
      %vm660 = vcmp.ne.s32.totalorder %v596, 15
      %vm661 = vcmp.ne.s32.totalorder %v597, 15
      %vm662 = vcmp.ne.s32.totalorder %v598, 15
      %vm663 = vcmp.ne.s32.totalorder %v599, 15
      %vm664 = vcmp.ne.s32.totalorder %v600, 15
      %vm665 = vcmp.ne.s32.totalorder %v601, 15
      %vm666 = vcmp.ne.s32.totalorder %v602, 15
      %vm667 = vcmp.ne.s32.totalorder %v603, 15
      %vm668 = vcmp.ne.s32.totalorder %v604, 15
      %vm669 = vcmp.ne.s32.totalorder %v605, 15
      %vm670 = vcmp.ne.s32.totalorder %v606, 15
      %vm671 = vcmp.ne.s32.totalorder %v607, 15
      %vm672 = vcmp.ne.s32.totalorder %v608, 15
      %vm673 = vcmp.ne.s32.totalorder %v609, 15
      %vm674 = vcmp.ne.s32.totalorder %v610, 15
      %vm675 = vcmp.ne.s32.totalorder %v611, 15
      %vm676 = vcmp.ne.s32.totalorder %v612, 15
      %vm677 = vcmp.ne.s32.totalorder %v613, 15
      %vm678 = vcmp.ne.s32.totalorder %v614, 15
      %vm679 = vcmp.ne.s32.totalorder %v615, 15
      %v680 = vld [vmem:[%s3] sm:$0x1]
      %v681 = vld [vmem:[%s3 + $0x1] sm:$0x1]
      %v682 = vld [vmem:[%s192] sm:$0xff]
      %v683 = vld [vmem:[%s192 + $0x8] sm:$0xff]
      %v684 = vld [vmem:[%s192 + $0x10] sm:$0xff]
      %v685 = vld [vmem:[%s192 + $0x18] sm:$0xff]
      %v686 = vld [vmem:[%s192 + $0x20] sm:$0xff]
      %v687 = vld [vmem:[%s192 + $0x28] sm:$0xff]
      %v688 = vld [vmem:[%s192 + $0x30] sm:$0xff]
      %v689 = vld [vmem:[%s192 + $0x38] sm:$0xff]
      %v690 = vld [vmem:[%s192 + $0x40] sm:$0xff]
      %v691 = vld [vmem:[%s192 + $0x48] sm:$0xff]
      %v692 = vld [vmem:[%s192 + $0x50] sm:$0xff]
      %v693 = vld [vmem:[%s192 + $0x58] sm:$0xff]
      %v694 = vld [vmem:[%s192 + $0x60] sm:$0xff]
      %v695 = vld [vmem:[%s192 + $0x68] sm:$0xff]
      %v696 = vld [vmem:[%s192 + $0x70] sm:$0xff]
      %v697 = vld [vmem:[%s192 + $0x78] sm:$0xff]
      %v698 = vld [vmem:[%s192 + $0x80] sm:$0xff]
      %v699 = vld [vmem:[%s192 + $0x88] sm:$0xff]
      %v700 = vld [vmem:[%s192 + $0x90] sm:$0xff]
      %v701 = vld [vmem:[%s192 + $0x98] sm:$0xff]
      %v702 = vld [vmem:[%s192 + $0xa0] sm:$0xff]
      %v703 = vld [vmem:[%s192 + $0xa8] sm:$0xff]
      %v704 = vld [vmem:[%s192 + $0xb0] sm:$0xff]
      %v705 = vld [vmem:[%s192 + $0xb8] sm:$0xff]
      %v706 = vld [vmem:[%s192 + $0xc0] sm:$0xff]
      %v707 = vld [vmem:[%s192 + $0xc8] sm:$0xff]
      %v708 = vld [vmem:[%s192 + $0xd0] sm:$0xff]
      %v709 = vld [vmem:[%s192 + $0xd8] sm:$0xff]
      %v710 = vld [vmem:[%s192 + $0xe0] sm:$0xff]
      %v711 = vld [vmem:[%s192 + $0xe8] sm:$0xff]
      %v712 = vld [vmem:[%s192 + $0xf0] sm:$0xff]
      %v713 = vld [vmem:[%s192 + $0xf8] sm:$0xff]
      %746 = vrot.lane.b32.xlu0 %v682, 4
      %v747 = vpop.permute.xlu0 %746
      %748 = vrot.lane.b32.xlu0 %v683, 4
      %v749 = vpop.permute.xlu0 %748
      %750 = vrot.lane.b32.xlu0 %v684, 4
      %v751 = vpop.permute.xlu0 %750
      %752 = vrot.lane.b32.xlu0 %v685, 4
      %v753 = vpop.permute.xlu0 %752
      %754 = vrot.lane.b32.xlu0 %v686, 4
      %v755 = vpop.permute.xlu0 %754
      %756 = vrot.lane.b32.xlu0 %v687, 4
      %v757 = vpop.permute.xlu0 %756
      %758 = vrot.lane.b32.xlu0 %v688, 4
      %v759 = vpop.permute.xlu0 %758
      %760 = vrot.lane.b32.xlu0 %v689, 4
      %v761 = vpop.permute.xlu0 %760
      %762 = vrot.lane.b32.xlu0 %v690, 4
      %v763 = vpop.permute.xlu0 %762
      %764 = vrot.lane.b32.xlu0 %v691, 4
      %v765 = vpop.permute.xlu0 %764
      %766 = vrot.lane.b32.xlu0 %v692, 4
      %v767 = vpop.permute.xlu0 %766
      %768 = vrot.lane.b32.xlu0 %v693, 4
      %v769 = vpop.permute.xlu0 %768
      %770 = vrot.lane.b32.xlu0 %v694, 4
      %v771 = vpop.permute.xlu0 %770
      %772 = vrot.lane.b32.xlu0 %v695, 4
      %v773 = vpop.permute.xlu0 %772
      %774 = vrot.lane.b32.xlu0 %v696, 4
      %v775 = vpop.permute.xlu0 %774
      %776 = vrot.lane.b32.xlu0 %v697, 4
      %v777 = vpop.permute.xlu0 %776
      %778 = vrot.lane.b32.xlu0 %v698, 4
      %v779 = vpop.permute.xlu0 %778
      %780 = vrot.lane.b32.xlu0 %v699, 4
      %v781 = vpop.permute.xlu0 %780
      %782 = vrot.lane.b32.xlu0 %v700, 4
      %v783 = vpop.permute.xlu0 %782
      %784 = vrot.lane.b32.xlu0 %v701, 4
      %v785 = vpop.permute.xlu0 %784
      %786 = vrot.lane.b32.xlu0 %v702, 4
      %v787 = vpop.permute.xlu0 %786
      %788 = vrot.lane.b32.xlu0 %v703, 4
      %v789 = vpop.permute.xlu0 %788
      %790 = vrot.lane.b32.xlu0 %v704, 4
      %v791 = vpop.permute.xlu0 %790
      %792 = vrot.lane.b32.xlu0 %v705, 4
      %v793 = vpop.permute.xlu0 %792
      %794 = vrot.lane.b32.xlu0 %v706, 4
      %v795 = vpop.permute.xlu0 %794
      %796 = vrot.lane.b32.xlu0 %v707, 4
      %v797 = vpop.permute.xlu0 %796
      %798 = vrot.lane.b32.xlu0 %v708, 4
      %v799 = vpop.permute.xlu0 %798
      %800 = vrot.lane.b32.xlu0 %v709, 4
      %v801 = vpop.permute.xlu0 %800
      %802 = vrot.lane.b32.xlu0 %v710, 4
      %v803 = vpop.permute.xlu0 %802
      %804 = vrot.lane.b32.xlu0 %v711, 4
      %v805 = vpop.permute.xlu0 %804
      %806 = vrot.lane.b32.xlu0 %v712, 4
      %v807 = vpop.permute.xlu0 %806
      %808 = vrot.lane.b32.xlu0 %v713, 4
      %v809 = vpop.permute.xlu0 %808
      %843 = vrot.lane.b32.xlu0 %v684, 8
      %v844 = vpop.permute.xlu0 %843
      %845 = vrot.lane.b32.xlu0 %v685, 8
      %v846 = vpop.permute.xlu0 %845
      %847 = vrot.lane.b32.xlu0 %v686, 8
      %v848 = vpop.permute.xlu0 %847
      %849 = vrot.lane.b32.xlu0 %v687, 8
      %v850 = vpop.permute.xlu0 %849
      %851 = vrot.lane.b32.xlu0 %v688, 8
      %v852 = vpop.permute.xlu0 %851
      %853 = vrot.lane.b32.xlu0 %v689, 8
      %v854 = vpop.permute.xlu0 %853
      %855 = vrot.lane.b32.xlu0 %v690, 8
      %v856 = vpop.permute.xlu0 %855
      %857 = vrot.lane.b32.xlu0 %v691, 8
      %v858 = vpop.permute.xlu0 %857
      %859 = vrot.lane.b32.xlu0 %v692, 8
      %v860 = vpop.permute.xlu0 %859
      %861 = vrot.lane.b32.xlu0 %v693, 8
      %v862 = vpop.permute.xlu0 %861
      %863 = vrot.lane.b32.xlu0 %v694, 8
      %v864 = vpop.permute.xlu0 %863
      %865 = vrot.lane.b32.xlu0 %v695, 8
      %v866 = vpop.permute.xlu0 %865
      %867 = vrot.lane.b32.xlu0 %v696, 8
      %v868 = vpop.permute.xlu0 %867
      %869 = vrot.lane.b32.xlu0 %v697, 8
      %v870 = vpop.permute.xlu0 %869
      %871 = vrot.lane.b32.xlu0 %v698, 8
      %v872 = vpop.permute.xlu0 %871
      %873 = vrot.lane.b32.xlu0 %v699, 8
      %v874 = vpop.permute.xlu0 %873
      %875 = vrot.lane.b32.xlu0 %v700, 8
      %v876 = vpop.permute.xlu0 %875
      %877 = vrot.lane.b32.xlu0 %v701, 8
      %v878 = vpop.permute.xlu0 %877
      %879 = vrot.lane.b32.xlu0 %v702, 8
      %v880 = vpop.permute.xlu0 %879
      %881 = vrot.lane.b32.xlu0 %v703, 8
      %v882 = vpop.permute.xlu0 %881
      %883 = vrot.lane.b32.xlu0 %v704, 8
      %v884 = vpop.permute.xlu0 %883
      %885 = vrot.lane.b32.xlu0 %v705, 8
      %v886 = vpop.permute.xlu0 %885
      %887 = vrot.lane.b32.xlu0 %v706, 8
      %v888 = vpop.permute.xlu0 %887
      %889 = vrot.lane.b32.xlu0 %v707, 8
      %v890 = vpop.permute.xlu0 %889
      %891 = vrot.lane.b32.xlu0 %v708, 8
      %v892 = vpop.permute.xlu0 %891
      %893 = vrot.lane.b32.xlu0 %v709, 8
      %v894 = vpop.permute.xlu0 %893
      %895 = vrot.lane.b32.xlu0 %v710, 8
      %v896 = vpop.permute.xlu0 %895
      %897 = vrot.lane.b32.xlu0 %v711, 8
      %v898 = vpop.permute.xlu0 %897
      %899 = vrot.lane.b32.xlu0 %v712, 8
      %v900 = vpop.permute.xlu0 %899
      %901 = vrot.lane.b32.xlu0 %v713, 8
      %v902 = vpop.permute.xlu0 %901
      %903 = vrot.lane.b32.xlu0 0.0, 8
      %v904 = vpop.permute.xlu0 %903
      %vm936 = vcmask 31744
      %v937 = vsel %vm936, 0.0, %v747
      %v938 = vsel %vm936, 0.0, %v749
      %v939 = vsel %vm936, %v682, %v751
      %v940 = vsel %vm936, %v683, %v753
      %v941 = vsel %vm936, %v684, %v755
      %v942 = vsel %vm936, %v685, %v757
      %v943 = vsel %vm936, %v686, %v759
      %v944 = vsel %vm936, %v687, %v761
      %v945 = vsel %vm936, %v688, %v763
      %v946 = vsel %vm936, %v689, %v765
      %v947 = vsel %vm936, %v690, %v767
      %v948 = vsel %vm936, %v691, %v769
      %v949 = vsel %vm936, %v692, %v771
      %v950 = vsel %vm936, %v693, %v773
      %v951 = vsel %vm936, %v694, %v775
      %v952 = vsel %vm936, %v695, %v777
      %v953 = vsel %vm936, %v696, %v779
      %v954 = vsel %vm936, %v697, %v781
      %v955 = vsel %vm936, %v698, %v783
      %v956 = vsel %vm936, %v699, %v785
      %v957 = vsel %vm936, %v700, %v787
      %v958 = vsel %vm936, %v701, %v789
      %v959 = vsel %vm936, %v702, %v791
      %v960 = vsel %vm936, %v703, %v793
      %v961 = vsel %vm936, %v704, %v795
      %v962 = vsel %vm936, %v705, %v797
      %v963 = vsel %vm936, %v706, %v799
      %v964 = vsel %vm936, %v707, %v801
      %v965 = vsel %vm936, %v708, %v803
      %v966 = vsel %vm936, %v709, %v805
      %v967 = vsel %vm936, %v710, %v807
      %v968 = vsel %vm936, %v711, %v809
      %vm969 = vcmask 64512
      %v970 = vsel %vm969, %v937, %v844
      %v971 = vsel %vm969, %v938, %v846
      %v972 = vsel %vm969, %v939, %v848
      %v973 = vsel %vm969, %v940, %v850
      %v974 = vsel %vm969, %v941, %v852
      %v975 = vsel %vm969, %v942, %v854
      %v976 = vsel %vm969, %v943, %v856
      %v977 = vsel %vm969, %v944, %v858
      %v978 = vsel %vm969, %v945, %v860
      %v979 = vsel %vm969, %v946, %v862
      %v980 = vsel %vm969, %v947, %v864
      %v981 = vsel %vm969, %v948, %v866
      %v982 = vsel %vm969, %v949, %v868
      %v983 = vsel %vm969, %v950, %v870
      %v984 = vsel %vm969, %v951, %v872
      %v985 = vsel %vm969, %v952, %v874
      %v986 = vsel %vm969, %v953, %v876
      %v987 = vsel %vm969, %v954, %v878
      %v988 = vsel %vm969, %v955, %v880
      %v989 = vsel %vm969, %v956, %v882
      %v990 = vsel %vm969, %v957, %v884
      %v991 = vsel %vm969, %v958, %v886
      %v992 = vsel %vm969, %v959, %v888
      %v993 = vsel %vm969, %v960, %v890
      %v994 = vsel %vm969, %v961, %v892
      %v995 = vsel %vm969, %v962, %v894
      %v996 = vsel %vm969, %v963, %v896
      %v997 = vsel %vm969, %v964, %v898
      %v998 = vsel %vm969, %v965, %v900
      %v999 = vsel %vm969, %v966, %v902
      %v1000 = vsel %vm969, %v967, %v904
      %v1001 = vsel %vm969, %v968, %v904
      %vm1002 = vcmask 97280
      %1003 = vst.msk [vmem:[#allocation2 + $0x8] sm:$0xff] %vm1002, %v970
      %1004 = vst.msk [vmem:[#allocation2 + $0x10] sm:$0xff] %vm1002, %v971
      %1005 = vst.msk [vmem:[#allocation2 + $0x18] sm:$0xff] %vm1002, %v972
      %1006 = vst.msk [vmem:[#allocation2 + $0x20] sm:$0xff] %vm1002, %v973
      %1007 = vst.msk [vmem:[#allocation2 + $0x28] sm:$0xff] %vm1002, %v974
      %1008 = vst.msk [vmem:[#allocation2 + $0x30] sm:$0xff] %vm1002, %v975
      %1009 = vst.msk [vmem:[#allocation2 + $0x38] sm:$0xff] %vm1002, %v976
      %1010 = vst.msk [vmem:[#allocation2 + $0x40] sm:$0xff] %vm1002, %v977
      %1011 = vst.msk [vmem:[#allocation2 + $0x48] sm:$0xff] %vm1002, %v978
      %1012 = vst.msk [vmem:[#allocation2 + $0x50] sm:$0xff] %vm1002, %v979
      %1013 = vst.msk [vmem:[#allocation2 + $0x58] sm:$0xff] %vm1002, %v980
      %1014 = vst.msk [vmem:[#allocation2 + $0x60] sm:$0xff] %vm1002, %v981
      %1015 = vst.msk [vmem:[#allocation2 + $0x68] sm:$0xff] %vm1002, %v982
      %1016 = vst.msk [vmem:[#allocation2 + $0x70] sm:$0xff] %vm1002, %v983
      %1017 = vst.msk [vmem:[#allocation2 + $0x78] sm:$0xff] %vm1002, %v984
      %1018 = vst.msk [vmem:[#allocation2 + $0x80] sm:$0xff] %vm1002, %v985
      %1019 = vst.msk [vmem:[#allocation2 + $0x88] sm:$0xff] %vm1002, %v986
      %1020 = vst.msk [vmem:[#allocation2 + $0x90] sm:$0xff] %vm1002, %v987
      %1021 = vst.msk [vmem:[#allocation2 + $0x98] sm:$0xff] %vm1002, %v988
      %1022 = vst.msk [vmem:[#allocation2 + $0xa0] sm:$0xff] %vm1002, %v989
      %1023 = vst.msk [vmem:[#allocation2 + $0xa8] sm:$0xff] %vm1002, %v990
      %1024 = vst.msk [vmem:[#allocation2 + $0xb0] sm:$0xff] %vm1002, %v991
      %1025 = vst.msk [vmem:[#allocation2 + $0xb8] sm:$0xff] %vm1002, %v992
      %1026 = vst.msk [vmem:[#allocation2 + $0xc0] sm:$0xff] %vm1002, %v993
      %1027 = vst.msk [vmem:[#allocation2 + $0xc8] sm:$0xff] %vm1002, %v994
      %1028 = vst.msk [vmem:[#allocation2 + $0xd0] sm:$0xff] %vm1002, %v995
      %1029 = vst.msk [vmem:[#allocation2 + $0xd8] sm:$0xff] %vm1002, %v996
      %1030 = vst.msk [vmem:[#allocation2 + $0xe0] sm:$0xff] %vm1002, %v997
      %1031 = vst.msk [vmem:[#allocation2 + $0xe8] sm:$0xff] %vm1002, %v998
      %1032 = vst.msk [vmem:[#allocation2 + $0xf0] sm:$0xff] %vm1002, %v999
      %1033 = vst.msk [vmem:[#allocation2 + $0xf8] sm:$0xff] %vm1002, %v1000
      %1034 = vst.msk [vmem:[#allocation2 + $0x100] sm:$0xff] %vm1002, %v1001
      %v1035 = vld [vmem:[#allocation2 + $0x7] sm:$0xff]
      %v1036 = vld [vmem:[#allocation2 + $0xf] sm:$0xff]
      %v1037 = vld [vmem:[#allocation2 + $0x17] sm:$0xff]
      %v1038 = vld [vmem:[#allocation2 + $0x1f] sm:$0xff]
      %v1039 = vld [vmem:[#allocation2 + $0x27] sm:$0xff]
      %v1040 = vld [vmem:[#allocation2 + $0x2f] sm:$0xff]
      %v1041 = vld [vmem:[#allocation2 + $0x37] sm:$0xff]
      %v1042 = vld [vmem:[#allocation2 + $0x3f] sm:$0xff]
      %v1043 = vld [vmem:[#allocation2 + $0x47] sm:$0xff]
      %v1044 = vld [vmem:[#allocation2 + $0x4f] sm:$0xff]
      %v1045 = vld [vmem:[#allocation2 + $0x57] sm:$0xff]
      %v1046 = vld [vmem:[#allocation2 + $0x5f] sm:$0xff]
      %v1047 = vld [vmem:[#allocation2 + $0x67] sm:$0xff]
      %v1048 = vld [vmem:[#allocation2 + $0x6f] sm:$0xff]
      %v1049 = vld [vmem:[#allocation2 + $0x77] sm:$0xff]
      %v1050 = vld [vmem:[#allocation2 + $0x7f] sm:$0xff]
      %v1051 = vld [vmem:[#allocation2 + $0x87] sm:$0xff]
      %v1052 = vld [vmem:[#allocation2 + $0x8f] sm:$0xff]
      %v1053 = vld [vmem:[#allocation2 + $0x97] sm:$0xff]
      %v1054 = vld [vmem:[#allocation2 + $0x9f] sm:$0xff]
      %v1055 = vld [vmem:[#allocation2 + $0xa7] sm:$0xff]
      %v1056 = vld [vmem:[#allocation2 + $0xaf] sm:$0xff]
      %v1057 = vld [vmem:[#allocation2 + $0xb7] sm:$0xff]
      %v1058 = vld [vmem:[#allocation2 + $0xbf] sm:$0xff]
      %v1059 = vld [vmem:[#allocation2 + $0xc7] sm:$0xff]
      %v1060 = vld [vmem:[#allocation2 + $0xcf] sm:$0xff]
      %v1061 = vld [vmem:[#allocation2 + $0xd7] sm:$0xff]
      %v1062 = vld [vmem:[#allocation2 + $0xdf] sm:$0xff]
      %v1063 = vld [vmem:[#allocation2 + $0xe7] sm:$0xff]
      %v1064 = vld [vmem:[#allocation2 + $0xef] sm:$0xff]
      %v1065 = vld [vmem:[#allocation2 + $0xf7] sm:$0xff]
      %v1066 = vld [vmem:[#allocation2 + $0xff] sm:$0xff]
      %v1067 = vsel %vm616, 1, 0
      %v1068 = vsel %vm617, 1, 0
      %v1069 = vsel %vm618, 1, 0
      %v1070 = vsel %vm619, 1, 0
      %v1071 = vsel %vm620, 1, 0
      %v1072 = vsel %vm621, 1, 0
      %v1073 = vsel %vm622, 1, 0
      %v1074 = vsel %vm623, 1, 0
      %v1075 = vsel %vm624, 1, 0
      %v1076 = vsel %vm625, 1, 0
      %v1077 = vsel %vm626, 1, 0
      %v1078 = vsel %vm627, 1, 0
      %v1079 = vsel %vm628, 1, 0
      %v1080 = vsel %vm629, 1, 0
      %v1081 = vsel %vm630, 1, 0
      %v1082 = vsel %vm631, 1, 0
      %v1083 = vsel %vm632, 1, 0
      %v1084 = vsel %vm633, 1, 0
      %v1085 = vsel %vm634, 1, 0
      %v1086 = vsel %vm635, 1, 0
      %v1087 = vsel %vm636, 1, 0
      %v1088 = vsel %vm637, 1, 0
      %v1089 = vsel %vm638, 1, 0
      %v1090 = vsel %vm639, 1, 0
      %v1091 = vsel %vm640, 1, 0
      %v1092 = vsel %vm641, 1, 0
      %v1093 = vsel %vm642, 1, 0
      %v1094 = vsel %vm643, 1, 0
      %v1095 = vsel %vm644, 1, 0
      %v1096 = vsel %vm645, 1, 0
      %v1097 = vsel %vm646, 1, 0
      %v1098 = vsel %vm647, 1, 0
      %vm1099 = vcmp.eq.s32.totalorder %v1067, 1
      %vm1100 = vcmp.eq.s32.totalorder %v1068, 1
      %vm1101 = vcmp.eq.s32.totalorder %v1069, 1
      %vm1102 = vcmp.eq.s32.totalorder %v1070, 1
      %vm1103 = vcmp.eq.s32.totalorder %v1071, 1
      %vm1104 = vcmp.eq.s32.totalorder %v1072, 1
      %vm1105 = vcmp.eq.s32.totalorder %v1073, 1
      %vm1106 = vcmp.eq.s32.totalorder %v1074, 1
      %vm1107 = vcmp.eq.s32.totalorder %v1075, 1
      %vm1108 = vcmp.eq.s32.totalorder %v1076, 1
      %vm1109 = vcmp.eq.s32.totalorder %v1077, 1
      %vm1110 = vcmp.eq.s32.totalorder %v1078, 1
      %vm1111 = vcmp.eq.s32.totalorder %v1079, 1
      %vm1112 = vcmp.eq.s32.totalorder %v1080, 1
      %vm1113 = vcmp.eq.s32.totalorder %v1081, 1
      %vm1114 = vcmp.eq.s32.totalorder %v1082, 1
      %vm1115 = vcmp.eq.s32.totalorder %v1083, 1
      %vm1116 = vcmp.eq.s32.totalorder %v1084, 1
      %vm1117 = vcmp.eq.s32.totalorder %v1085, 1
      %vm1118 = vcmp.eq.s32.totalorder %v1086, 1
      %vm1119 = vcmp.eq.s32.totalorder %v1087, 1
      %vm1120 = vcmp.eq.s32.totalorder %v1088, 1
      %vm1121 = vcmp.eq.s32.totalorder %v1089, 1
      %vm1122 = vcmp.eq.s32.totalorder %v1090, 1
      %vm1123 = vcmp.eq.s32.totalorder %v1091, 1
      %vm1124 = vcmp.eq.s32.totalorder %v1092, 1
      %vm1125 = vcmp.eq.s32.totalorder %v1093, 1
      %vm1126 = vcmp.eq.s32.totalorder %v1094, 1
      %vm1127 = vcmp.eq.s32.totalorder %v1095, 1
      %vm1128 = vcmp.eq.s32.totalorder %v1096, 1
      %vm1129 = vcmp.eq.s32.totalorder %v1097, 1
      %vm1130 = vcmp.eq.s32.totalorder %v1098, 1
      %v1131 = vsel %vm1099, %v1035, 0.0
      %v1132 = vsel %vm1100, %v1036, 0.0
      %v1133 = vsel %vm1101, %v1037, 0.0
      %v1134 = vsel %vm1102, %v1038, 0.0
      %v1135 = vsel %vm1103, %v1039, 0.0
      %v1136 = vsel %vm1104, %v1040, 0.0
      %v1137 = vsel %vm1105, %v1041, 0.0
      %v1138 = vsel %vm1106, %v1042, 0.0
      %v1139 = vsel %vm1107, %v1043, 0.0
      %v1140 = vsel %vm1108, %v1044, 0.0
      %v1141 = vsel %vm1109, %v1045, 0.0
      %v1142 = vsel %vm1110, %v1046, 0.0
      %v1143 = vsel %vm1111, %v1047, 0.0
      %v1144 = vsel %vm1112, %v1048, 0.0
      %v1145 = vsel %vm1113, %v1049, 0.0
      %v1146 = vsel %vm1114, %v1050, 0.0
      %v1147 = vsel %vm1115, %v1051, 0.0
      %v1148 = vsel %vm1116, %v1052, 0.0
      %v1149 = vsel %vm1117, %v1053, 0.0
      %v1150 = vsel %vm1118, %v1054, 0.0
      %v1151 = vsel %vm1119, %v1055, 0.0
      %v1152 = vsel %vm1120, %v1056, 0.0
      %v1153 = vsel %vm1121, %v1057, 0.0
      %v1154 = vsel %vm1122, %v1058, 0.0
      %v1155 = vsel %vm1123, %v1059, 0.0
      %v1156 = vsel %vm1124, %v1060, 0.0
      %v1157 = vsel %vm1125, %v1061, 0.0
      %v1158 = vsel %vm1126, %v1062, 0.0
      %v1159 = vsel %vm1127, %v1063, 0.0
      %v1160 = vsel %vm1128, %v1064, 0.0
      %v1161 = vsel %vm1129, %v1065, 0.0
      %v1162 = vsel %vm1130, %v1066, 0.0
      %v1163 = vpack.c.bf16 %v1132, %v1131
      %v1164 = vpack.c.bf16 %v1134, %v1133
      %v1165 = vpack.c.bf16 %v1136, %v1135
      %v1166 = vpack.c.bf16 %v1138, %v1137
      %v1167 = vpack.c.bf16 %v1140, %v1139
      %v1168 = vpack.c.bf16 %v1142, %v1141
      %v1169 = vpack.c.bf16 %v1144, %v1143
      %v1170 = vpack.c.bf16 %v1146, %v1145
      %v1171 = vpack.c.bf16 %v1148, %v1147
      %v1172 = vpack.c.bf16 %v1150, %v1149
      %v1173 = vpack.c.bf16 %v1152, %v1151
      %v1174 = vpack.c.bf16 %v1154, %v1153
      %v1175 = vpack.c.bf16 %v1156, %v1155
      %v1176 = vpack.c.bf16 %v1158, %v1157
      %v1177 = vpack.c.bf16 %v1160, %v1159
      %v1178 = vpack.c.bf16 %v1162, %v1161
      %v1179 = vld [vmem:[%s1] sm:$0xf]
      %v1180 = vld [vmem:[%s1 + $0x4] sm:$0x3]
      %v1181 = vld [vmem:[#allocation2 + $0x8] sm:$0xff]
      %v1182 = vld [vmem:[#allocation2 + $0x10] sm:$0xff]
      %v1183 = vld [vmem:[#allocation2 + $0x18] sm:$0xff]
      %v1184 = vld [vmem:[#allocation2 + $0x20] sm:$0xff]
      %v1185 = vld [vmem:[#allocation2 + $0x28] sm:$0xff]
      %v1186 = vld [vmem:[#allocation2 + $0x30] sm:$0xff]
      %v1187 = vld [vmem:[#allocation2 + $0x38] sm:$0xff]
      %v1188 = vld [vmem:[#allocation2 + $0x40] sm:$0xff]
      %v1189 = vld [vmem:[#allocation2 + $0x48] sm:$0xff]
      %v1190 = vld [vmem:[#allocation2 + $0x50] sm:$0xff]
      %v1191 = vld [vmem:[#allocation2 + $0x58] sm:$0xff]
      %v1192 = vld [vmem:[#allocation2 + $0x60] sm:$0xff]
      %v1193 = vld [vmem:[#allocation2 + $0x68] sm:$0xff]
      %v1194 = vld [vmem:[#allocation2 + $0x70] sm:$0xff]
      %v1195 = vld [vmem:[#allocation2 + $0x78] sm:$0xff]
      %v1196 = vld [vmem:[#allocation2 + $0x80] sm:$0xff]
      %v1197 = vld [vmem:[#allocation2 + $0x88] sm:$0xff]
      %v1198 = vld [vmem:[#allocation2 + $0x90] sm:$0xff]
      %v1199 = vld [vmem:[#allocation2 + $0x98] sm:$0xff]
      %v1200 = vld [vmem:[#allocation2 + $0xa0] sm:$0xff]
      %v1201 = vld [vmem:[#allocation2 + $0xa8] sm:$0xff]
      %v1202 = vld [vmem:[#allocation2 + $0xb0] sm:$0xff]
      %v1203 = vld [vmem:[#allocation2 + $0xb8] sm:$0xff]
      %v1204 = vld [vmem:[#allocation2 + $0xc0] sm:$0xff]
      %v1205 = vld [vmem:[#allocation2 + $0xc8] sm:$0xff]
      %v1206 = vld [vmem:[#allocation2 + $0xd0] sm:$0xff]
      %v1207 = vld [vmem:[#allocation2 + $0xd8] sm:$0xff]
      %v1208 = vld [vmem:[#allocation2 + $0xe0] sm:$0xff]
      %v1209 = vld [vmem:[#allocation2 + $0xe8] sm:$0xff]
      %v1210 = vld [vmem:[#allocation2 + $0xf0] sm:$0xff]
      %v1211 = vld [vmem:[#allocation2 + $0xf8] sm:$0xff]
      %v1212 = vld [vmem:[#allocation2 + $0x100] sm:$0xff]
      %v1213 = vpack.c.bf16 %v1182, %v1181
      %v1214 = vpack.c.bf16 %v1184, %v1183
      %v1215 = vpack.c.bf16 %v1186, %v1185
      %v1216 = vpack.c.bf16 %v1188, %v1187
      %v1217 = vpack.c.bf16 %v1190, %v1189
      %v1218 = vpack.c.bf16 %v1192, %v1191
      %v1219 = vpack.c.bf16 %v1194, %v1193
      %v1220 = vpack.c.bf16 %v1196, %v1195
      %v1221 = vpack.c.bf16 %v1198, %v1197
      %v1222 = vpack.c.bf16 %v1200, %v1199
      %v1223 = vpack.c.bf16 %v1202, %v1201
      %v1224 = vpack.c.bf16 %v1204, %v1203
      %v1225 = vpack.c.bf16 %v1206, %v1205
      %v1226 = vpack.c.bf16 %v1208, %v1207
      %v1227 = vpack.c.bf16 %v1210, %v1209
      %v1228 = vpack.c.bf16 %v1212, %v1211
      %s1229 = scalar_lea.vmem %s1, 8
      %v1230 = vld [vmem:[%s1229] sm:$0xf]
      %v1231 = vld [vmem:[%s1229 + $0x4] sm:$0x3]
      %v1234 = vunpack.c.l.b16 %v1230
      %v1235 = vunpack.c.l.b16 %v1231
      %v1236 = vpack.c.b16 %v1235, %v1234
      %v1238 = vsel %vm1002, %v1213, 0
      %v1241 = vsel %vm1002, %v1214, 0
      %v1244 = vsel %vm1002, %v1215, 0
      %v1247 = vsel %vm1002, %v1216, 0
      %v1250 = vsel %vm1002, %v1217, 0
      %v1253 = vsel %vm1002, %v1218, 0
      %v1256 = vsel %vm1002, %v1219, 0
      %v1259 = vsel %vm1002, %v1220, 0
      %v1262 = vsel %vm1002, %v1221, 0
      %v1265 = vsel %vm1002, %v1222, 0
      %v1268 = vsel %vm1002, %v1223, 0
      %v1271 = vsel %vm1002, %v1224, 0
      %v1274 = vsel %vm1002, %v1225, 0
      %v1277 = vsel %vm1002, %v1226, 0
      %v1280 = vsel %vm1002, %v1227, 0
      %v1283 = vsel %vm1002, %v1228, 0
      %vm1285 = vcmask 1045504
      %v1287 = vsel %vm1285, %v1236, 0
      %1289 = vmatpush.bf16.msra.mxu0 0
      %1290 = vmatpush.bf16.msra.mxu0 0
      %1291 = vmatpush.bf16.msra.mxu0 0
      %1292 = vmatpush.bf16.msra.mxu0 0
      %1293 = vmatpush.bf16.msra.mxu0 0
      %1294 = vmatpush.bf16.msra.mxu0 0
      %1295 = vmatpush.bf16.msra.mxu0 0
      %1296 = vmatpush.bf16.msra.mxu0 %v1287
      %1297 = vmatmul.bf16.gmra.mxu0 %v1238
      %v1298 = vpop.f32.mrf.mxu0
      %v1299 = vadd.f32 0.0, %v1298
      %v1300 = vpop.f32.mrf.mxu0
      %v1301 = vadd.f32 0.0, %v1300
      %1302 = vmatmul.bf16.gmra.mxu0 %v1241
      %v1303 = vpop.f32.mrf.mxu0
      %v1304 = vadd.f32 0.0, %v1303
      %v1305 = vpop.f32.mrf.mxu0
      %v1306 = vadd.f32 0.0, %v1305
      %1307 = vmatmul.bf16.gmra.mxu0 %v1244
      %v1308 = vpop.f32.mrf.mxu0
      %v1309 = vadd.f32 0.0, %v1308
      %v1310 = vpop.f32.mrf.mxu0
      %v1311 = vadd.f32 0.0, %v1310
      %1312 = vmatmul.bf16.gmra.mxu0 %v1247
      %v1313 = vpop.f32.mrf.mxu0
      %v1314 = vadd.f32 0.0, %v1313
      %v1315 = vpop.f32.mrf.mxu0
      %v1316 = vadd.f32 0.0, %v1315
      %1317 = vmatmul.bf16.gmra.mxu0 %v1250
      %v1318 = vpop.f32.mrf.mxu0
      %v1319 = vadd.f32 0.0, %v1318
      %v1320 = vpop.f32.mrf.mxu0
      %v1321 = vadd.f32 0.0, %v1320
      %1322 = vmatmul.bf16.gmra.mxu0 %v1253
      %v1323 = vpop.f32.mrf.mxu0
      %v1324 = vadd.f32 0.0, %v1323
      %v1325 = vpop.f32.mrf.mxu0
      %v1326 = vadd.f32 0.0, %v1325
      %1327 = vmatmul.bf16.gmra.mxu0 %v1256
      %v1328 = vpop.f32.mrf.mxu0
      %v1329 = vadd.f32 0.0, %v1328
      %v1330 = vpop.f32.mrf.mxu0
      %v1331 = vadd.f32 0.0, %v1330
      %1332 = vmatmul.bf16.gmra.mxu0 %v1259
      %v1333 = vpop.f32.mrf.mxu0
      %v1334 = vadd.f32 0.0, %v1333
      %v1335 = vpop.f32.mrf.mxu0
      %v1336 = vadd.f32 0.0, %v1335
      %1337 = vmatmul.bf16.gmra.mxu0 %v1262
      %v1338 = vpop.f32.mrf.mxu0
      %v1339 = vadd.f32 0.0, %v1338
      %v1340 = vpop.f32.mrf.mxu0
      %v1341 = vadd.f32 0.0, %v1340
      %1342 = vmatmul.bf16.gmra.mxu0 %v1265
      %v1343 = vpop.f32.mrf.mxu0
      %v1344 = vadd.f32 0.0, %v1343
      %v1345 = vpop.f32.mrf.mxu0
      %v1346 = vadd.f32 0.0, %v1345
      %1347 = vmatmul.bf16.gmra.mxu0 %v1268
      %v1348 = vpop.f32.mrf.mxu0
      %v1349 = vadd.f32 0.0, %v1348
      %v1350 = vpop.f32.mrf.mxu0
      %v1351 = vadd.f32 0.0, %v1350
      %1352 = vmatmul.bf16.gmra.mxu0 %v1271
      %v1353 = vpop.f32.mrf.mxu0
      %v1354 = vadd.f32 0.0, %v1353
      %v1355 = vpop.f32.mrf.mxu0
      %v1356 = vadd.f32 0.0, %v1355
      %1357 = vmatmul.bf16.gmra.mxu0 %v1274
      %v1358 = vpop.f32.mrf.mxu0
      %v1359 = vadd.f32 0.0, %v1358
      %v1360 = vpop.f32.mrf.mxu0
      %v1361 = vadd.f32 0.0, %v1360
      %1362 = vmatmul.bf16.gmra.mxu0 %v1277
      %v1363 = vpop.f32.mrf.mxu0
      %v1364 = vadd.f32 0.0, %v1363
      %v1365 = vpop.f32.mrf.mxu0
      %v1366 = vadd.f32 0.0, %v1365
      %1367 = vmatmul.bf16.gmra.mxu0 %v1280
      %v1368 = vpop.f32.mrf.mxu0
      %v1369 = vadd.f32 0.0, %v1368
      %v1370 = vpop.f32.mrf.mxu0
      %v1371 = vadd.f32 0.0, %v1370
      %1372 = vmatmul.bf16.gmra.mxu0 %v1283
      %v1373 = vpop.f32.mrf.mxu0
      %v1374 = vadd.f32 0.0, %v1373
      %v1375 = vpop.f32.mrf.mxu0
      %v1376 = vadd.f32 0.0, %v1375
      %1377 = vdwg.mxu0
      %v1380 = vunpack.c.l.b16 %v1179
      %v1381 = vunpack.c.l.b16 %v1180
      %v1382 = vpack.c.b16 %v1381, %v1380
      %v1384 = vsel %vm1002, %v1163, 0
      %v1387 = vsel %vm1002, %v1164, 0
      %v1390 = vsel %vm1002, %v1165, 0
      %v1393 = vsel %vm1002, %v1166, 0
      %v1396 = vsel %vm1002, %v1167, 0
      %v1399 = vsel %vm1002, %v1168, 0
      %v1402 = vsel %vm1002, %v1169, 0
      %v1405 = vsel %vm1002, %v1170, 0
      %v1408 = vsel %vm1002, %v1171, 0
      %v1411 = vsel %vm1002, %v1172, 0
      %v1414 = vsel %vm1002, %v1173, 0
      %v1417 = vsel %vm1002, %v1174, 0
      %v1420 = vsel %vm1002, %v1175, 0
      %v1423 = vsel %vm1002, %v1176, 0
      %v1426 = vsel %vm1002, %v1177, 0
      %v1429 = vsel %vm1002, %v1178, 0
      %v1432 = vsel %vm1285, %v1382, 0
      %1434 = vmatpush.bf16.msra.mxu0 0
      %1435 = vmatpush.bf16.msra.mxu0 0
      %1436 = vmatpush.bf16.msra.mxu0 0
      %1437 = vmatpush.bf16.msra.mxu0 0
      %1438 = vmatpush.bf16.msra.mxu0 0
      %1439 = vmatpush.bf16.msra.mxu0 0
      %1440 = vmatpush.bf16.msra.mxu0 0
      %1441 = vmatpush.bf16.msra.mxu0 %v1432
      %1442 = vmatmul.bf16.gmra.mxu0 %v1384
      %v1443 = vpop.f32.mrf.mxu0
      %v1444 = vadd.f32 %v1299, %v1443
      %v1445 = vpop.f32.mrf.mxu0
      %v1446 = vadd.f32 %v1301, %v1445
      %1447 = vmatmul.bf16.gmra.mxu0 %v1387
      %v1448 = vpop.f32.mrf.mxu0
      %v1449 = vadd.f32 %v1304, %v1448
      %v1450 = vpop.f32.mrf.mxu0
      %v1451 = vadd.f32 %v1306, %v1450
      %1452 = vmatmul.bf16.gmra.mxu0 %v1390
      %v1453 = vpop.f32.mrf.mxu0
      %v1454 = vadd.f32 %v1309, %v1453
      %v1455 = vpop.f32.mrf.mxu0
      %v1456 = vadd.f32 %v1311, %v1455
      %1457 = vmatmul.bf16.gmra.mxu0 %v1393
      %v1458 = vpop.f32.mrf.mxu0
      %v1459 = vadd.f32 %v1314, %v1458
      %v1460 = vpop.f32.mrf.mxu0
      %v1461 = vadd.f32 %v1316, %v1460
      %1462 = vmatmul.bf16.gmra.mxu0 %v1396
      %v1463 = vpop.f32.mrf.mxu0
      %v1464 = vadd.f32 %v1319, %v1463
      %v1465 = vpop.f32.mrf.mxu0
      %v1466 = vadd.f32 %v1321, %v1465
      %1467 = vmatmul.bf16.gmra.mxu0 %v1399
      %v1468 = vpop.f32.mrf.mxu0
      %v1469 = vadd.f32 %v1324, %v1468
      %v1470 = vpop.f32.mrf.mxu0
      %v1471 = vadd.f32 %v1326, %v1470
      %1472 = vmatmul.bf16.gmra.mxu0 %v1402
      %v1473 = vpop.f32.mrf.mxu0
      %v1474 = vadd.f32 %v1329, %v1473
      %v1475 = vpop.f32.mrf.mxu0
      %v1476 = vadd.f32 %v1331, %v1475
      %1477 = vmatmul.bf16.gmra.mxu0 %v1405
      %v1478 = vpop.f32.mrf.mxu0
      %v1479 = vadd.f32 %v1334, %v1478
      %v1480 = vpop.f32.mrf.mxu0
      %v1481 = vadd.f32 %v1336, %v1480
      %1482 = vmatmul.bf16.gmra.mxu0 %v1408
      %v1483 = vpop.f32.mrf.mxu0
      %v1484 = vadd.f32 %v1339, %v1483
      %v1485 = vpop.f32.mrf.mxu0
      %v1486 = vadd.f32 %v1341, %v1485
      %1487 = vmatmul.bf16.gmra.mxu0 %v1411
      %v1488 = vpop.f32.mrf.mxu0
      %v1489 = vadd.f32 %v1344, %v1488
      %v1490 = vpop.f32.mrf.mxu0
      %v1491 = vadd.f32 %v1346, %v1490
      %1492 = vmatmul.bf16.gmra.mxu0 %v1414
      %v1493 = vpop.f32.mrf.mxu0
      %v1494 = vadd.f32 %v1349, %v1493
      %v1495 = vpop.f32.mrf.mxu0
      %v1496 = vadd.f32 %v1351, %v1495
      %1497 = vmatmul.bf16.gmra.mxu0 %v1417
      %v1498 = vpop.f32.mrf.mxu0
      %v1499 = vadd.f32 %v1354, %v1498
      %v1500 = vpop.f32.mrf.mxu0
      %v1501 = vadd.f32 %v1356, %v1500
      %1502 = vmatmul.bf16.gmra.mxu0 %v1420
      %v1503 = vpop.f32.mrf.mxu0
      %v1504 = vadd.f32 %v1359, %v1503
      %v1505 = vpop.f32.mrf.mxu0
      %v1506 = vadd.f32 %v1361, %v1505
      %1507 = vmatmul.bf16.gmra.mxu0 %v1423
      %v1508 = vpop.f32.mrf.mxu0
      %v1509 = vadd.f32 %v1364, %v1508
      %v1510 = vpop.f32.mrf.mxu0
      %v1511 = vadd.f32 %v1366, %v1510
      %1512 = vmatmul.bf16.gmra.mxu0 %v1426
      %v1513 = vpop.f32.mrf.mxu0
      %v1514 = vadd.f32 %v1369, %v1513
      %v1515 = vpop.f32.mrf.mxu0
      %v1516 = vadd.f32 %v1371, %v1515
      %1517 = vmatmul.bf16.gmra.mxu0 %v1429
      %v1518 = vpop.f32.mrf.mxu0
      %v1519 = vadd.f32 %v1374, %v1518
      %v1520 = vpop.f32.mrf.mxu0
      %v1521 = vadd.f32 %v1376, %v1520
      %1522 = vdwg.mxu0
      %v1523 = vld [vmem:[#allocation2 + $0x9] sm:$0xff]
      %v1524 = vld [vmem:[#allocation2 + $0x11] sm:$0xff]
      %v1525 = vld [vmem:[#allocation2 + $0x19] sm:$0xff]
      %v1526 = vld [vmem:[#allocation2 + $0x21] sm:$0xff]
      %v1527 = vld [vmem:[#allocation2 + $0x29] sm:$0xff]
      %v1528 = vld [vmem:[#allocation2 + $0x31] sm:$0xff]
      %v1529 = vld [vmem:[#allocation2 + $0x39] sm:$0xff]
      %v1530 = vld [vmem:[#allocation2 + $0x41] sm:$0xff]
      %v1531 = vld [vmem:[#allocation2 + $0x49] sm:$0xff]
      %v1532 = vld [vmem:[#allocation2 + $0x51] sm:$0xff]
      %v1533 = vld [vmem:[#allocation2 + $0x59] sm:$0xff]
      %v1534 = vld [vmem:[#allocation2 + $0x61] sm:$0xff]
      %v1535 = vld [vmem:[#allocation2 + $0x69] sm:$0xff]
      %v1536 = vld [vmem:[#allocation2 + $0x71] sm:$0xff]
      %v1537 = vld [vmem:[#allocation2 + $0x79] sm:$0xff]
      %v1538 = vld [vmem:[#allocation2 + $0x81] sm:$0xff]
      %v1539 = vld [vmem:[#allocation2 + $0x89] sm:$0xff]
      %v1540 = vld [vmem:[#allocation2 + $0x91] sm:$0xff]
      %v1541 = vld [vmem:[#allocation2 + $0x99] sm:$0xff]
      %v1542 = vld [vmem:[#allocation2 + $0xa1] sm:$0xff]
      %v1543 = vld [vmem:[#allocation2 + $0xa9] sm:$0xff]
      %v1544 = vld [vmem:[#allocation2 + $0xb1] sm:$0xff]
      %v1545 = vld [vmem:[#allocation2 + $0xb9] sm:$0xff]
      %v1546 = vld [vmem:[#allocation2 + $0xc1] sm:$0xff]
      %v1547 = vld [vmem:[#allocation2 + $0xc9] sm:$0xff]
      %v1548 = vld [vmem:[#allocation2 + $0xd1] sm:$0xff]
      %v1549 = vld [vmem:[#allocation2 + $0xd9] sm:$0xff]
      %v1550 = vld [vmem:[#allocation2 + $0xe1] sm:$0xff]
      %v1551 = vld [vmem:[#allocation2 + $0xe9] sm:$0xff]
      %v1552 = vld [vmem:[#allocation2 + $0xf1] sm:$0xff]
      %v1553 = vld [vmem:[#allocation2 + $0xf9] sm:$0xff]
      %v1554 = vld [vmem:[#allocation2 + $0x101] sm:$0xff]
      %v1555 = vsel %vm648, 1, 0
      %v1556 = vsel %vm649, 1, 0
      %v1557 = vsel %vm650, 1, 0
      %v1558 = vsel %vm651, 1, 0
      %v1559 = vsel %vm652, 1, 0
      %v1560 = vsel %vm653, 1, 0
      %v1561 = vsel %vm654, 1, 0
      %v1562 = vsel %vm655, 1, 0
      %v1563 = vsel %vm656, 1, 0
      %v1564 = vsel %vm657, 1, 0
      %v1565 = vsel %vm658, 1, 0
      %v1566 = vsel %vm659, 1, 0
      %v1567 = vsel %vm660, 1, 0
      %v1568 = vsel %vm661, 1, 0
      %v1569 = vsel %vm662, 1, 0
      %v1570 = vsel %vm663, 1, 0
      %v1571 = vsel %vm664, 1, 0
      %v1572 = vsel %vm665, 1, 0
      %v1573 = vsel %vm666, 1, 0
      %v1574 = vsel %vm667, 1, 0
      %v1575 = vsel %vm668, 1, 0
      %v1576 = vsel %vm669, 1, 0
      %v1577 = vsel %vm670, 1, 0
      %v1578 = vsel %vm671, 1, 0
      %v1579 = vsel %vm672, 1, 0
      %v1580 = vsel %vm673, 1, 0
      %v1581 = vsel %vm674, 1, 0
      %v1582 = vsel %vm675, 1, 0
      %v1583 = vsel %vm676, 1, 0
      %v1584 = vsel %vm677, 1, 0
      %v1585 = vsel %vm678, 1, 0
      %v1586 = vsel %vm679, 1, 0
      %vm1587 = vcmp.eq.s32.totalorder %v1555, 1
      %vm1588 = vcmp.eq.s32.totalorder %v1556, 1
      %vm1589 = vcmp.eq.s32.totalorder %v1557, 1
      %vm1590 = vcmp.eq.s32.totalorder %v1558, 1
      %vm1591 = vcmp.eq.s32.totalorder %v1559, 1
      %vm1592 = vcmp.eq.s32.totalorder %v1560, 1
      %vm1593 = vcmp.eq.s32.totalorder %v1561, 1
      %vm1594 = vcmp.eq.s32.totalorder %v1562, 1
      %vm1595 = vcmp.eq.s32.totalorder %v1563, 1
      %vm1596 = vcmp.eq.s32.totalorder %v1564, 1
      %vm1597 = vcmp.eq.s32.totalorder %v1565, 1
      %vm1598 = vcmp.eq.s32.totalorder %v1566, 1
      %vm1599 = vcmp.eq.s32.totalorder %v1567, 1
      %vm1600 = vcmp.eq.s32.totalorder %v1568, 1
      %vm1601 = vcmp.eq.s32.totalorder %v1569, 1
      %vm1602 = vcmp.eq.s32.totalorder %v1570, 1
      %vm1603 = vcmp.eq.s32.totalorder %v1571, 1
      %vm1604 = vcmp.eq.s32.totalorder %v1572, 1
      %vm1605 = vcmp.eq.s32.totalorder %v1573, 1
      %vm1606 = vcmp.eq.s32.totalorder %v1574, 1
      %vm1607 = vcmp.eq.s32.totalorder %v1575, 1
      %vm1608 = vcmp.eq.s32.totalorder %v1576, 1
      %vm1609 = vcmp.eq.s32.totalorder %v1577, 1
      %vm1610 = vcmp.eq.s32.totalorder %v1578, 1
      %vm1611 = vcmp.eq.s32.totalorder %v1579, 1
      %vm1612 = vcmp.eq.s32.totalorder %v1580, 1
      %vm1613 = vcmp.eq.s32.totalorder %v1581, 1
      %vm1614 = vcmp.eq.s32.totalorder %v1582, 1
      %vm1615 = vcmp.eq.s32.totalorder %v1583, 1
      %vm1616 = vcmp.eq.s32.totalorder %v1584, 1
      %vm1617 = vcmp.eq.s32.totalorder %v1585, 1
      %vm1618 = vcmp.eq.s32.totalorder %v1586, 1
      %v1619 = vsel %vm1587, %v1523, 0.0
      %v1620 = vsel %vm1588, %v1524, 0.0
      %v1621 = vsel %vm1589, %v1525, 0.0
      %v1622 = vsel %vm1590, %v1526, 0.0
      %v1623 = vsel %vm1591, %v1527, 0.0
      %v1624 = vsel %vm1592, %v1528, 0.0
      %v1625 = vsel %vm1593, %v1529, 0.0
      %v1626 = vsel %vm1594, %v1530, 0.0
      %v1627 = vsel %vm1595, %v1531, 0.0
      %v1628 = vsel %vm1596, %v1532, 0.0
      %v1629 = vsel %vm1597, %v1533, 0.0
      %v1630 = vsel %vm1598, %v1534, 0.0
      %v1631 = vsel %vm1599, %v1535, 0.0
      %v1632 = vsel %vm1600, %v1536, 0.0
      %v1633 = vsel %vm1601, %v1537, 0.0
      %v1634 = vsel %vm1602, %v1538, 0.0
      %v1635 = vsel %vm1603, %v1539, 0.0
      %v1636 = vsel %vm1604, %v1540, 0.0
      %v1637 = vsel %vm1605, %v1541, 0.0
      %v1638 = vsel %vm1606, %v1542, 0.0
      %v1639 = vsel %vm1607, %v1543, 0.0
      %v1640 = vsel %vm1608, %v1544, 0.0
      %v1641 = vsel %vm1609, %v1545, 0.0
      %v1642 = vsel %vm1610, %v1546, 0.0
      %v1643 = vsel %vm1611, %v1547, 0.0
      %v1644 = vsel %vm1612, %v1548, 0.0
      %v1645 = vsel %vm1613, %v1549, 0.0
      %v1646 = vsel %vm1614, %v1550, 0.0
      %v1647 = vsel %vm1615, %v1551, 0.0
      %v1648 = vsel %vm1616, %v1552, 0.0
      %v1649 = vsel %vm1617, %v1553, 0.0
      %v1650 = vsel %vm1618, %v1554, 0.0
      %v1651 = vpack.c.bf16 %v1620, %v1619
      %v1652 = vpack.c.bf16 %v1622, %v1621
      %v1653 = vpack.c.bf16 %v1624, %v1623
      %v1654 = vpack.c.bf16 %v1626, %v1625
      %v1655 = vpack.c.bf16 %v1628, %v1627
      %v1656 = vpack.c.bf16 %v1630, %v1629
      %v1657 = vpack.c.bf16 %v1632, %v1631
      %v1658 = vpack.c.bf16 %v1634, %v1633
      %v1659 = vpack.c.bf16 %v1636, %v1635
      %v1660 = vpack.c.bf16 %v1638, %v1637
      %v1661 = vpack.c.bf16 %v1640, %v1639
      %v1662 = vpack.c.bf16 %v1642, %v1641
      %v1663 = vpack.c.bf16 %v1644, %v1643
      %v1664 = vpack.c.bf16 %v1646, %v1645
      %v1665 = vpack.c.bf16 %v1648, %v1647
      %v1666 = vpack.c.bf16 %v1650, %v1649
      %s1667 = scalar_lea.vmem %s1, 16
      %v1668 = vld [vmem:[%s1667] sm:$0xf]
      %v1669 = vld [vmem:[%s1667 + $0x4] sm:$0x3]
      %v1672 = vunpack.c.l.b16 %v1668
      %v1673 = vunpack.c.l.b16 %v1669
      %v1674 = vpack.c.b16 %v1673, %v1672
      %v1676 = vsel %vm1002, %v1651, 0
      %v1679 = vsel %vm1002, %v1652, 0
      %v1682 = vsel %vm1002, %v1653, 0
      %v1685 = vsel %vm1002, %v1654, 0
      %v1688 = vsel %vm1002, %v1655, 0
      %v1691 = vsel %vm1002, %v1656, 0
      %v1694 = vsel %vm1002, %v1657, 0
      %v1697 = vsel %vm1002, %v1658, 0
      %v1700 = vsel %vm1002, %v1659, 0
      %v1703 = vsel %vm1002, %v1660, 0
      %v1706 = vsel %vm1002, %v1661, 0
      %v1709 = vsel %vm1002, %v1662, 0
      %v1712 = vsel %vm1002, %v1663, 0
      %v1715 = vsel %vm1002, %v1664, 0
      %v1718 = vsel %vm1002, %v1665, 0
      %v1721 = vsel %vm1002, %v1666, 0
      %v1724 = vsel %vm1285, %v1674, 0
      %1726 = vmatpush.bf16.msra.mxu0 0
      %1727 = vmatpush.bf16.msra.mxu0 0
      %1728 = vmatpush.bf16.msra.mxu0 0
      %1729 = vmatpush.bf16.msra.mxu0 0
      %1730 = vmatpush.bf16.msra.mxu0 0
      %1731 = vmatpush.bf16.msra.mxu0 0
      %1732 = vmatpush.bf16.msra.mxu0 0
      %1733 = vmatpush.bf16.msra.mxu0 %v1724
      %1734 = vmatmul.bf16.gmra.mxu0 %v1676
      %v1735 = vpop.f32.mrf.mxu0
      %v1736 = vadd.f32 0.0, %v1735
      %v1737 = vpop.f32.mrf.mxu0
      %v1738 = vadd.f32 0.0, %v1737
      %1739 = vmatmul.bf16.gmra.mxu0 %v1679
      %v1740 = vpop.f32.mrf.mxu0
      %v1741 = vadd.f32 0.0, %v1740
      %v1742 = vpop.f32.mrf.mxu0
      %v1743 = vadd.f32 0.0, %v1742
      %1744 = vmatmul.bf16.gmra.mxu0 %v1682
      %v1745 = vpop.f32.mrf.mxu0
      %v1746 = vadd.f32 0.0, %v1745
      %v1747 = vpop.f32.mrf.mxu0
      %v1748 = vadd.f32 0.0, %v1747
      %1749 = vmatmul.bf16.gmra.mxu0 %v1685
      %v1750 = vpop.f32.mrf.mxu0
      %v1751 = vadd.f32 0.0, %v1750
      %v1752 = vpop.f32.mrf.mxu0
      %v1753 = vadd.f32 0.0, %v1752
      %1754 = vmatmul.bf16.gmra.mxu0 %v1688
      %v1755 = vpop.f32.mrf.mxu0
      %v1756 = vadd.f32 0.0, %v1755
      %v1757 = vpop.f32.mrf.mxu0
      %v1758 = vadd.f32 0.0, %v1757
      %1759 = vmatmul.bf16.gmra.mxu0 %v1691
      %v1760 = vpop.f32.mrf.mxu0
      %v1761 = vadd.f32 0.0, %v1760
      %v1762 = vpop.f32.mrf.mxu0
      %v1763 = vadd.f32 0.0, %v1762
      %1764 = vmatmul.bf16.gmra.mxu0 %v1694
      %v1765 = vpop.f32.mrf.mxu0
      %v1766 = vadd.f32 0.0, %v1765
      %v1767 = vpop.f32.mrf.mxu0
      %v1768 = vadd.f32 0.0, %v1767
      %1769 = vmatmul.bf16.gmra.mxu0 %v1697
      %v1770 = vpop.f32.mrf.mxu0
      %v1771 = vadd.f32 0.0, %v1770
      %v1772 = vpop.f32.mrf.mxu0
      %v1773 = vadd.f32 0.0, %v1772
      %1774 = vmatmul.bf16.gmra.mxu0 %v1700
      %v1775 = vpop.f32.mrf.mxu0
      %v1776 = vadd.f32 0.0, %v1775
      %v1777 = vpop.f32.mrf.mxu0
      %v1778 = vadd.f32 0.0, %v1777
      %1779 = vmatmul.bf16.gmra.mxu0 %v1703
      %v1780 = vpop.f32.mrf.mxu0
      %v1781 = vadd.f32 0.0, %v1780
      %v1782 = vpop.f32.mrf.mxu0
      %v1783 = vadd.f32 0.0, %v1782
      %1784 = vmatmul.bf16.gmra.mxu0 %v1706
      %v1785 = vpop.f32.mrf.mxu0
      %v1786 = vadd.f32 0.0, %v1785
      %v1787 = vpop.f32.mrf.mxu0
      %v1788 = vadd.f32 0.0, %v1787
      %1789 = vmatmul.bf16.gmra.mxu0 %v1709
      %v1790 = vpop.f32.mrf.mxu0
      %v1791 = vadd.f32 0.0, %v1790
      %v1792 = vpop.f32.mrf.mxu0
      %v1793 = vadd.f32 0.0, %v1792
      %1794 = vmatmul.bf16.gmra.mxu0 %v1712
      %v1795 = vpop.f32.mrf.mxu0
      %v1796 = vadd.f32 0.0, %v1795
      %v1797 = vpop.f32.mrf.mxu0
      %v1798 = vadd.f32 0.0, %v1797
      %1799 = vmatmul.bf16.gmra.mxu0 %v1715
      %v1800 = vpop.f32.mrf.mxu0
      %v1801 = vadd.f32 0.0, %v1800
      %v1802 = vpop.f32.mrf.mxu0
      %v1803 = vadd.f32 0.0, %v1802
      %1804 = vmatmul.bf16.gmra.mxu0 %v1718
      %v1805 = vpop.f32.mrf.mxu0
      %v1806 = vadd.f32 0.0, %v1805
      %v1807 = vpop.f32.mrf.mxu0
      %v1808 = vadd.f32 0.0, %v1807
      %1809 = vmatmul.bf16.gmra.mxu0 %v1721
      %v1810 = vpop.f32.mrf.mxu0
      %v1811 = vadd.f32 0.0, %v1810
      %v1812 = vpop.f32.mrf.mxu0
      %v1813 = vadd.f32 0.0, %v1812
      %1814 = vdwg.mxu0
      %v1815 = vadd.f32 %v1444, %v1736
      %v1816 = vadd.f32 %v1446, %v1738
      %v1817 = vadd.f32 %v1449, %v1741
      %v1818 = vadd.f32 %v1451, %v1743
      %v1819 = vadd.f32 %v1454, %v1746
      %v1820 = vadd.f32 %v1456, %v1748
      %v1821 = vadd.f32 %v1459, %v1751
      %v1822 = vadd.f32 %v1461, %v1753
      %v1823 = vadd.f32 %v1464, %v1756
      %v1824 = vadd.f32 %v1466, %v1758
      %v1825 = vadd.f32 %v1469, %v1761
      %v1826 = vadd.f32 %v1471, %v1763
      %v1827 = vadd.f32 %v1474, %v1766
      %v1828 = vadd.f32 %v1476, %v1768
      %v1829 = vadd.f32 %v1479, %v1771
      %v1830 = vadd.f32 %v1481, %v1773
      %v1831 = vadd.f32 %v1484, %v1776
      %v1832 = vadd.f32 %v1486, %v1778
      %v1833 = vadd.f32 %v1489, %v1781
      %v1834 = vadd.f32 %v1491, %v1783
      %v1835 = vadd.f32 %v1494, %v1786
      %v1836 = vadd.f32 %v1496, %v1788
      %v1837 = vadd.f32 %v1499, %v1791
      %v1838 = vadd.f32 %v1501, %v1793
      %v1839 = vadd.f32 %v1504, %v1796
      %v1840 = vadd.f32 %v1506, %v1798
      %v1841 = vadd.f32 %v1509, %v1801
      %v1842 = vadd.f32 %v1511, %v1803
      %v1843 = vadd.f32 %v1514, %v1806
      %v1844 = vadd.f32 %v1516, %v1808
      %v1845 = vadd.f32 %v1519, %v1811
      %v1846 = vadd.f32 %v1521, %v1813
      %v1847 = vperm.slane %v680, 0
      %v1848 = vadd.f32 %v1815, %v1847
      %v1849 = vadd.f32 %v1816, %v1847
      %v1850 = vadd.f32 %v1817, %v1847
      %v1851 = vadd.f32 %v1818, %v1847
      %v1852 = vadd.f32 %v1819, %v1847
      %v1853 = vadd.f32 %v1820, %v1847
      %v1854 = vadd.f32 %v1821, %v1847
      %v1855 = vadd.f32 %v1822, %v1847
      %v1856 = vadd.f32 %v1823, %v1847
      %v1857 = vadd.f32 %v1824, %v1847
      %v1858 = vadd.f32 %v1825, %v1847
      %v1859 = vadd.f32 %v1826, %v1847
      %v1860 = vadd.f32 %v1827, %v1847
      %v1861 = vadd.f32 %v1828, %v1847
      %v1862 = vadd.f32 %v1829, %v1847
      %v1863 = vadd.f32 %v1830, %v1847
      %v1864 = vadd.f32 %v1831, %v1847
      %v1865 = vadd.f32 %v1832, %v1847
      %v1866 = vadd.f32 %v1833, %v1847
      %v1867 = vadd.f32 %v1834, %v1847
      %v1868 = vadd.f32 %v1835, %v1847
      %v1869 = vadd.f32 %v1836, %v1847
      %v1870 = vadd.f32 %v1837, %v1847
      %v1871 = vadd.f32 %v1838, %v1847
      %v1872 = vadd.f32 %v1839, %v1847
      %v1873 = vadd.f32 %v1840, %v1847
      %v1874 = vadd.f32 %v1841, %v1847
      %v1875 = vadd.f32 %v1842, %v1847
      %v1876 = vadd.f32 %v1843, %v1847
      %v1877 = vadd.f32 %v1844, %v1847
      %v1878 = vadd.f32 %v1845, %v1847
      %v1879 = vadd.f32 %v1846, %v1847
      %v1880 = vmax.f32 %v1848, 0.0
      %v1881 = vmax.f32 %v1849, 0.0
      %v1882 = vmax.f32 %v1850, 0.0
      %v1883 = vmax.f32 %v1851, 0.0
      %v1884 = vmax.f32 %v1852, 0.0
      %v1885 = vmax.f32 %v1853, 0.0
      %v1886 = vmax.f32 %v1854, 0.0
      %v1887 = vmax.f32 %v1855, 0.0
      %v1888 = vmax.f32 %v1856, 0.0
      %v1889 = vmax.f32 %v1857, 0.0
      %v1890 = vmax.f32 %v1858, 0.0
      %v1891 = vmax.f32 %v1859, 0.0
      %v1892 = vmax.f32 %v1860, 0.0
      %v1893 = vmax.f32 %v1861, 0.0
      %v1894 = vmax.f32 %v1862, 0.0
      %v1895 = vmax.f32 %v1863, 0.0
      %v1896 = vmax.f32 %v1864, 0.0
      %v1897 = vmax.f32 %v1865, 0.0
      %v1898 = vmax.f32 %v1866, 0.0
      %v1899 = vmax.f32 %v1867, 0.0
      %v1900 = vmax.f32 %v1868, 0.0
      %v1901 = vmax.f32 %v1869, 0.0
      %v1902 = vmax.f32 %v1870, 0.0
      %v1903 = vmax.f32 %v1871, 0.0
      %v1904 = vmax.f32 %v1872, 0.0
      %v1905 = vmax.f32 %v1873, 0.0
      %v1906 = vmax.f32 %v1874, 0.0
      %v1907 = vmax.f32 %v1875, 0.0
      %v1908 = vmax.f32 %v1876, 0.0
      %v1909 = vmax.f32 %v1877, 0.0
      %v1910 = vmax.f32 %v1878, 0.0
      %v1911 = vmax.f32 %v1879, 0.0
      %1944 = vrot.lane.b32.xlu0 %v1880, 8
      %v1945 = vpop.permute.xlu0 %1944
      %1946 = vrot.lane.b32.xlu0 %v1881, 8
      %v1947 = vpop.permute.xlu0 %1946
      %1948 = vrot.lane.b32.xlu0 %v1882, 8
      %v1949 = vpop.permute.xlu0 %1948
      %1950 = vrot.lane.b32.xlu0 %v1883, 8
      %v1951 = vpop.permute.xlu0 %1950
      %1952 = vrot.lane.b32.xlu0 %v1884, 8
      %v1953 = vpop.permute.xlu0 %1952
      %1954 = vrot.lane.b32.xlu0 %v1885, 8
      %v1955 = vpop.permute.xlu0 %1954
      %1956 = vrot.lane.b32.xlu0 %v1886, 8
      %v1957 = vpop.permute.xlu0 %1956
      %1958 = vrot.lane.b32.xlu0 %v1887, 8
      %v1959 = vpop.permute.xlu0 %1958
      %1960 = vrot.lane.b32.xlu0 %v1888, 8
      %v1961 = vpop.permute.xlu0 %1960
      %1962 = vrot.lane.b32.xlu0 %v1889, 8
      %v1963 = vpop.permute.xlu0 %1962
      %1964 = vrot.lane.b32.xlu0 %v1890, 8
      %v1965 = vpop.permute.xlu0 %1964
      %1966 = vrot.lane.b32.xlu0 %v1891, 8
      %v1967 = vpop.permute.xlu0 %1966
      %1968 = vrot.lane.b32.xlu0 %v1892, 8
      %v1969 = vpop.permute.xlu0 %1968
      %1970 = vrot.lane.b32.xlu0 %v1893, 8
      %v1971 = vpop.permute.xlu0 %1970
      %1972 = vrot.lane.b32.xlu0 %v1894, 8
      %v1973 = vpop.permute.xlu0 %1972
      %1974 = vrot.lane.b32.xlu0 %v1895, 8
      %v1975 = vpop.permute.xlu0 %1974
      %1976 = vrot.lane.b32.xlu0 %v1896, 8
      %v1977 = vpop.permute.xlu0 %1976
      %1978 = vrot.lane.b32.xlu0 %v1897, 8
      %v1979 = vpop.permute.xlu0 %1978
      %1980 = vrot.lane.b32.xlu0 %v1898, 8
      %v1981 = vpop.permute.xlu0 %1980
      %1982 = vrot.lane.b32.xlu0 %v1899, 8
      %v1983 = vpop.permute.xlu0 %1982
      %1984 = vrot.lane.b32.xlu0 %v1900, 8
      %v1985 = vpop.permute.xlu0 %1984
      %1986 = vrot.lane.b32.xlu0 %v1901, 8
      %v1987 = vpop.permute.xlu0 %1986
      %1988 = vrot.lane.b32.xlu0 %v1902, 8
      %v1989 = vpop.permute.xlu0 %1988
      %1990 = vrot.lane.b32.xlu0 %v1903, 8
      %v1991 = vpop.permute.xlu0 %1990
      %1992 = vrot.lane.b32.xlu0 %v1904, 8
      %v1993 = vpop.permute.xlu0 %1992
      %1994 = vrot.lane.b32.xlu0 %v1905, 8
      %v1995 = vpop.permute.xlu0 %1994
      %1996 = vrot.lane.b32.xlu0 %v1906, 8
      %v1997 = vpop.permute.xlu0 %1996
      %1998 = vrot.lane.b32.xlu0 %v1907, 8
      %v1999 = vpop.permute.xlu0 %1998
      %2000 = vrot.lane.b32.xlu0 %v1908, 8
      %v2001 = vpop.permute.xlu0 %2000
      %2002 = vrot.lane.b32.xlu0 %v1909, 8
      %v2003 = vpop.permute.xlu0 %2002
      %2004 = vrot.lane.b32.xlu0 %v1910, 8
      %v2005 = vpop.permute.xlu0 %2004
      %2006 = vrot.lane.b32.xlu0 %v1911, 8
      %v2007 = vpop.permute.xlu0 %2006
      %2040 = vrot.lane.b32.xlu0 %v1882, 16
      %v2041 = vpop.permute.xlu0 %2040
      %2042 = vrot.lane.b32.xlu0 %v1883, 16
      %v2043 = vpop.permute.xlu0 %2042
      %2044 = vrot.lane.b32.xlu0 %v1884, 16
      %v2045 = vpop.permute.xlu0 %2044
      %2046 = vrot.lane.b32.xlu0 %v1885, 16
      %v2047 = vpop.permute.xlu0 %2046
      %2048 = vrot.lane.b32.xlu0 %v1886, 16
      %v2049 = vpop.permute.xlu0 %2048
      %2050 = vrot.lane.b32.xlu0 %v1887, 16
      %v2051 = vpop.permute.xlu0 %2050
      %2052 = vrot.lane.b32.xlu0 %v1888, 16
      %v2053 = vpop.permute.xlu0 %2052
      %2054 = vrot.lane.b32.xlu0 %v1889, 16
      %v2055 = vpop.permute.xlu0 %2054
      %2056 = vrot.lane.b32.xlu0 %v1890, 16
      %v2057 = vpop.permute.xlu0 %2056
      %2058 = vrot.lane.b32.xlu0 %v1891, 16
      %v2059 = vpop.permute.xlu0 %2058
      %2060 = vrot.lane.b32.xlu0 %v1892, 16
      %v2061 = vpop.permute.xlu0 %2060
      %2062 = vrot.lane.b32.xlu0 %v1893, 16
      %v2063 = vpop.permute.xlu0 %2062
      %2064 = vrot.lane.b32.xlu0 %v1894, 16
      %v2065 = vpop.permute.xlu0 %2064
      %2066 = vrot.lane.b32.xlu0 %v1895, 16
      %v2067 = vpop.permute.xlu0 %2066
      %2068 = vrot.lane.b32.xlu0 %v1896, 16
      %v2069 = vpop.permute.xlu0 %2068
      %2070 = vrot.lane.b32.xlu0 %v1897, 16
      %v2071 = vpop.permute.xlu0 %2070
      %2072 = vrot.lane.b32.xlu0 %v1898, 16
      %v2073 = vpop.permute.xlu0 %2072
      %2074 = vrot.lane.b32.xlu0 %v1899, 16
      %v2075 = vpop.permute.xlu0 %2074
      %2076 = vrot.lane.b32.xlu0 %v1900, 16
      %v2077 = vpop.permute.xlu0 %2076
      %2078 = vrot.lane.b32.xlu0 %v1901, 16
      %v2079 = vpop.permute.xlu0 %2078
      %2080 = vrot.lane.b32.xlu0 %v1902, 16
      %v2081 = vpop.permute.xlu0 %2080
      %2082 = vrot.lane.b32.xlu0 %v1903, 16
      %v2083 = vpop.permute.xlu0 %2082
      %2084 = vrot.lane.b32.xlu0 %v1904, 16
      %v2085 = vpop.permute.xlu0 %2084
      %2086 = vrot.lane.b32.xlu0 %v1905, 16
      %v2087 = vpop.permute.xlu0 %2086
      %2088 = vrot.lane.b32.xlu0 %v1906, 16
      %v2089 = vpop.permute.xlu0 %2088
      %2090 = vrot.lane.b32.xlu0 %v1907, 16
      %v2091 = vpop.permute.xlu0 %2090
      %2092 = vrot.lane.b32.xlu0 %v1908, 16
      %v2093 = vpop.permute.xlu0 %2092
      %2094 = vrot.lane.b32.xlu0 %v1909, 16
      %v2095 = vpop.permute.xlu0 %2094
      %2096 = vrot.lane.b32.xlu0 %v1910, 16
      %v2097 = vpop.permute.xlu0 %2096
      %2098 = vrot.lane.b32.xlu0 %v1911, 16
      %v2099 = vpop.permute.xlu0 %2098
      %2100 = vrot.lane.b32.xlu0 0.0, 16
      %v2101 = vpop.permute.xlu0 %2100
      %v2133 = vsel %vm969, 0.0, %v1945
      %v2134 = vsel %vm969, 0.0, %v1947
      %v2135 = vsel %vm969, %v1880, %v1949
      %v2136 = vsel %vm969, %v1881, %v1951
      %v2137 = vsel %vm969, %v1882, %v1953
      %v2138 = vsel %vm969, %v1883, %v1955
      %v2139 = vsel %vm969, %v1884, %v1957
      %v2140 = vsel %vm969, %v1885, %v1959
      %v2141 = vsel %vm969, %v1886, %v1961
      %v2142 = vsel %vm969, %v1887, %v1963
      %v2143 = vsel %vm969, %v1888, %v1965
      %v2144 = vsel %vm969, %v1889, %v1967
      %v2145 = vsel %vm969, %v1890, %v1969
      %v2146 = vsel %vm969, %v1891, %v1971
      %v2147 = vsel %vm969, %v1892, %v1973
      %v2148 = vsel %vm969, %v1893, %v1975
      %v2149 = vsel %vm969, %v1894, %v1977
      %v2150 = vsel %vm969, %v1895, %v1979
      %v2151 = vsel %vm969, %v1896, %v1981
      %v2152 = vsel %vm969, %v1897, %v1983
      %v2153 = vsel %vm969, %v1898, %v1985
      %v2154 = vsel %vm969, %v1899, %v1987
      %v2155 = vsel %vm969, %v1900, %v1989
      %v2156 = vsel %vm969, %v1901, %v1991
      %v2157 = vsel %vm969, %v1902, %v1993
      %v2158 = vsel %vm969, %v1903, %v1995
      %v2159 = vsel %vm969, %v1904, %v1997
      %v2160 = vsel %vm969, %v1905, %v1999
      %v2161 = vsel %vm969, %v1906, %v2001
      %v2162 = vsel %vm969, %v1907, %v2003
      %v2163 = vsel %vm969, %v1908, %v2005
      %v2164 = vsel %vm969, %v1909, %v2007
      %vm2165 = vcmask 130048
      %v2166 = vsel %vm2165, %v2133, %v2041
      %v2167 = vsel %vm2165, %v2134, %v2043
      %v2168 = vsel %vm2165, %v2135, %v2045
      %v2169 = vsel %vm2165, %v2136, %v2047
      %v2170 = vsel %vm2165, %v2137, %v2049
      %v2171 = vsel %vm2165, %v2138, %v2051
      %v2172 = vsel %vm2165, %v2139, %v2053
      %v2173 = vsel %vm2165, %v2140, %v2055
      %v2174 = vsel %vm2165, %v2141, %v2057
      %v2175 = vsel %vm2165, %v2142, %v2059
      %v2176 = vsel %vm2165, %v2143, %v2061
      %v2177 = vsel %vm2165, %v2144, %v2063
      %v2178 = vsel %vm2165, %v2145, %v2065
      %v2179 = vsel %vm2165, %v2146, %v2067
      %v2180 = vsel %vm2165, %v2147, %v2069
      %v2181 = vsel %vm2165, %v2148, %v2071
      %v2182 = vsel %vm2165, %v2149, %v2073
      %v2183 = vsel %vm2165, %v2150, %v2075
      %v2184 = vsel %vm2165, %v2151, %v2077
      %v2185 = vsel %vm2165, %v2152, %v2079
      %v2186 = vsel %vm2165, %v2153, %v2081
      %v2187 = vsel %vm2165, %v2154, %v2083
      %v2188 = vsel %vm2165, %v2155, %v2085
      %v2189 = vsel %vm2165, %v2156, %v2087
      %v2190 = vsel %vm2165, %v2157, %v2089
      %v2191 = vsel %vm2165, %v2158, %v2091
      %v2192 = vsel %vm2165, %v2159, %v2093
      %v2193 = vsel %vm2165, %v2160, %v2095
      %v2194 = vsel %vm2165, %v2161, %v2097
      %v2195 = vsel %vm2165, %v2162, %v2099
      %v2196 = vsel %vm2165, %v2163, %v2101
      %v2197 = vsel %vm2165, %v2164, %v2101
      %vm2198 = vcmask 195584
      %2199 = vst.msk [vmem:[#allocation3 + $0x8] sm:$0xff] %vm2198, %v2166
      %2200 = vst.msk [vmem:[#allocation3 + $0x10] sm:$0xff] %vm2198, %v2167
      %2201 = vst.msk [vmem:[#allocation3 + $0x18] sm:$0xff] %vm2198, %v2168
      %2202 = vst.msk [vmem:[#allocation3 + $0x20] sm:$0xff] %vm2198, %v2169
      %2203 = vst.msk [vmem:[#allocation3 + $0x28] sm:$0xff] %vm2198, %v2170
      %2204 = vst.msk [vmem:[#allocation3 + $0x30] sm:$0xff] %vm2198, %v2171
      %2205 = vst.msk [vmem:[#allocation3 + $0x38] sm:$0xff] %vm2198, %v2172
      %2206 = vst.msk [vmem:[#allocation3 + $0x40] sm:$0xff] %vm2198, %v2173
      %2207 = vst.msk [vmem:[#allocation3 + $0x48] sm:$0xff] %vm2198, %v2174
      %2208 = vst.msk [vmem:[#allocation3 + $0x50] sm:$0xff] %vm2198, %v2175
      %2209 = vst.msk [vmem:[#allocation3 + $0x58] sm:$0xff] %vm2198, %v2176
      %2210 = vst.msk [vmem:[#allocation3 + $0x60] sm:$0xff] %vm2198, %v2177
      %2211 = vst.msk [vmem:[#allocation3 + $0x68] sm:$0xff] %vm2198, %v2178
      %2212 = vst.msk [vmem:[#allocation3 + $0x70] sm:$0xff] %vm2198, %v2179
      %2213 = vst.msk [vmem:[#allocation3 + $0x78] sm:$0xff] %vm2198, %v2180
      %2214 = vst.msk [vmem:[#allocation3 + $0x80] sm:$0xff] %vm2198, %v2181
      %2215 = vst.msk [vmem:[#allocation3 + $0x88] sm:$0xff] %vm2198, %v2182
      %2216 = vst.msk [vmem:[#allocation3 + $0x90] sm:$0xff] %vm2198, %v2183
      %2217 = vst.msk [vmem:[#allocation3 + $0x98] sm:$0xff] %vm2198, %v2184
      %2218 = vst.msk [vmem:[#allocation3 + $0xa0] sm:$0xff] %vm2198, %v2185
      %2219 = vst.msk [vmem:[#allocation3 + $0xa8] sm:$0xff] %vm2198, %v2186
      %2220 = vst.msk [vmem:[#allocation3 + $0xb0] sm:$0xff] %vm2198, %v2187
      %2221 = vst.msk [vmem:[#allocation3 + $0xb8] sm:$0xff] %vm2198, %v2188
      %2222 = vst.msk [vmem:[#allocation3 + $0xc0] sm:$0xff] %vm2198, %v2189
      %2223 = vst.msk [vmem:[#allocation3 + $0xc8] sm:$0xff] %vm2198, %v2190
      %2224 = vst.msk [vmem:[#allocation3 + $0xd0] sm:$0xff] %vm2198, %v2191
      %2225 = vst.msk [vmem:[#allocation3 + $0xd8] sm:$0xff] %vm2198, %v2192
      %2226 = vst.msk [vmem:[#allocation3 + $0xe0] sm:$0xff] %vm2198, %v2193
      %2227 = vst.msk [vmem:[#allocation3 + $0xe8] sm:$0xff] %vm2198, %v2194
      %2228 = vst.msk [vmem:[#allocation3 + $0xf0] sm:$0xff] %vm2198, %v2195
      %2229 = vst.msk [vmem:[#allocation3 + $0xf8] sm:$0xff] %vm2198, %v2196
      %2230 = vst.msk [vmem:[#allocation3 + $0x100] sm:$0xff] %vm2198, %v2197
      %v2231 = vperm.slane %v681, 0
      %2233 = vrot.lane.b32.xlu0 %v2231, 8
      %v2234 = vpop.permute.xlu0 %2233
      %v2236 = vadd.f32 %v1815, %v2234
      %v2237 = vadd.f32 %v1816, %v2234
      %v2238 = vadd.f32 %v1817, %v2234
      %v2239 = vadd.f32 %v1818, %v2234
      %v2240 = vadd.f32 %v1819, %v2234
      %v2241 = vadd.f32 %v1820, %v2234
      %v2242 = vadd.f32 %v1821, %v2234
      %v2243 = vadd.f32 %v1822, %v2234
      %v2244 = vadd.f32 %v1823, %v2234
      %v2245 = vadd.f32 %v1824, %v2234
      %v2246 = vadd.f32 %v1825, %v2234
      %v2247 = vadd.f32 %v1826, %v2234
      %v2248 = vadd.f32 %v1827, %v2234
      %v2249 = vadd.f32 %v1828, %v2234
      %v2250 = vadd.f32 %v1829, %v2234
      %v2251 = vadd.f32 %v1830, %v2234
      %v2252 = vadd.f32 %v1831, %v2234
      %v2253 = vadd.f32 %v1832, %v2234
      %v2254 = vadd.f32 %v1833, %v2234
      %v2255 = vadd.f32 %v1834, %v2234
      %v2256 = vadd.f32 %v1835, %v2234
      %v2257 = vadd.f32 %v1836, %v2234
      %v2258 = vadd.f32 %v1837, %v2234
      %v2259 = vadd.f32 %v1838, %v2234
      %v2260 = vadd.f32 %v1839, %v2234
      %v2261 = vadd.f32 %v1840, %v2234
      %v2262 = vadd.f32 %v1841, %v2234
      %v2263 = vadd.f32 %v1842, %v2234
      %v2264 = vadd.f32 %v1843, %v2234
      %v2265 = vadd.f32 %v1844, %v2234
      %v2266 = vadd.f32 %v1845, %v2234
      %v2267 = vadd.f32 %v1846, %v2234
      %v2268 = vld [vmem:[#allocation3 + $0x7] sm:$0xff]
      %v2269 = vld [vmem:[#allocation3 + $0xf] sm:$0xff]
      %v2270 = vld [vmem:[#allocation3 + $0x17] sm:$0xff]
      %v2271 = vld [vmem:[#allocation3 + $0x1f] sm:$0xff]
      %v2272 = vld [vmem:[#allocation3 + $0x27] sm:$0xff]
      %v2273 = vld [vmem:[#allocation3 + $0x2f] sm:$0xff]
      %v2274 = vld [vmem:[#allocation3 + $0x37] sm:$0xff]
      %v2275 = vld [vmem:[#allocation3 + $0x3f] sm:$0xff]
      %v2276 = vld [vmem:[#allocation3 + $0x47] sm:$0xff]
      %v2277 = vld [vmem:[#allocation3 + $0x4f] sm:$0xff]
      %v2278 = vld [vmem:[#allocation3 + $0x57] sm:$0xff]
      %v2279 = vld [vmem:[#allocation3 + $0x5f] sm:$0xff]
      %v2280 = vld [vmem:[#allocation3 + $0x67] sm:$0xff]
      %v2281 = vld [vmem:[#allocation3 + $0x6f] sm:$0xff]
      %v2282 = vld [vmem:[#allocation3 + $0x77] sm:$0xff]
      %v2283 = vld [vmem:[#allocation3 + $0x7f] sm:$0xff]
      %v2284 = vld [vmem:[#allocation3 + $0x87] sm:$0xff]
      %v2285 = vld [vmem:[#allocation3 + $0x8f] sm:$0xff]
      %v2286 = vld [vmem:[#allocation3 + $0x97] sm:$0xff]
      %v2287 = vld [vmem:[#allocation3 + $0x9f] sm:$0xff]
      %v2288 = vld [vmem:[#allocation3 + $0xa7] sm:$0xff]
      %v2289 = vld [vmem:[#allocation3 + $0xaf] sm:$0xff]
      %v2290 = vld [vmem:[#allocation3 + $0xb7] sm:$0xff]
      %v2291 = vld [vmem:[#allocation3 + $0xbf] sm:$0xff]
      %v2292 = vld [vmem:[#allocation3 + $0xc7] sm:$0xff]
      %v2293 = vld [vmem:[#allocation3 + $0xcf] sm:$0xff]
      %v2294 = vld [vmem:[#allocation3 + $0xd7] sm:$0xff]
      %v2295 = vld [vmem:[#allocation3 + $0xdf] sm:$0xff]
      %v2296 = vld [vmem:[#allocation3 + $0xe7] sm:$0xff]
      %v2297 = vld [vmem:[#allocation3 + $0xef] sm:$0xff]
      %v2298 = vld [vmem:[#allocation3 + $0xf7] sm:$0xff]
      %v2299 = vld [vmem:[#allocation3 + $0xff] sm:$0xff]
      %v2300 = vsel %vm1099, %v2268, 0.0
      %v2301 = vsel %vm1100, %v2269, 0.0
      %v2302 = vsel %vm1101, %v2270, 0.0
      %v2303 = vsel %vm1102, %v2271, 0.0
      %v2304 = vsel %vm1103, %v2272, 0.0
      %v2305 = vsel %vm1104, %v2273, 0.0
      %v2306 = vsel %vm1105, %v2274, 0.0
      %v2307 = vsel %vm1106, %v2275, 0.0
      %v2308 = vsel %vm1107, %v2276, 0.0
      %v2309 = vsel %vm1108, %v2277, 0.0
      %v2310 = vsel %vm1109, %v2278, 0.0
      %v2311 = vsel %vm1110, %v2279, 0.0
      %v2312 = vsel %vm1111, %v2280, 0.0
      %v2313 = vsel %vm1112, %v2281, 0.0
      %v2314 = vsel %vm1113, %v2282, 0.0
      %v2315 = vsel %vm1114, %v2283, 0.0
      %v2316 = vsel %vm1115, %v2284, 0.0
      %v2317 = vsel %vm1116, %v2285, 0.0
      %v2318 = vsel %vm1117, %v2286, 0.0
      %v2319 = vsel %vm1118, %v2287, 0.0
      %v2320 = vsel %vm1119, %v2288, 0.0
      %v2321 = vsel %vm1120, %v2289, 0.0
      %v2322 = vsel %vm1121, %v2290, 0.0
      %v2323 = vsel %vm1122, %v2291, 0.0
      %v2324 = vsel %vm1123, %v2292, 0.0
      %v2325 = vsel %vm1124, %v2293, 0.0
      %v2326 = vsel %vm1125, %v2294, 0.0
      %v2327 = vsel %vm1126, %v2295, 0.0
      %v2328 = vsel %vm1127, %v2296, 0.0
      %v2329 = vsel %vm1128, %v2297, 0.0
      %v2330 = vsel %vm1129, %v2298, 0.0
      %v2331 = vsel %vm1130, %v2299, 0.0
      %v2332 = vpack.c.bf16 %v2301, %v2300
      %v2333 = vpack.c.bf16 %v2303, %v2302
      %v2334 = vpack.c.bf16 %v2305, %v2304
      %v2335 = vpack.c.bf16 %v2307, %v2306
      %v2336 = vpack.c.bf16 %v2309, %v2308
      %v2337 = vpack.c.bf16 %v2311, %v2310
      %v2338 = vpack.c.bf16 %v2313, %v2312
      %v2339 = vpack.c.bf16 %v2315, %v2314
      %v2340 = vpack.c.bf16 %v2317, %v2316
      %v2341 = vpack.c.bf16 %v2319, %v2318
      %v2342 = vpack.c.bf16 %v2321, %v2320
      %v2343 = vpack.c.bf16 %v2323, %v2322
      %v2344 = vpack.c.bf16 %v2325, %v2324
      %v2345 = vpack.c.bf16 %v2327, %v2326
      %v2346 = vpack.c.bf16 %v2329, %v2328
      %v2347 = vpack.c.bf16 %v2331, %v2330
      %v2348 = vld [vmem:[%s2] sm:$0xf]
      %v2349 = vld [vmem:[%s2 + $0x4] sm:$0xf]
      %v2350 = vld [vmem:[%s2 + $0x8] sm:$0xf]
      %v2354 = vunpack.c.l.b16 %v2348
      %v2355 = vunpack.c.l.b16 %v2349
      %v2356 = vunpack.c.l.b16 %v2350
      %v2357 = vpack.c.b16 %v2355, %v2354
      %v2358 = vpack.c.b16 %v2356, %v2356
      %v2361 = vsel %vm2198, %v2332, 0
      %v2364 = vsel %vm2198, %v2333, 0
      %v2367 = vsel %vm2198, %v2334, 0
      %v2370 = vsel %vm2198, %v2335, 0
      %v2373 = vsel %vm2198, %v2336, 0
      %v2376 = vsel %vm2198, %v2337, 0
      %v2379 = vsel %vm2198, %v2338, 0
      %v2382 = vsel %vm2198, %v2339, 0
      %v2385 = vsel %vm2198, %v2340, 0
      %v2388 = vsel %vm2198, %v2341, 0
      %v2391 = vsel %vm2198, %v2342, 0
      %v2394 = vsel %vm2198, %v2343, 0
      %v2397 = vsel %vm2198, %v2344, 0
      %v2400 = vsel %vm2198, %v2345, 0
      %v2403 = vsel %vm2198, %v2346, 0
      %v2406 = vsel %vm2198, %v2347, 0
      %vm2408 = vcmask 1043456
      %v2410 = vsel %vm2408, %v2358, 0
      %2412 = vmatpush.bf16.msra.mxu0 0
      %2413 = vmatpush.bf16.msra.mxu0 0
      %2414 = vmatpush.bf16.msra.mxu0 0
      %2415 = vmatpush.bf16.msra.mxu0 0
      %2416 = vmatpush.bf16.msra.mxu0 0
      %2417 = vmatpush.bf16.msra.mxu0 0
      %2418 = vmatpush.bf16.msra.mxu0 %v2410
      %2419 = vmatpush.bf16.msra.mxu0 %v2357
      %2420 = vmatmul.bf16.gmra.mxu0 %v2361
      %v2421 = vpop.f32.mrf.mxu0
      %v2422 = vadd.f32 0.0, %v2421
      %v2423 = vpop.f32.mrf.mxu0
      %v2424 = vadd.f32 0.0, %v2423
      %2425 = vmatmul.bf16.gmra.mxu0 %v2364
      %v2426 = vpop.f32.mrf.mxu0
      %v2427 = vadd.f32 0.0, %v2426
      %v2428 = vpop.f32.mrf.mxu0
      %v2429 = vadd.f32 0.0, %v2428
      %2430 = vmatmul.bf16.gmra.mxu0 %v2367
      %v2431 = vpop.f32.mrf.mxu0
      %v2432 = vadd.f32 0.0, %v2431
      %v2433 = vpop.f32.mrf.mxu0
      %v2434 = vadd.f32 0.0, %v2433
      %2435 = vmatmul.bf16.gmra.mxu0 %v2370
      %v2436 = vpop.f32.mrf.mxu0
      %v2437 = vadd.f32 0.0, %v2436
      %v2438 = vpop.f32.mrf.mxu0
      %v2439 = vadd.f32 0.0, %v2438
      %2440 = vmatmul.bf16.gmra.mxu0 %v2373
      %v2441 = vpop.f32.mrf.mxu0
      %v2442 = vadd.f32 0.0, %v2441
      %v2443 = vpop.f32.mrf.mxu0
      %v2444 = vadd.f32 0.0, %v2443
      %2445 = vmatmul.bf16.gmra.mxu0 %v2376
      %v2446 = vpop.f32.mrf.mxu0
      %v2447 = vadd.f32 0.0, %v2446
      %v2448 = vpop.f32.mrf.mxu0
      %v2449 = vadd.f32 0.0, %v2448
      %2450 = vmatmul.bf16.gmra.mxu0 %v2379
      %v2451 = vpop.f32.mrf.mxu0
      %v2452 = vadd.f32 0.0, %v2451
      %v2453 = vpop.f32.mrf.mxu0
      %v2454 = vadd.f32 0.0, %v2453
      %2455 = vmatmul.bf16.gmra.mxu0 %v2382
      %v2456 = vpop.f32.mrf.mxu0
      %v2457 = vadd.f32 0.0, %v2456
      %v2458 = vpop.f32.mrf.mxu0
      %v2459 = vadd.f32 0.0, %v2458
      %2460 = vmatmul.bf16.gmra.mxu0 %v2385
      %v2461 = vpop.f32.mrf.mxu0
      %v2462 = vadd.f32 0.0, %v2461
      %v2463 = vpop.f32.mrf.mxu0
      %v2464 = vadd.f32 0.0, %v2463
      %2465 = vmatmul.bf16.gmra.mxu0 %v2388
      %v2466 = vpop.f32.mrf.mxu0
      %v2467 = vadd.f32 0.0, %v2466
      %v2468 = vpop.f32.mrf.mxu0
      %v2469 = vadd.f32 0.0, %v2468
      %2470 = vmatmul.bf16.gmra.mxu0 %v2391
      %v2471 = vpop.f32.mrf.mxu0
      %v2472 = vadd.f32 0.0, %v2471
      %v2473 = vpop.f32.mrf.mxu0
      %v2474 = vadd.f32 0.0, %v2473
      %2475 = vmatmul.bf16.gmra.mxu0 %v2394
      %v2476 = vpop.f32.mrf.mxu0
      %v2477 = vadd.f32 0.0, %v2476
      %v2478 = vpop.f32.mrf.mxu0
      %v2479 = vadd.f32 0.0, %v2478
      %2480 = vmatmul.bf16.gmra.mxu0 %v2397
      %v2481 = vpop.f32.mrf.mxu0
      %v2482 = vadd.f32 0.0, %v2481
      %v2483 = vpop.f32.mrf.mxu0
      %v2484 = vadd.f32 0.0, %v2483
      %2485 = vmatmul.bf16.gmra.mxu0 %v2400
      %v2486 = vpop.f32.mrf.mxu0
      %v2487 = vadd.f32 0.0, %v2486
      %v2488 = vpop.f32.mrf.mxu0
      %v2489 = vadd.f32 0.0, %v2488
      %2490 = vmatmul.bf16.gmra.mxu0 %v2403
      %v2491 = vpop.f32.mrf.mxu0
      %v2492 = vadd.f32 0.0, %v2491
      %v2493 = vpop.f32.mrf.mxu0
      %v2494 = vadd.f32 0.0, %v2493
      %2495 = vmatmul.bf16.gmra.mxu0 %v2406
      %v2496 = vpop.f32.mrf.mxu0
      %v2497 = vadd.f32 0.0, %v2496
      %v2498 = vpop.f32.mrf.mxu0
      %v2499 = vadd.f32 0.0, %v2498
      %2500 = vdwg.mxu0
      %2533 = vrot.lane.b32.xlu0 %v2422, 8
      %v2534 = vpop.permute.xlu0 %2533
      %2535 = vrot.lane.b32.xlu0 %v2424, 8
      %v2536 = vpop.permute.xlu0 %2535
      %2537 = vrot.lane.b32.xlu0 %v2427, 8
      %v2538 = vpop.permute.xlu0 %2537
      %2539 = vrot.lane.b32.xlu0 %v2429, 8
      %v2540 = vpop.permute.xlu0 %2539
      %2541 = vrot.lane.b32.xlu0 %v2432, 8
      %v2542 = vpop.permute.xlu0 %2541
      %2543 = vrot.lane.b32.xlu0 %v2434, 8
      %v2544 = vpop.permute.xlu0 %2543
      %2545 = vrot.lane.b32.xlu0 %v2437, 8
      %v2546 = vpop.permute.xlu0 %2545
      %2547 = vrot.lane.b32.xlu0 %v2439, 8
      %v2548 = vpop.permute.xlu0 %2547
      %2549 = vrot.lane.b32.xlu0 %v2442, 8
      %v2550 = vpop.permute.xlu0 %2549
      %2551 = vrot.lane.b32.xlu0 %v2444, 8
      %v2552 = vpop.permute.xlu0 %2551
      %2553 = vrot.lane.b32.xlu0 %v2447, 8
      %v2554 = vpop.permute.xlu0 %2553
      %2555 = vrot.lane.b32.xlu0 %v2449, 8
      %v2556 = vpop.permute.xlu0 %2555
      %2557 = vrot.lane.b32.xlu0 %v2452, 8
      %v2558 = vpop.permute.xlu0 %2557
      %2559 = vrot.lane.b32.xlu0 %v2454, 8
      %v2560 = vpop.permute.xlu0 %2559
      %2561 = vrot.lane.b32.xlu0 %v2457, 8
      %v2562 = vpop.permute.xlu0 %2561
      %2563 = vrot.lane.b32.xlu0 %v2459, 8
      %v2564 = vpop.permute.xlu0 %2563
      %2565 = vrot.lane.b32.xlu0 %v2462, 8
      %v2566 = vpop.permute.xlu0 %2565
      %2567 = vrot.lane.b32.xlu0 %v2464, 8
      %v2568 = vpop.permute.xlu0 %2567
      %2569 = vrot.lane.b32.xlu0 %v2467, 8
      %v2570 = vpop.permute.xlu0 %2569
      %2571 = vrot.lane.b32.xlu0 %v2469, 8
      %v2572 = vpop.permute.xlu0 %2571
      %2573 = vrot.lane.b32.xlu0 %v2472, 8
      %v2574 = vpop.permute.xlu0 %2573
      %2575 = vrot.lane.b32.xlu0 %v2474, 8
      %v2576 = vpop.permute.xlu0 %2575
      %2577 = vrot.lane.b32.xlu0 %v2477, 8
      %v2578 = vpop.permute.xlu0 %2577
      %2579 = vrot.lane.b32.xlu0 %v2479, 8
      %v2580 = vpop.permute.xlu0 %2579
      %2581 = vrot.lane.b32.xlu0 %v2482, 8
      %v2582 = vpop.permute.xlu0 %2581
      %2583 = vrot.lane.b32.xlu0 %v2484, 8
      %v2584 = vpop.permute.xlu0 %2583
      %2585 = vrot.lane.b32.xlu0 %v2487, 8
      %v2586 = vpop.permute.xlu0 %2585
      %2587 = vrot.lane.b32.xlu0 %v2489, 8
      %v2588 = vpop.permute.xlu0 %2587
      %2589 = vrot.lane.b32.xlu0 %v2492, 8
      %v2590 = vpop.permute.xlu0 %2589
      %2591 = vrot.lane.b32.xlu0 %v2494, 8
      %v2592 = vpop.permute.xlu0 %2591
      %2593 = vrot.lane.b32.xlu0 %v2497, 8
      %v2594 = vpop.permute.xlu0 %2593
      %2595 = vrot.lane.b32.xlu0 %v2499, 8
      %v2596 = vpop.permute.xlu0 %2595
      %v2629 = vadd.f32 %v2236, %v2534
      %v2630 = vadd.f32 %v2237, %v2536
      %v2631 = vadd.f32 %v2238, %v2538
      %v2632 = vadd.f32 %v2239, %v2540
      %v2633 = vadd.f32 %v2240, %v2542
      %v2634 = vadd.f32 %v2241, %v2544
      %v2635 = vadd.f32 %v2242, %v2546
      %v2636 = vadd.f32 %v2243, %v2548
      %v2637 = vadd.f32 %v2244, %v2550
      %v2638 = vadd.f32 %v2245, %v2552
      %v2639 = vadd.f32 %v2246, %v2554
      %v2640 = vadd.f32 %v2247, %v2556
      %v2641 = vadd.f32 %v2248, %v2558
      %v2642 = vadd.f32 %v2249, %v2560
      %v2643 = vadd.f32 %v2250, %v2562
      %v2644 = vadd.f32 %v2251, %v2564
      %v2645 = vadd.f32 %v2252, %v2566
      %v2646 = vadd.f32 %v2253, %v2568
      %v2647 = vadd.f32 %v2254, %v2570
      %v2648 = vadd.f32 %v2255, %v2572
      %v2649 = vadd.f32 %v2256, %v2574
      %v2650 = vadd.f32 %v2257, %v2576
      %v2651 = vadd.f32 %v2258, %v2578
      %v2652 = vadd.f32 %v2259, %v2580
      %v2653 = vadd.f32 %v2260, %v2582
      %v2654 = vadd.f32 %v2261, %v2584
      %v2655 = vadd.f32 %v2262, %v2586
      %v2656 = vadd.f32 %v2263, %v2588
      %v2657 = vadd.f32 %v2264, %v2590
      %v2658 = vadd.f32 %v2265, %v2592
      %v2659 = vadd.f32 %v2266, %v2594
      %v2660 = vadd.f32 %v2267, %v2596
      %v2661 = vld [vmem:[#allocation3 + $0x8] sm:$0xff]
      %v2662 = vld [vmem:[#allocation3 + $0x10] sm:$0xff]
      %v2663 = vld [vmem:[#allocation3 + $0x18] sm:$0xff]
      %v2664 = vld [vmem:[#allocation3 + $0x20] sm:$0xff]
      %v2665 = vld [vmem:[#allocation3 + $0x28] sm:$0xff]
      %v2666 = vld [vmem:[#allocation3 + $0x30] sm:$0xff]
      %v2667 = vld [vmem:[#allocation3 + $0x38] sm:$0xff]
      %v2668 = vld [vmem:[#allocation3 + $0x40] sm:$0xff]
      %v2669 = vld [vmem:[#allocation3 + $0x48] sm:$0xff]
      %v2670 = vld [vmem:[#allocation3 + $0x50] sm:$0xff]
      %v2671 = vld [vmem:[#allocation3 + $0x58] sm:$0xff]
      %v2672 = vld [vmem:[#allocation3 + $0x60] sm:$0xff]
      %v2673 = vld [vmem:[#allocation3 + $0x68] sm:$0xff]
      %v2674 = vld [vmem:[#allocation3 + $0x70] sm:$0xff]
      %v2675 = vld [vmem:[#allocation3 + $0x78] sm:$0xff]
      %v2676 = vld [vmem:[#allocation3 + $0x80] sm:$0xff]
      %v2677 = vld [vmem:[#allocation3 + $0x88] sm:$0xff]
      %v2678 = vld [vmem:[#allocation3 + $0x90] sm:$0xff]
      %v2679 = vld [vmem:[#allocation3 + $0x98] sm:$0xff]
      %v2680 = vld [vmem:[#allocation3 + $0xa0] sm:$0xff]
      %v2681 = vld [vmem:[#allocation3 + $0xa8] sm:$0xff]
      %v2682 = vld [vmem:[#allocation3 + $0xb0] sm:$0xff]
      %v2683 = vld [vmem:[#allocation3 + $0xb8] sm:$0xff]
      %v2684 = vld [vmem:[#allocation3 + $0xc0] sm:$0xff]
      %v2685 = vld [vmem:[#allocation3 + $0xc8] sm:$0xff]
      %v2686 = vld [vmem:[#allocation3 + $0xd0] sm:$0xff]
      %v2687 = vld [vmem:[#allocation3 + $0xd8] sm:$0xff]
      %v2688 = vld [vmem:[#allocation3 + $0xe0] sm:$0xff]
      %v2689 = vld [vmem:[#allocation3 + $0xe8] sm:$0xff]
      %v2690 = vld [vmem:[#allocation3 + $0xf0] sm:$0xff]
      %v2691 = vld [vmem:[#allocation3 + $0xf8] sm:$0xff]
      %v2692 = vld [vmem:[#allocation3 + $0x100] sm:$0xff]
      %v2693 = vpack.c.bf16 %v2662, %v2661
      %v2694 = vpack.c.bf16 %v2664, %v2663
      %v2695 = vpack.c.bf16 %v2666, %v2665
      %v2696 = vpack.c.bf16 %v2668, %v2667
      %v2697 = vpack.c.bf16 %v2670, %v2669
      %v2698 = vpack.c.bf16 %v2672, %v2671
      %v2699 = vpack.c.bf16 %v2674, %v2673
      %v2700 = vpack.c.bf16 %v2676, %v2675
      %v2701 = vpack.c.bf16 %v2678, %v2677
      %v2702 = vpack.c.bf16 %v2680, %v2679
      %v2703 = vpack.c.bf16 %v2682, %v2681
      %v2704 = vpack.c.bf16 %v2684, %v2683
      %v2705 = vpack.c.bf16 %v2686, %v2685
      %v2706 = vpack.c.bf16 %v2688, %v2687
      %v2707 = vpack.c.bf16 %v2690, %v2689
      %v2708 = vpack.c.bf16 %v2692, %v2691
      %s2709 = scalar_lea.vmem %s2, 12
      %v2710 = vld [vmem:[%s2709] sm:$0xf]
      %v2711 = vld [vmem:[%s2709 + $0x4] sm:$0xf]
      %v2712 = vld [vmem:[%s2709 + $0x8] sm:$0xf]
      %v2716 = vunpack.c.l.b16 %v2710
      %v2717 = vunpack.c.l.b16 %v2711
      %v2718 = vunpack.c.l.b16 %v2712
      %v2719 = vpack.c.b16 %v2717, %v2716
      %v2720 = vpack.c.b16 %v2718, %v2718
      %v2723 = vsel %vm2198, %v2693, 0
      %v2726 = vsel %vm2198, %v2694, 0
      %v2729 = vsel %vm2198, %v2695, 0
      %v2732 = vsel %vm2198, %v2696, 0
      %v2735 = vsel %vm2198, %v2697, 0
      %v2738 = vsel %vm2198, %v2698, 0
      %v2741 = vsel %vm2198, %v2699, 0
      %v2744 = vsel %vm2198, %v2700, 0
      %v2747 = vsel %vm2198, %v2701, 0
      %v2750 = vsel %vm2198, %v2702, 0
      %v2753 = vsel %vm2198, %v2703, 0
      %v2756 = vsel %vm2198, %v2704, 0
      %v2759 = vsel %vm2198, %v2705, 0
      %v2762 = vsel %vm2198, %v2706, 0
      %v2765 = vsel %vm2198, %v2707, 0
      %v2768 = vsel %vm2198, %v2708, 0
      %v2771 = vsel %vm2408, %v2720, 0
      %2773 = vmatpush.bf16.msra.mxu0 0
      %2774 = vmatpush.bf16.msra.mxu0 0
      %2775 = vmatpush.bf16.msra.mxu0 0
      %2776 = vmatpush.bf16.msra.mxu0 0
      %2777 = vmatpush.bf16.msra.mxu0 0
      %2778 = vmatpush.bf16.msra.mxu0 0
      %2779 = vmatpush.bf16.msra.mxu0 %v2771
      %2780 = vmatpush.bf16.msra.mxu0 %v2719
      %2781 = vmatmul.bf16.gmra.mxu0 %v2723
      %v2782 = vpop.f32.mrf.mxu0
      %v2783 = vadd.f32 0.0, %v2782
      %v2784 = vpop.f32.mrf.mxu0
      %v2785 = vadd.f32 0.0, %v2784
      %2786 = vmatmul.bf16.gmra.mxu0 %v2726
      %v2787 = vpop.f32.mrf.mxu0
      %v2788 = vadd.f32 0.0, %v2787
      %v2789 = vpop.f32.mrf.mxu0
      %v2790 = vadd.f32 0.0, %v2789
      %2791 = vmatmul.bf16.gmra.mxu0 %v2729
      %v2792 = vpop.f32.mrf.mxu0
      %v2793 = vadd.f32 0.0, %v2792
      %v2794 = vpop.f32.mrf.mxu0
      %v2795 = vadd.f32 0.0, %v2794
      %2796 = vmatmul.bf16.gmra.mxu0 %v2732
      %v2797 = vpop.f32.mrf.mxu0
      %v2798 = vadd.f32 0.0, %v2797
      %v2799 = vpop.f32.mrf.mxu0
      %v2800 = vadd.f32 0.0, %v2799
      %2801 = vmatmul.bf16.gmra.mxu0 %v2735
      %v2802 = vpop.f32.mrf.mxu0
      %v2803 = vadd.f32 0.0, %v2802
      %v2804 = vpop.f32.mrf.mxu0
      %v2805 = vadd.f32 0.0, %v2804
      %2806 = vmatmul.bf16.gmra.mxu0 %v2738
      %v2807 = vpop.f32.mrf.mxu0
      %v2808 = vadd.f32 0.0, %v2807
      %v2809 = vpop.f32.mrf.mxu0
      %v2810 = vadd.f32 0.0, %v2809
      %2811 = vmatmul.bf16.gmra.mxu0 %v2741
      %v2812 = vpop.f32.mrf.mxu0
      %v2813 = vadd.f32 0.0, %v2812
      %v2814 = vpop.f32.mrf.mxu0
      %v2815 = vadd.f32 0.0, %v2814
      %2816 = vmatmul.bf16.gmra.mxu0 %v2744
      %v2817 = vpop.f32.mrf.mxu0
      %v2818 = vadd.f32 0.0, %v2817
      %v2819 = vpop.f32.mrf.mxu0
      %v2820 = vadd.f32 0.0, %v2819
      %2821 = vmatmul.bf16.gmra.mxu0 %v2747
      %v2822 = vpop.f32.mrf.mxu0
      %v2823 = vadd.f32 0.0, %v2822
      %v2824 = vpop.f32.mrf.mxu0
      %v2825 = vadd.f32 0.0, %v2824
      %2826 = vmatmul.bf16.gmra.mxu0 %v2750
      %v2827 = vpop.f32.mrf.mxu0
      %v2828 = vadd.f32 0.0, %v2827
      %v2829 = vpop.f32.mrf.mxu0
      %v2830 = vadd.f32 0.0, %v2829
      %2831 = vmatmul.bf16.gmra.mxu0 %v2753
      %v2832 = vpop.f32.mrf.mxu0
      %v2833 = vadd.f32 0.0, %v2832
      %v2834 = vpop.f32.mrf.mxu0
      %v2835 = vadd.f32 0.0, %v2834
      %2836 = vmatmul.bf16.gmra.mxu0 %v2756
      %v2837 = vpop.f32.mrf.mxu0
      %v2838 = vadd.f32 0.0, %v2837
      %v2839 = vpop.f32.mrf.mxu0
      %v2840 = vadd.f32 0.0, %v2839
      %2841 = vmatmul.bf16.gmra.mxu0 %v2759
      %v2842 = vpop.f32.mrf.mxu0
      %v2843 = vadd.f32 0.0, %v2842
      %v2844 = vpop.f32.mrf.mxu0
      %v2845 = vadd.f32 0.0, %v2844
      %2846 = vmatmul.bf16.gmra.mxu0 %v2762
      %v2847 = vpop.f32.mrf.mxu0
      %v2848 = vadd.f32 0.0, %v2847
      %v2849 = vpop.f32.mrf.mxu0
      %v2850 = vadd.f32 0.0, %v2849
      %2851 = vmatmul.bf16.gmra.mxu0 %v2765
      %v2852 = vpop.f32.mrf.mxu0
      %v2853 = vadd.f32 0.0, %v2852
      %v2854 = vpop.f32.mrf.mxu0
      %v2855 = vadd.f32 0.0, %v2854
      %2856 = vmatmul.bf16.gmra.mxu0 %v2768
      %v2857 = vpop.f32.mrf.mxu0
      %v2858 = vadd.f32 0.0, %v2857
      %v2859 = vpop.f32.mrf.mxu0
      %v2860 = vadd.f32 0.0, %v2859
      %2861 = vdwg.mxu0
      %2894 = vrot.lane.b32.xlu0 %v2783, 8
      %v2895 = vpop.permute.xlu0 %2894
      %2896 = vrot.lane.b32.xlu0 %v2785, 8
      %v2897 = vpop.permute.xlu0 %2896
      %2898 = vrot.lane.b32.xlu0 %v2788, 8
      %v2899 = vpop.permute.xlu0 %2898
      %2900 = vrot.lane.b32.xlu0 %v2790, 8
      %v2901 = vpop.permute.xlu0 %2900
      %2902 = vrot.lane.b32.xlu0 %v2793, 8
      %v2903 = vpop.permute.xlu0 %2902
      %2904 = vrot.lane.b32.xlu0 %v2795, 8
      %v2905 = vpop.permute.xlu0 %2904
      %2906 = vrot.lane.b32.xlu0 %v2798, 8
      %v2907 = vpop.permute.xlu0 %2906
      %2908 = vrot.lane.b32.xlu0 %v2800, 8
      %v2909 = vpop.permute.xlu0 %2908
      %2910 = vrot.lane.b32.xlu0 %v2803, 8
      %v2911 = vpop.permute.xlu0 %2910
      %2912 = vrot.lane.b32.xlu0 %v2805, 8
      %v2913 = vpop.permute.xlu0 %2912
      %2914 = vrot.lane.b32.xlu0 %v2808, 8
      %v2915 = vpop.permute.xlu0 %2914
      %2916 = vrot.lane.b32.xlu0 %v2810, 8
      %v2917 = vpop.permute.xlu0 %2916
      %2918 = vrot.lane.b32.xlu0 %v2813, 8
      %v2919 = vpop.permute.xlu0 %2918
      %2920 = vrot.lane.b32.xlu0 %v2815, 8
      %v2921 = vpop.permute.xlu0 %2920
      %2922 = vrot.lane.b32.xlu0 %v2818, 8
      %v2923 = vpop.permute.xlu0 %2922
      %2924 = vrot.lane.b32.xlu0 %v2820, 8
      %v2925 = vpop.permute.xlu0 %2924
      %2926 = vrot.lane.b32.xlu0 %v2823, 8
      %v2927 = vpop.permute.xlu0 %2926
      %2928 = vrot.lane.b32.xlu0 %v2825, 8
      %v2929 = vpop.permute.xlu0 %2928
      %2930 = vrot.lane.b32.xlu0 %v2828, 8
      %v2931 = vpop.permute.xlu0 %2930
      %2932 = vrot.lane.b32.xlu0 %v2830, 8
      %v2933 = vpop.permute.xlu0 %2932
      %2934 = vrot.lane.b32.xlu0 %v2833, 8
      %v2935 = vpop.permute.xlu0 %2934
      %2936 = vrot.lane.b32.xlu0 %v2835, 8
      %v2937 = vpop.permute.xlu0 %2936
      %2938 = vrot.lane.b32.xlu0 %v2838, 8
      %v2939 = vpop.permute.xlu0 %2938
      %2940 = vrot.lane.b32.xlu0 %v2840, 8
      %v2941 = vpop.permute.xlu0 %2940
      %2942 = vrot.lane.b32.xlu0 %v2843, 8
      %v2943 = vpop.permute.xlu0 %2942
      %2944 = vrot.lane.b32.xlu0 %v2845, 8
      %v2945 = vpop.permute.xlu0 %2944
      %2946 = vrot.lane.b32.xlu0 %v2848, 8
      %v2947 = vpop.permute.xlu0 %2946
      %2948 = vrot.lane.b32.xlu0 %v2850, 8
      %v2949 = vpop.permute.xlu0 %2948
      %2950 = vrot.lane.b32.xlu0 %v2853, 8
      %v2951 = vpop.permute.xlu0 %2950
      %2952 = vrot.lane.b32.xlu0 %v2855, 8
      %v2953 = vpop.permute.xlu0 %2952
      %2954 = vrot.lane.b32.xlu0 %v2858, 8
      %v2955 = vpop.permute.xlu0 %2954
      %2956 = vrot.lane.b32.xlu0 %v2860, 8
      %v2957 = vpop.permute.xlu0 %2956
      %v2990 = vadd.f32 %v2629, %v2895
      %v2991 = vadd.f32 %v2630, %v2897
      %v2992 = vadd.f32 %v2631, %v2899
      %v2993 = vadd.f32 %v2632, %v2901
      %v2994 = vadd.f32 %v2633, %v2903
      %v2995 = vadd.f32 %v2634, %v2905
      %v2996 = vadd.f32 %v2635, %v2907
      %v2997 = vadd.f32 %v2636, %v2909
      %v2998 = vadd.f32 %v2637, %v2911
      %v2999 = vadd.f32 %v2638, %v2913
      %v3000 = vadd.f32 %v2639, %v2915
      %v3001 = vadd.f32 %v2640, %v2917
      %v3002 = vadd.f32 %v2641, %v2919
      %v3003 = vadd.f32 %v2642, %v2921
      %v3004 = vadd.f32 %v2643, %v2923
      %v3005 = vadd.f32 %v2644, %v2925
      %v3006 = vadd.f32 %v2645, %v2927
      %v3007 = vadd.f32 %v2646, %v2929
      %v3008 = vadd.f32 %v2647, %v2931
      %v3009 = vadd.f32 %v2648, %v2933
      %v3010 = vadd.f32 %v2649, %v2935
      %v3011 = vadd.f32 %v2650, %v2937
      %v3012 = vadd.f32 %v2651, %v2939
      %v3013 = vadd.f32 %v2652, %v2941
      %v3014 = vadd.f32 %v2653, %v2943
      %v3015 = vadd.f32 %v2654, %v2945
      %v3016 = vadd.f32 %v2655, %v2947
      %v3017 = vadd.f32 %v2656, %v2949
      %v3018 = vadd.f32 %v2657, %v2951
      %v3019 = vadd.f32 %v2658, %v2953
      %v3020 = vadd.f32 %v2659, %v2955
      %v3021 = vadd.f32 %v2660, %v2957
      %v3022 = vld [vmem:[#allocation3 + $0x9] sm:$0xff]
      %v3023 = vld [vmem:[#allocation3 + $0x11] sm:$0xff]
      %v3024 = vld [vmem:[#allocation3 + $0x19] sm:$0xff]
      %v3025 = vld [vmem:[#allocation3 + $0x21] sm:$0xff]
      %v3026 = vld [vmem:[#allocation3 + $0x29] sm:$0xff]
      %v3027 = vld [vmem:[#allocation3 + $0x31] sm:$0xff]
      %v3028 = vld [vmem:[#allocation3 + $0x39] sm:$0xff]
      %v3029 = vld [vmem:[#allocation3 + $0x41] sm:$0xff]
      %v3030 = vld [vmem:[#allocation3 + $0x49] sm:$0xff]
      %v3031 = vld [vmem:[#allocation3 + $0x51] sm:$0xff]
      %v3032 = vld [vmem:[#allocation3 + $0x59] sm:$0xff]
      %v3033 = vld [vmem:[#allocation3 + $0x61] sm:$0xff]
      %v3034 = vld [vmem:[#allocation3 + $0x69] sm:$0xff]
      %v3035 = vld [vmem:[#allocation3 + $0x71] sm:$0xff]
      %v3036 = vld [vmem:[#allocation3 + $0x79] sm:$0xff]
      %v3037 = vld [vmem:[#allocation3 + $0x81] sm:$0xff]
      %v3038 = vld [vmem:[#allocation3 + $0x89] sm:$0xff]
      %v3039 = vld [vmem:[#allocation3 + $0x91] sm:$0xff]
      %v3040 = vld [vmem:[#allocation3 + $0x99] sm:$0xff]
      %v3041 = vld [vmem:[#allocation3 + $0xa1] sm:$0xff]
      %v3042 = vld [vmem:[#allocation3 + $0xa9] sm:$0xff]
      %v3043 = vld [vmem:[#allocation3 + $0xb1] sm:$0xff]
      %v3044 = vld [vmem:[#allocation3 + $0xb9] sm:$0xff]
      %v3045 = vld [vmem:[#allocation3 + $0xc1] sm:$0xff]
      %v3046 = vld [vmem:[#allocation3 + $0xc9] sm:$0xff]
      %v3047 = vld [vmem:[#allocation3 + $0xd1] sm:$0xff]
      %v3048 = vld [vmem:[#allocation3 + $0xd9] sm:$0xff]
      %v3049 = vld [vmem:[#allocation3 + $0xe1] sm:$0xff]
      %v3050 = vld [vmem:[#allocation3 + $0xe9] sm:$0xff]
      %v3051 = vld [vmem:[#allocation3 + $0xf1] sm:$0xff]
      %v3052 = vld [vmem:[#allocation3 + $0xf9] sm:$0xff]
      %v3053 = vld [vmem:[#allocation3 + $0x101] sm:$0xff]
      %v3054 = vsel %vm1587, %v3022, 0.0
      %v3055 = vsel %vm1588, %v3023, 0.0
      %v3056 = vsel %vm1589, %v3024, 0.0
      %v3057 = vsel %vm1590, %v3025, 0.0
      %v3058 = vsel %vm1591, %v3026, 0.0
      %v3059 = vsel %vm1592, %v3027, 0.0
      %v3060 = vsel %vm1593, %v3028, 0.0
      %v3061 = vsel %vm1594, %v3029, 0.0
      %v3062 = vsel %vm1595, %v3030, 0.0
      %v3063 = vsel %vm1596, %v3031, 0.0
      %v3064 = vsel %vm1597, %v3032, 0.0
      %v3065 = vsel %vm1598, %v3033, 0.0
      %v3066 = vsel %vm1599, %v3034, 0.0
      %v3067 = vsel %vm1600, %v3035, 0.0
      %v3068 = vsel %vm1601, %v3036, 0.0
      %v3069 = vsel %vm1602, %v3037, 0.0
      %v3070 = vsel %vm1603, %v3038, 0.0
      %v3071 = vsel %vm1604, %v3039, 0.0
      %v3072 = vsel %vm1605, %v3040, 0.0
      %v3073 = vsel %vm1606, %v3041, 0.0
      %v3074 = vsel %vm1607, %v3042, 0.0
      %v3075 = vsel %vm1608, %v3043, 0.0
      %v3076 = vsel %vm1609, %v3044, 0.0
      %v3077 = vsel %vm1610, %v3045, 0.0
      %v3078 = vsel %vm1611, %v3046, 0.0
      %v3079 = vsel %vm1612, %v3047, 0.0
      %v3080 = vsel %vm1613, %v3048, 0.0
      %v3081 = vsel %vm1614, %v3049, 0.0
      %v3082 = vsel %vm1615, %v3050, 0.0
      %v3083 = vsel %vm1616, %v3051, 0.0
      %v3084 = vsel %vm1617, %v3052, 0.0
      %v3085 = vsel %vm1618, %v3053, 0.0
      %v3086 = vpack.c.bf16 %v3055, %v3054
      %v3087 = vpack.c.bf16 %v3057, %v3056
      %v3088 = vpack.c.bf16 %v3059, %v3058
      %v3089 = vpack.c.bf16 %v3061, %v3060
      %v3090 = vpack.c.bf16 %v3063, %v3062
      %v3091 = vpack.c.bf16 %v3065, %v3064
      %v3092 = vpack.c.bf16 %v3067, %v3066
      %v3093 = vpack.c.bf16 %v3069, %v3068
      %v3094 = vpack.c.bf16 %v3071, %v3070
      %v3095 = vpack.c.bf16 %v3073, %v3072
      %v3096 = vpack.c.bf16 %v3075, %v3074
      %v3097 = vpack.c.bf16 %v3077, %v3076
      %v3098 = vpack.c.bf16 %v3079, %v3078
      %v3099 = vpack.c.bf16 %v3081, %v3080
      %v3100 = vpack.c.bf16 %v3083, %v3082
      %v3101 = vpack.c.bf16 %v3085, %v3084
      %s3102 = scalar_lea.vmem %s2, 24
      %v3103 = vld [vmem:[%s3102] sm:$0xf]
      %v3104 = vld [vmem:[%s3102 + $0x4] sm:$0xf]
      %v3105 = vld [vmem:[%s3102 + $0x8] sm:$0xf]
      %v3109 = vunpack.c.l.b16 %v3103
      %v3110 = vunpack.c.l.b16 %v3104
      %v3111 = vunpack.c.l.b16 %v3105
      %v3112 = vpack.c.b16 %v3110, %v3109
      %v3113 = vpack.c.b16 %v3111, %v3111
      %v3116 = vsel %vm2198, %v3086, 0
      %v3119 = vsel %vm2198, %v3087, 0
      %v3122 = vsel %vm2198, %v3088, 0
      %v3125 = vsel %vm2198, %v3089, 0
      %v3128 = vsel %vm2198, %v3090, 0
      %v3131 = vsel %vm2198, %v3091, 0
      %v3134 = vsel %vm2198, %v3092, 0
      %v3137 = vsel %vm2198, %v3093, 0
      %v3140 = vsel %vm2198, %v3094, 0
      %v3143 = vsel %vm2198, %v3095, 0
      %v3146 = vsel %vm2198, %v3096, 0
      %v3149 = vsel %vm2198, %v3097, 0
      %v3152 = vsel %vm2198, %v3098, 0
      %v3155 = vsel %vm2198, %v3099, 0
      %v3158 = vsel %vm2198, %v3100, 0
      %v3161 = vsel %vm2198, %v3101, 0
      %v3164 = vsel %vm2408, %v3113, 0
      %3166 = vmatpush.bf16.msra.mxu0 0
      %3167 = vmatpush.bf16.msra.mxu0 0
      %3168 = vmatpush.bf16.msra.mxu0 0
      %3169 = vmatpush.bf16.msra.mxu0 0
      %3170 = vmatpush.bf16.msra.mxu0 0
      %3171 = vmatpush.bf16.msra.mxu0 0
      %3172 = vmatpush.bf16.msra.mxu0 %v3164
      %3173 = vmatpush.bf16.msra.mxu0 %v3112
      %3174 = vmatmul.bf16.gmra.mxu0 %v3116
      %v3175 = vpop.f32.mrf.mxu0
      %v3176 = vadd.f32 0.0, %v3175
      %v3177 = vpop.f32.mrf.mxu0
      %v3178 = vadd.f32 0.0, %v3177
      %3179 = vmatmul.bf16.gmra.mxu0 %v3119
      %v3180 = vpop.f32.mrf.mxu0
      %v3181 = vadd.f32 0.0, %v3180
      %v3182 = vpop.f32.mrf.mxu0
      %v3183 = vadd.f32 0.0, %v3182
      %3184 = vmatmul.bf16.gmra.mxu0 %v3122
      %v3185 = vpop.f32.mrf.mxu0
      %v3186 = vadd.f32 0.0, %v3185
      %v3187 = vpop.f32.mrf.mxu0
      %v3188 = vadd.f32 0.0, %v3187
      %3189 = vmatmul.bf16.gmra.mxu0 %v3125
      %v3190 = vpop.f32.mrf.mxu0
      %v3191 = vadd.f32 0.0, %v3190
      %v3192 = vpop.f32.mrf.mxu0
      %v3193 = vadd.f32 0.0, %v3192
      %3194 = vmatmul.bf16.gmra.mxu0 %v3128
      %v3195 = vpop.f32.mrf.mxu0
      %v3196 = vadd.f32 0.0, %v3195
      %v3197 = vpop.f32.mrf.mxu0
      %v3198 = vadd.f32 0.0, %v3197
      %3199 = vmatmul.bf16.gmra.mxu0 %v3131
      %v3200 = vpop.f32.mrf.mxu0
      %v3201 = vadd.f32 0.0, %v3200
      %v3202 = vpop.f32.mrf.mxu0
      %v3203 = vadd.f32 0.0, %v3202
      %3204 = vmatmul.bf16.gmra.mxu0 %v3134
      %v3205 = vpop.f32.mrf.mxu0
      %v3206 = vadd.f32 0.0, %v3205
      %v3207 = vpop.f32.mrf.mxu0
      %v3208 = vadd.f32 0.0, %v3207
      %3209 = vmatmul.bf16.gmra.mxu0 %v3137
      %v3210 = vpop.f32.mrf.mxu0
      %v3211 = vadd.f32 0.0, %v3210
      %v3212 = vpop.f32.mrf.mxu0
      %v3213 = vadd.f32 0.0, %v3212
      %3214 = vmatmul.bf16.gmra.mxu0 %v3140
      %v3215 = vpop.f32.mrf.mxu0
      %v3216 = vadd.f32 0.0, %v3215
      %v3217 = vpop.f32.mrf.mxu0
      %v3218 = vadd.f32 0.0, %v3217
      %3219 = vmatmul.bf16.gmra.mxu0 %v3143
      %v3220 = vpop.f32.mrf.mxu0
      %v3221 = vadd.f32 0.0, %v3220
      %v3222 = vpop.f32.mrf.mxu0
      %v3223 = vadd.f32 0.0, %v3222
      %3224 = vmatmul.bf16.gmra.mxu0 %v3146
      %v3225 = vpop.f32.mrf.mxu0
      %v3226 = vadd.f32 0.0, %v3225
      %v3227 = vpop.f32.mrf.mxu0
      %v3228 = vadd.f32 0.0, %v3227
      %3229 = vmatmul.bf16.gmra.mxu0 %v3149
      %v3230 = vpop.f32.mrf.mxu0
      %v3231 = vadd.f32 0.0, %v3230
      %v3232 = vpop.f32.mrf.mxu0
      %v3233 = vadd.f32 0.0, %v3232
      %3234 = vmatmul.bf16.gmra.mxu0 %v3152
      %v3235 = vpop.f32.mrf.mxu0
      %v3236 = vadd.f32 0.0, %v3235
      %v3237 = vpop.f32.mrf.mxu0
      %v3238 = vadd.f32 0.0, %v3237
      %3239 = vmatmul.bf16.gmra.mxu0 %v3155
      %v3240 = vpop.f32.mrf.mxu0
      %v3241 = vadd.f32 0.0, %v3240
      %v3242 = vpop.f32.mrf.mxu0
      %v3243 = vadd.f32 0.0, %v3242
      %3244 = vmatmul.bf16.gmra.mxu0 %v3158
      %v3245 = vpop.f32.mrf.mxu0
      %v3246 = vadd.f32 0.0, %v3245
      %v3247 = vpop.f32.mrf.mxu0
      %v3248 = vadd.f32 0.0, %v3247
      %3249 = vmatmul.bf16.gmra.mxu0 %v3161
      %v3250 = vpop.f32.mrf.mxu0
      %v3251 = vadd.f32 0.0, %v3250
      %v3252 = vpop.f32.mrf.mxu0
      %v3253 = vadd.f32 0.0, %v3252
      %3254 = vdwg.mxu0
      %3287 = vrot.lane.b32.xlu0 %v3176, 8
      %v3288 = vpop.permute.xlu0 %3287
      %3289 = vrot.lane.b32.xlu0 %v3178, 8
      %v3290 = vpop.permute.xlu0 %3289
      %3291 = vrot.lane.b32.xlu0 %v3181, 8
      %v3292 = vpop.permute.xlu0 %3291
      %3293 = vrot.lane.b32.xlu0 %v3183, 8
      %v3294 = vpop.permute.xlu0 %3293
      %3295 = vrot.lane.b32.xlu0 %v3186, 8
      %v3296 = vpop.permute.xlu0 %3295
      %3297 = vrot.lane.b32.xlu0 %v3188, 8
      %v3298 = vpop.permute.xlu0 %3297
      %3299 = vrot.lane.b32.xlu0 %v3191, 8
      %v3300 = vpop.permute.xlu0 %3299
      %3301 = vrot.lane.b32.xlu0 %v3193, 8
      %v3302 = vpop.permute.xlu0 %3301
      %3303 = vrot.lane.b32.xlu0 %v3196, 8
      %v3304 = vpop.permute.xlu0 %3303
      %3305 = vrot.lane.b32.xlu0 %v3198, 8
      %v3306 = vpop.permute.xlu0 %3305
      %3307 = vrot.lane.b32.xlu0 %v3201, 8
      %v3308 = vpop.permute.xlu0 %3307
      %3309 = vrot.lane.b32.xlu0 %v3203, 8
      %v3310 = vpop.permute.xlu0 %3309
      %3311 = vrot.lane.b32.xlu0 %v3206, 8
      %v3312 = vpop.permute.xlu0 %3311
      %3313 = vrot.lane.b32.xlu0 %v3208, 8
      %v3314 = vpop.permute.xlu0 %3313
      %3315 = vrot.lane.b32.xlu0 %v3211, 8
      %v3316 = vpop.permute.xlu0 %3315
      %3317 = vrot.lane.b32.xlu0 %v3213, 8
      %v3318 = vpop.permute.xlu0 %3317
      %3319 = vrot.lane.b32.xlu0 %v3216, 8
      %v3320 = vpop.permute.xlu0 %3319
      %3321 = vrot.lane.b32.xlu0 %v3218, 8
      %v3322 = vpop.permute.xlu0 %3321
      %3323 = vrot.lane.b32.xlu0 %v3221, 8
      %v3324 = vpop.permute.xlu0 %3323
      %3325 = vrot.lane.b32.xlu0 %v3223, 8
      %v3326 = vpop.permute.xlu0 %3325
      %3327 = vrot.lane.b32.xlu0 %v3226, 8
      %v3328 = vpop.permute.xlu0 %3327
      %3329 = vrot.lane.b32.xlu0 %v3228, 8
      %v3330 = vpop.permute.xlu0 %3329
      %3331 = vrot.lane.b32.xlu0 %v3231, 8
      %v3332 = vpop.permute.xlu0 %3331
      %3333 = vrot.lane.b32.xlu0 %v3233, 8
      %v3334 = vpop.permute.xlu0 %3333
      %3335 = vrot.lane.b32.xlu0 %v3236, 8
      %v3336 = vpop.permute.xlu0 %3335
      %3337 = vrot.lane.b32.xlu0 %v3238, 8
      %v3338 = vpop.permute.xlu0 %3337
      %3339 = vrot.lane.b32.xlu0 %v3241, 8
      %v3340 = vpop.permute.xlu0 %3339
      %3341 = vrot.lane.b32.xlu0 %v3243, 8
      %v3342 = vpop.permute.xlu0 %3341
      %3343 = vrot.lane.b32.xlu0 %v3246, 8
      %v3344 = vpop.permute.xlu0 %3343
      %3345 = vrot.lane.b32.xlu0 %v3248, 8
      %v3346 = vpop.permute.xlu0 %3345
      %3347 = vrot.lane.b32.xlu0 %v3251, 8
      %v3348 = vpop.permute.xlu0 %3347
      %3349 = vrot.lane.b32.xlu0 %v3253, 8
      %v3350 = vpop.permute.xlu0 %3349
      %v3383 = vadd.f32 %v2990, %v3288
      %v3384 = vadd.f32 %v2991, %v3290
      %v3385 = vadd.f32 %v2992, %v3292
      %v3386 = vadd.f32 %v2993, %v3294
      %v3387 = vadd.f32 %v2994, %v3296
      %v3388 = vadd.f32 %v2995, %v3298
      %v3389 = vadd.f32 %v2996, %v3300
      %v3390 = vadd.f32 %v2997, %v3302
      %v3391 = vadd.f32 %v2998, %v3304
      %v3392 = vadd.f32 %v2999, %v3306
      %v3393 = vadd.f32 %v3000, %v3308
      %v3394 = vadd.f32 %v3001, %v3310
      %v3395 = vadd.f32 %v3002, %v3312
      %v3396 = vadd.f32 %v3003, %v3314
      %v3397 = vadd.f32 %v3004, %v3316
      %v3398 = vadd.f32 %v3005, %v3318
      %v3399 = vadd.f32 %v3006, %v3320
      %v3400 = vadd.f32 %v3007, %v3322
      %v3401 = vadd.f32 %v3008, %v3324
      %v3402 = vadd.f32 %v3009, %v3326
      %v3403 = vadd.f32 %v3010, %v3328
      %v3404 = vadd.f32 %v3011, %v3330
      %v3405 = vadd.f32 %v3012, %v3332
      %v3406 = vadd.f32 %v3013, %v3334
      %v3407 = vadd.f32 %v3014, %v3336
      %v3408 = vadd.f32 %v3015, %v3338
      %v3409 = vadd.f32 %v3016, %v3340
      %v3410 = vadd.f32 %v3017, %v3342
      %v3411 = vadd.f32 %v3018, %v3344
      %v3412 = vadd.f32 %v3019, %v3346
      %v3413 = vadd.f32 %v3020, %v3348
      %v3414 = vadd.f32 %v3021, %v3350
      %v3415 = vmax.f32 %v3383, 0.0
      %v3416 = vmax.f32 %v3384, 0.0
      %v3417 = vmax.f32 %v3385, 0.0
      %v3418 = vmax.f32 %v3386, 0.0
      %v3419 = vmax.f32 %v3387, 0.0
      %v3420 = vmax.f32 %v3388, 0.0
      %v3421 = vmax.f32 %v3389, 0.0
      %v3422 = vmax.f32 %v3390, 0.0
      %v3423 = vmax.f32 %v3391, 0.0
      %v3424 = vmax.f32 %v3392, 0.0
      %v3425 = vmax.f32 %v3393, 0.0
      %v3426 = vmax.f32 %v3394, 0.0
      %v3427 = vmax.f32 %v3395, 0.0
      %v3428 = vmax.f32 %v3396, 0.0
      %v3429 = vmax.f32 %v3397, 0.0
      %v3430 = vmax.f32 %v3398, 0.0
      %v3431 = vmax.f32 %v3399, 0.0
      %v3432 = vmax.f32 %v3400, 0.0
      %v3433 = vmax.f32 %v3401, 0.0
      %v3434 = vmax.f32 %v3402, 0.0
      %v3435 = vmax.f32 %v3403, 0.0
      %v3436 = vmax.f32 %v3404, 0.0
      %v3437 = vmax.f32 %v3405, 0.0
      %v3438 = vmax.f32 %v3406, 0.0
      %v3439 = vmax.f32 %v3407, 0.0
      %v3440 = vmax.f32 %v3408, 0.0
      %v3441 = vmax.f32 %v3409, 0.0
      %v3442 = vmax.f32 %v3410, 0.0
      %v3443 = vmax.f32 %v3411, 0.0
      %v3444 = vmax.f32 %v3412, 0.0
      %v3445 = vmax.f32 %v3413, 0.0
      %v3446 = vmax.f32 %v3414, 0.0
      %3479 = vrot.lane.b32.xlu0 %v3415, 120
      %v3480 = vpop.permute.xlu0 %3479
      %3481 = vrot.lane.b32.xlu0 %v3416, 120
      %v3482 = vpop.permute.xlu0 %3481
      %3483 = vrot.lane.b32.xlu0 %v3417, 120
      %v3484 = vpop.permute.xlu0 %3483
      %3485 = vrot.lane.b32.xlu0 %v3418, 120
      %v3486 = vpop.permute.xlu0 %3485
      %3487 = vrot.lane.b32.xlu0 %v3419, 120
      %v3488 = vpop.permute.xlu0 %3487
      %3489 = vrot.lane.b32.xlu0 %v3420, 120
      %v3490 = vpop.permute.xlu0 %3489
      %3491 = vrot.lane.b32.xlu0 %v3421, 120
      %v3492 = vpop.permute.xlu0 %3491
      %3493 = vrot.lane.b32.xlu0 %v3422, 120
      %v3494 = vpop.permute.xlu0 %3493
      %3495 = vrot.lane.b32.xlu0 %v3423, 120
      %v3496 = vpop.permute.xlu0 %3495
      %3497 = vrot.lane.b32.xlu0 %v3424, 120
      %v3498 = vpop.permute.xlu0 %3497
      %3499 = vrot.lane.b32.xlu0 %v3425, 120
      %v3500 = vpop.permute.xlu0 %3499
      %3501 = vrot.lane.b32.xlu0 %v3426, 120
      %v3502 = vpop.permute.xlu0 %3501
      %3503 = vrot.lane.b32.xlu0 %v3427, 120
      %v3504 = vpop.permute.xlu0 %3503
      %3505 = vrot.lane.b32.xlu0 %v3428, 120
      %v3506 = vpop.permute.xlu0 %3505
      %3507 = vrot.lane.b32.xlu0 %v3429, 120
      %v3508 = vpop.permute.xlu0 %3507
      %3509 = vrot.lane.b32.xlu0 %v3430, 120
      %v3510 = vpop.permute.xlu0 %3509
      %3511 = vrot.lane.b32.xlu0 %v3431, 120
      %v3512 = vpop.permute.xlu0 %3511
      %3513 = vrot.lane.b32.xlu0 %v3432, 120
      %v3514 = vpop.permute.xlu0 %3513
      %3515 = vrot.lane.b32.xlu0 %v3433, 120
      %v3516 = vpop.permute.xlu0 %3515
      %3517 = vrot.lane.b32.xlu0 %v3434, 120
      %v3518 = vpop.permute.xlu0 %3517
      %3519 = vrot.lane.b32.xlu0 %v3435, 120
      %v3520 = vpop.permute.xlu0 %3519
      %3521 = vrot.lane.b32.xlu0 %v3436, 120
      %v3522 = vpop.permute.xlu0 %3521
      %3523 = vrot.lane.b32.xlu0 %v3437, 120
      %v3524 = vpop.permute.xlu0 %3523
      %3525 = vrot.lane.b32.xlu0 %v3438, 120
      %v3526 = vpop.permute.xlu0 %3525
      %3527 = vrot.lane.b32.xlu0 %v3439, 120
      %v3528 = vpop.permute.xlu0 %3527
      %3529 = vrot.lane.b32.xlu0 %v3440, 120
      %v3530 = vpop.permute.xlu0 %3529
      %3531 = vrot.lane.b32.xlu0 %v3441, 120
      %v3532 = vpop.permute.xlu0 %3531
      %3533 = vrot.lane.b32.xlu0 %v3442, 120
      %v3534 = vpop.permute.xlu0 %3533
      %3535 = vrot.lane.b32.xlu0 %v3443, 120
      %v3536 = vpop.permute.xlu0 %3535
      %3537 = vrot.lane.b32.xlu0 %v3444, 120
      %v3538 = vpop.permute.xlu0 %3537
      %3539 = vrot.lane.b32.xlu0 %v3445, 120
      %v3540 = vpop.permute.xlu0 %3539
      %3541 = vrot.lane.b32.xlu0 %v3446, 120
      %v3542 = vpop.permute.xlu0 %3541
      %3575 = vst.msk [vmem:[%s197] sm:$0xff] %vm969, %v3480
      %3576 = vst.msk [vmem:[%s197 + $0x8] sm:$0xff] %vm969, %v3482
      %3577 = vst.msk [vmem:[%s197 + $0x10] sm:$0xff] %vm969, %v3484
      %3578 = vst.msk [vmem:[%s197 + $0x18] sm:$0xff] %vm969, %v3486
      %3579 = vst.msk [vmem:[%s197 + $0x20] sm:$0xff] %vm969, %v3488
      %3580 = vst.msk [vmem:[%s197 + $0x28] sm:$0xff] %vm969, %v3490
      %3581 = vst.msk [vmem:[%s197 + $0x30] sm:$0xff] %vm969, %v3492
      %3582 = vst.msk [vmem:[%s197 + $0x38] sm:$0xff] %vm969, %v3494
      %3583 = vst.msk [vmem:[%s197 + $0x40] sm:$0xff] %vm969, %v3496
      %3584 = vst.msk [vmem:[%s197 + $0x48] sm:$0xff] %vm969, %v3498
      %3585 = vst.msk [vmem:[%s197 + $0x50] sm:$0xff] %vm969, %v3500
      %3586 = vst.msk [vmem:[%s197 + $0x58] sm:$0xff] %vm969, %v3502
      %3587 = vst.msk [vmem:[%s197 + $0x60] sm:$0xff] %vm969, %v3504
      %3588 = vst.msk [vmem:[%s197 + $0x68] sm:$0xff] %vm969, %v3506
      %3589 = vst.msk [vmem:[%s197 + $0x70] sm:$0xff] %vm969, %v3508
      %3590 = vst.msk [vmem:[%s197 + $0x78] sm:$0xff] %vm969, %v3510
      %3591 = vst.msk [vmem:[%s197 + $0x80] sm:$0xff] %vm969, %v3512
      %3592 = vst.msk [vmem:[%s197 + $0x88] sm:$0xff] %vm969, %v3514
      %3593 = vst.msk [vmem:[%s197 + $0x90] sm:$0xff] %vm969, %v3516
      %3594 = vst.msk [vmem:[%s197 + $0x98] sm:$0xff] %vm969, %v3518
      %3595 = vst.msk [vmem:[%s197 + $0xa0] sm:$0xff] %vm969, %v3520
      %3596 = vst.msk [vmem:[%s197 + $0xa8] sm:$0xff] %vm969, %v3522
      %3597 = vst.msk [vmem:[%s197 + $0xb0] sm:$0xff] %vm969, %v3524
      %3598 = vst.msk [vmem:[%s197 + $0xb8] sm:$0xff] %vm969, %v3526
      %3599 = vst.msk [vmem:[%s197 + $0xc0] sm:$0xff] %vm969, %v3528
      %3600 = vst.msk [vmem:[%s197 + $0xc8] sm:$0xff] %vm969, %v3530
      %3601 = vst.msk [vmem:[%s197 + $0xd0] sm:$0xff] %vm969, %v3532
      %3602 = vst.msk [vmem:[%s197 + $0xd8] sm:$0xff] %vm969, %v3534
      %3603 = vst.msk [vmem:[%s197 + $0xe0] sm:$0xff] %vm969, %v3536
      %3604 = vst.msk [vmem:[%s197 + $0xe8] sm:$0xff] %vm969, %v3538
      %3605 = vst.msk [vmem:[%s197 + $0xf0] sm:$0xff] %vm969, %v3540
      %3606 = vst.msk [vmem:[%s197 + $0xf8] sm:$0xff] %vm969, %v3542
      %p3607 = scmp.lt.s32.totalorder %s15, 1
      %s3608 = scalar_select %p3607, %s15, 1
      %s3609 = smul.addr %s3608, 32
      %s3610 = smul.addr %s3609, 8
      %s3611 = scalar_lea.vmem %s4, %s3610
      // Predicated region
      $region37: #{tpu_custom_call.1} parent=35 // pred_check
        %p3612 = pneg %p122
      $region38: #{tpu_custom_call.1} parent=35 // pred_check_branch
        %3614 = sbr.rel (%p3612) target = $region40
      $region39: #{tpu_custom_call.1} parent=35 // pred_region
        _
      $region40: #{tpu_custom_call.1} parent=35 // pred_fallthru
        _
    $region36: #{tpu_custom_call.1} parent=5 // pred_fallthru
      _
    %p3615 = scmp.le.s32.totalorder 2, %s10
    // Predicated region
    $region41: #{tpu_custom_call.1} parent=5 // pred_check
      %p3616 = pneg %p3615
    $region42: #{tpu_custom_call.1} parent=5 // pred_check_branch
      %3618 = sbr.rel (%p3616) target = $region44
    $region43: #{tpu_custom_call.1} parent=5 // pred_region
      %s3619 = ssub.s32 %s10, 2
      // Predicated region
      $region45: #{tpu_custom_call.1} parent=43 // pred_check
        %p3620 = pneg %p128
      $region46: #{tpu_custom_call.1} parent=43 // pred_check_branch
        %3622 = sbr.rel (%p3620) target = $region48
      $region47: #{tpu_custom_call.1} parent=43 // pred_region
        %p3623 = scmp.lt.s32.totalorder %s16, 1
        %s3624 = scalar_select %p3623, %s16, 1
        %s3625 = smul.addr %s3624, 32
        %s3626 = smul.addr %s3625, 8
        %s3627 = scalar_lea.vmem %s4, %s3626
      $region48: #{tpu_custom_call.1} parent=43 // pred_fallthru
        _
    $region44: #{tpu_custom_call.1} parent=5 // pred_fallthru
      _
  $region6: #{tpu_custom_call.1} parent=0 // loop_footer
    %s14 = sadd.s32 1, %s10
  $region7: #{tpu_custom_call.1} parent=0 // loop_footer_branch
    %9 = sbr.rel target = $region3
  $region8: #{tpu_custom_call.1} parent=0 // loop_exit
    _

</llo_original>
